<compile_context>
chip_gen: v7x
topology: tpu7x:2x2x1
jax: 0.10.0
libtpu: 0.0.40
codegen_flags: <defaults>
</compile_context>

<pallas_src>
import numpy as np
import jax
import jax.numpy as jnp
from jax import lax
from jax.experimental import pallas as pl
from jax.experimental.pallas import tpu as pltpu


LANE = 128  # pad N (=Cout) and K to multiples of this


def _round_up(x, m):
    return ((x + m - 1) // m) * m


# ----------------------------- Pallas kernels ------------------------------

def _mm_bias_relu_kernel(x_ref, w_ref, b_ref, o_ref):
    # o = relu(x @ w + b); single full-array block, lane-dense N (mult of 128).
    acc = jnp.dot(x_ref[...], w_ref[...], preferred_element_type=jnp.float32)
    o_ref[...] = jnp.maximum(acc + b_ref[...], 0.0).astype(o_ref.dtype)


def _mm_bias_relu_pool_kernel(p0_ref, p1_ref, p2_ref, p3_ref, w_ref, b_ref, o_ref):
    # Fused conv(matmul) + bias + ReLU + MaxPool2d(2): the four inputs are the
    # im2col patch matrices of the four pooling phases (dy, dx) in {0,1}^2;
    # the pool is the elementwise max of the four conv results.
    w = w_ref[...]
    b = b_ref[...]

    def branch(p_ref):
        acc = jnp.dot(p_ref[...], w, preferred_element_type=jnp.float32)
        return jnp.maximum(acc + b, 0.0)

    o_ref[...] = jnp.maximum(jnp.maximum(branch(p0_ref), branch(p1_ref)),
                             jnp.maximum(branch(p2_ref), branch(p3_ref))
                             ).astype(o_ref.dtype)


def _vmem_spec():
    return pl.BlockSpec(memory_space=pltpu.MemorySpace.VMEM)


def _mm_bias_relu(patches, wmat, bias):
    M, _ = patches.shape
    _, Np = wmat.shape
    return pl.pallas_call(
        _mm_bias_relu_kernel,
        out_shape=jax.ShapeDtypeStruct((M, Np), jnp.float32),
        in_specs=[_vmem_spec() for _ in range(3)],
        out_specs=_vmem_spec(),
    )(patches, wmat, bias)


def _mm_bias_relu_pool(phase_patches, wmat, bias):
    M, _ = phase_patches[0].shape
    _, Np = wmat.shape
    return pl.pallas_call(
        _mm_bias_relu_pool_kernel,
        out_shape=jax.ShapeDtypeStruct((M, Np), jnp.float32),
        in_specs=[_vmem_spec() for _ in range(6)],
        out_specs=_vmem_spec(),
    )(*phase_patches, wmat, bias)


# ------------------------------ conv plumbing ------------------------------

def _pack_weight(w_oihw, Kp, Np):
    # [Cout, Cin, kh, kw] -> [Kp, Np]; K ordered (ki, kj, cin); zero-padded.
    Cout, Cin, kh, kw = w_oihw.shape
    K = kh * kw * Cin
    wmat = w_oihw.transpose(2, 3, 1, 0).reshape(K, Cout)
    return jnp.pad(wmat, ((0, Kp - K), (0, Np - Cout)))


def _patch_cols(xp, kh, kw, stride, row0, col0, Ho, Wo):
    # Strided im2col slices of an (already spatially padded) NHWC input; each
    # slice is [B, Ho, Wo, Cin] and they concat lane-contiguously on channels.
    B, _, _, C = xp.shape
    cols = []
    for ki in range(kh):
        for kj in range(kw):
            r0 = row0 + ki
            c0 = col0 + kj
            cols.append(lax.slice(
                xp,
                (0, r0, c0, 0),
                (B, r0 + stride * (Ho - 1) + 1, c0 + stride * (Wo - 1) + 1, C),
                (1, stride, stride, 1)))
    return cols


def conv2d_relu(x, w, b, stride, padding):
    """relu(conv2d(x, w) + b).  x: NHWC; w: PyTorch OIHW; returns NHWC."""
    B, H, W, Cin = x.shape
    Cout, _, kh, kw = w.shape
    Ho = (H + 2 * padding - kh) // stride + 1
    Wo = (W + 2 * padding - kw) // stride + 1
    K = kh * kw * Cin
    Kp, Np = _round_up(K, LANE), _round_up(Cout, LANE)

    xp = jnp.pad(x, ((0, 0), (padding, padding), (padding, padding), (0, 0)))
    cols = _patch_cols(xp, kh, kw, stride, 0, 0, Ho, Wo)
    if Kp > K:
        cols.append(jnp.zeros((B, Ho, Wo, Kp - K), x.dtype))
    patches = jnp.concatenate(cols, axis=-1).reshape(B * Ho * Wo, Kp)

    wmat = _pack_weight(w, Kp, Np)
    bias = jnp.pad(b, (0, Np - Cout)).reshape(1, Np)

    out = _mm_bias_relu(patches, wmat, bias)            # [B*Ho*Wo, Np]
    return out[:, :Cout].reshape(B, Ho, Wo, Cout)


def conv2d_relu_maxpool2(x, w, b, stride, padding):
    """MaxPool2d(2)(relu(conv2d(x, w) + b)), fused in one Pallas kernel."""
    B, H, W, Cin = x.shape
    Cout, _, kh, kw = w.shape
    Ho = (H + 2 * padding - kh) // stride + 1
    Wo = (W + 2 * padding - kw) // stride + 1
    Hp2, Wp2 = Ho // 2, Wo // 2                        # floor mode (PyTorch)
    K = kh * kw * Cin
    Kp, Np = _round_up(K, LANE), _round_up(Cout, LANE)

    xp = jnp.pad(x, ((0, 0), (padding, padding), (padding, padding), (0, 0)))
    phases = []
    for dy in (0, 1):
        for dx in (0, 1):
            cols = _patch_cols(xp, kh, kw, 2 * stride,
                               dy * stride, dx * stride, Hp2, Wp2)
            if Kp > K:
                cols.append(jnp.zeros((B, Hp2, Wp2, Kp - K), x.dtype))
            phases.append(
                jnp.concatenate(cols, axis=-1).reshape(B * Hp2 * Wp2, Kp))

    wmat = _pack_weight(w, Kp, Np)
    bias = jnp.pad(b, (0, Np - Cout)).reshape(1, Np)

    out = _mm_bias_relu_pool(phases, wmat, bias)        # [B*Hp2*Wp2, Np]
    return out[:, :Cout].reshape(B, Hp2, Wp2, Cout)


def _dilate_nhwc(x, s):
    if s == 1:
        return x
    B, H, W, C = x.shape
    out = jnp.zeros((B, (H - 1) * s + 1, (W - 1) * s + 1, C), x.dtype)
    return out.at[:, ::s, ::s, :].set(x)


def conv_transpose2d_relu(x, w_t, b, stride, padding):
    # ConvTranspose2d == conv of the zero-dilated input with the flipped,
    # channel-transposed kernel and padding (k - 1 - padding).
    # TODO(synk): a sub-pixel per-output-phase decomposition would avoid
    # streaming the ~stride^2 zero fraction through the MXU; the dilation
    # lowering is kept since these layers are launch-overhead bound here.
    kh = w_t.shape[2]
    w = jnp.flip(w_t, axis=(2, 3)).transpose(1, 0, 2, 3)   # [Cout, Cin, kh, kw]
    xd = _dilate_nhwc(x, stride)
    return conv2d_relu(xd, w, b, stride=1, padding=kh - 1 - padding)


# ------------------------------ AutoEncoder --------------------------------

def autoencoder_forward(params, x_nchw):
    x = x_nchw.transpose(0, 2, 3, 1)                       # NCHW -> NHWC once
    # encoder (conv + relu + pool fused per stage)
    h = conv2d_relu_maxpool2(x, params["ec1_w"], params["ec1_b"], stride=3, padding=1)
    x1 = conv2d_relu_maxpool2(h, params["ec2_w"], params["ec2_b"], stride=1, padding=1)
    # decoder
    h = conv_transpose2d_relu(x1, params["dc1_w"], params["dc1_b"], stride=2, padding=0)
    h = conv_transpose2d_relu(h, params["dc2_w"], params["dc2_b"], stride=3, padding=1)
    x2 = conv_transpose2d_relu(h, params["dc3_w"], params["dc3_b"], stride=2, padding=1)
    # back to NCHW at the API boundary only
    return x1.transpose(0, 3, 1, 2), x2.transpose(0, 3, 1, 2)


def init_params(key):
    def u(k, shape, fan_in):
        bound = 1.0 / np.sqrt(fan_in)
        return jax.random.uniform(k, shape, jnp.float32, -bound, bound)
    ks = jax.random.split(key, 10)
    return {
        "ec1_w": u(ks[0], (16, 1, 3, 3), 1 * 9),   "ec1_b": u(ks[1], (16,), 1 * 9),
        "ec2_w": u(ks[2], (8, 16, 3, 3), 16 * 9),  "ec2_b": u(ks[3], (8,), 16 * 9),
        "dc1_w": u(ks[4], (8, 16, 3, 3), 16 * 9),  "dc1_b": u(ks[5], (16,), 16 * 9),
        "dc2_w": u(ks[6], (16, 8, 5, 5), 8 * 25),  "dc2_b": u(ks[7], (8,), 8 * 25),
        "dc3_w": u(ks[8], (8, 1, 2, 2), 1 * 4),    "dc3_b": u(ks[9], (1,), 1 * 4),
    }


# --------------------------- pure-XLA reference ----------------------------

def _ref_conv_relu(x, w, b, stride, padding):
    y = lax.conv_general_dilated(
        x, w, (stride, stride), [(padding, padding)] * 2,
        dimension_numbers=("NCHW", "OIHW", "NCHW"),
        precision=lax.Precision.HIGHEST)
    return jnp.maximum(y + b.reshape(1, -1, 1, 1), 0.0)


def _ref_convT_relu(x, w_t, b, stride, padding):
    k = w_t.shape[2]
    w = jnp.flip(w_t, axis=(2, 3)).transpose(1, 0, 2, 3)
    y = lax.conv_general_dilated(
        x, w, (1, 1), [(k - 1 - padding,) * 2] * 2, lhs_dilation=(stride, stride),
        dimension_numbers=("NCHW", "OIHW", "NCHW"),
        precision=lax.Precision.HIGHEST)
    return jnp.maximum(y + b.reshape(1, -1, 1, 1), 0.0)


def _ref_pool(x):
    return lax.reduce_window(x, -jnp.inf, lax.max,
                             (1, 1, 2, 2), (1, 1, 2, 2), "VALID")


def reference_forward(params, x):
    h = _ref_conv_relu(x, params["ec1_w"], params["ec1_b"], 3, 1)
    h = _ref_pool(h)
    h = _ref_conv_relu(h, params["ec2_w"], params["ec2_b"], 1, 1)
    x1 = _ref_pool(h)
    h = _ref_convT_relu(x1, params["dc1_w"], params["dc1_b"], 2, 0)
    h = _ref_convT_relu(h, params["dc2_w"], params["dc2_b"], 3, 1)
    x2 = _ref_convT_relu(h, params["dc3_w"], params["dc3_b"], 2, 1)
    return x1, x2


if __name__ == "__main__":
    key = jax.random.PRNGKey(0)
    kx, kp = jax.random.split(key)
    # batch=2, 1 channel, 28x28 (the spatial size this autoencoder round-trips)
    x = jax.random.normal(kx, (2, 1, 28, 28), jnp.float32)
    params = init_params(kp)

    x1, x2 = jax.jit(autoencoder_forward)(params, x)
    jax.block_until_ready((x1, x2))

    assert x1.shape == (2, 8, 2, 2), x1.shape
    assert x2.shape == (2, 1, 28, 28), x2.shape

    r1, r2 = reference_forward(params, x)
    np.testing.assert_allclose(np.asarray(x1), np.asarray(r1), rtol=2e-3, atol=2e-3)
    np.testing.assert_allclose(np.asarray(x2), np.asarray(r2), rtol=2e-3, atol=2e-3)

    print("KERNEL_OK")
</pallas_src>

<mosaic_0001>
module attributes {stable_mosaic.version = 11 : i64} {
  func.func @_mm_bias_relu_pool_kernel(%arg0: memref<50x128xf32, #tpu.memory_space<vmem>>, %arg1: memref<50x128xf32, #tpu.memory_space<vmem>>, %arg2: memref<50x128xf32, #tpu.memory_space<vmem>>, %arg3: memref<50x128xf32, #tpu.memory_space<vmem>>, %arg4: memref<128x128xf32, #tpu.memory_space<vmem>>, %arg5: memref<1x128xf32, #tpu.memory_space<vmem>>, %arg6: memref<50x128xf32, #tpu.memory_space<vmem>>) attributes {dimension_semantics = [], scalar_prefetch = 0 : i64, scratch_operands = 0 : i64, tpu.core_type = #tpu.core_type<tc>} {
    %c0 = arith.constant 0 : index
    %c0_0 = arith.constant 0 : index
    %0 = vector.load %arg4[%c0, %c0_0] : memref<128x128xf32, #tpu.memory_space<vmem>>, vector<128x128xf32>
    %c0_1 = arith.constant 0 : index
    %c0_2 = arith.constant 0 : index
    %1 = vector.load %arg5[%c0_1, %c0_2] : memref<1x128xf32, #tpu.memory_space<vmem>>, vector<1x128xf32>
    %c0_3 = arith.constant 0 : index
    %c0_4 = arith.constant 0 : index
    %2 = vector.load %arg0[%c0_3, %c0_4] : memref<50x128xf32, #tpu.memory_space<vmem>>, vector<50x128xf32>
    %cst = arith.constant dense<0.000000e+00> : vector<50x128xf32>
    %3 = tpu.matmul %2, %0, %cst {dimension_numbers = #tpu.dot_dimension_numbers<[1], [0], [0], [1], [0, 0, 1, 1], [], []>} : vector<50x128xf32>, vector<128x128xf32>, vector<50x128xf32> -> vector<50x128xf32>
    %4 = vector.broadcast %1 : vector<1x128xf32> to vector<50x128xf32>
    %5 = arith.addf %3, %4 : vector<50x128xf32>
    %cst_5 = arith.constant 0.000000e+00 : f32
    %6 = vector.broadcast %cst_5 : f32 to vector<50x128xf32>
    %7 = arith.maximumf %5, %6 : vector<50x128xf32>
    %c0_6 = arith.constant 0 : index
    %c0_7 = arith.constant 0 : index
    %8 = vector.load %arg1[%c0_6, %c0_7] : memref<50x128xf32, #tpu.memory_space<vmem>>, vector<50x128xf32>
    %cst_8 = arith.constant dense<0.000000e+00> : vector<50x128xf32>
    %9 = tpu.matmul %8, %0, %cst_8 {dimension_numbers = #tpu.dot_dimension_numbers<[1], [0], [0], [1], [0, 0, 1, 1], [], []>} : vector<50x128xf32>, vector<128x128xf32>, vector<50x128xf32> -> vector<50x128xf32>
    %10 = vector.broadcast %1 : vector<1x128xf32> to vector<50x128xf32>
    %11 = arith.addf %9, %10 : vector<50x128xf32>
    %cst_9 = arith.constant 0.000000e+00 : f32
    %12 = vector.broadcast %cst_9 : f32 to vector<50x128xf32>
    %13 = arith.maximumf %11, %12 : vector<50x128xf32>
    %14 = arith.maximumf %7, %13 : vector<50x128xf32>
    %c0_10 = arith.constant 0 : index
    %c0_11 = arith.constant 0 : index
    %15 = vector.load %arg2[%c0_10, %c0_11] : memref<50x128xf32, #tpu.memory_space<vmem>>, vector<50x128xf32>
    %cst_12 = arith.constant dense<0.000000e+00> : vector<50x128xf32>
    %16 = tpu.matmul %15, %0, %cst_12 {dimension_numbers = #tpu.dot_dimension_numbers<[1], [0], [0], [1], [0, 0, 1, 1], [], []>} : vector<50x128xf32>, vector<128x128xf32>, vector<50x128xf32> -> vector<50x128xf32>
    %17 = vector.broadcast %1 : vector<1x128xf32> to vector<50x128xf32>
    %18 = arith.addf %16, %17 : vector<50x128xf32>
    %cst_13 = arith.constant 0.000000e+00 : f32
    %19 = vector.broadcast %cst_13 : f32 to vector<50x128xf32>
    %20 = arith.maximumf %18, %19 : vector<50x128xf32>
    %c0_14 = arith.constant 0 : index
    %c0_15 = arith.constant 0 : index
    %21 = vector.load %arg3[%c0_14, %c0_15] : memref<50x128xf32, #tpu.memory_space<vmem>>, vector<50x128xf32>
    %cst_16 = arith.constant dense<0.000000e+00> : vector<50x128xf32>
    %22 = tpu.matmul %21, %0, %cst_16 {dimension_numbers = #tpu.dot_dimension_numbers<[1], [0], [0], [1], [0, 0, 1, 1], [], []>} : vector<50x128xf32>, vector<128x128xf32>, vector<50x128xf32> -> vector<50x128xf32>
    %23 = vector.broadcast %1 : vector<1x128xf32> to vector<50x128xf32>
    %24 = arith.addf %22, %23 : vector<50x128xf32>
    %cst_17 = arith.constant 0.000000e+00 : f32
    %25 = vector.broadcast %cst_17 : f32 to vector<50x128xf32>
    %26 = arith.maximumf %24, %25 : vector<50x128xf32>
    %27 = arith.maximumf %20, %26 : vector<50x128xf32>
    %28 = arith.maximumf %14, %27 : vector<50x128xf32>
    %c0_18 = arith.constant 0 : index
    %c0_19 = arith.constant 0 : index
    %29 = vector.load %arg6[%c0_18, %c0_19] : memref<50x128xf32, #tpu.memory_space<vmem>>, vector<50x128xf32>
    tpu.vector_store %arg6[%c0_18, %c0_19], %28 {strides = array<i32>} : memref<50x128xf32, #tpu.memory_space<vmem>>, vector<50x128xf32>,
    return
  }
}

module attributes {stable_mosaic.version = 11 : i64} {
  func.func @_mm_bias_relu_pool_kernel(%arg0: memref<8x256xf32, #tpu.memory_space<vmem>>, %arg1: memref<8x256xf32, #tpu.memory_space<vmem>>, %arg2: memref<8x256xf32, #tpu.memory_space<vmem>>, %arg3: memref<8x256xf32, #tpu.memory_space<vmem>>, %arg4: memref<256x128xf32, #tpu.memory_space<vmem>>, %arg5: memref<1x128xf32, #tpu.memory_space<vmem>>, %arg6: memref<8x128xf32, #tpu.memory_space<vmem>>) attributes {dimension_semantics = [], scalar_prefetch = 0 : i64, scratch_operands = 0 : i64, tpu.core_type = #tpu.core_type<tc>} {
    %c0 = arith.constant 0 : index
    %c0_0 = arith.constant 0 : index
    %0 = vector.load %arg4[%c0, %c0_0] : memref<256x128xf32, #tpu.memory_space<vmem>>, vector<256x128xf32>
    %c0_1 = arith.constant 0 : index
    %c0_2 = arith.constant 0 : index
    %1 = vector.load %arg5[%c0_1, %c0_2] : memref<1x128xf32, #tpu.memory_space<vmem>>, vector<1x128xf32>
    %c0_3 = arith.constant 0 : index
    %c0_4 = arith.constant 0 : index
    %2 = vector.load %arg0[%c0_3, %c0_4] : memref<8x256xf32, #tpu.memory_space<vmem>>, vector<8x256xf32>
    %cst = arith.constant dense<0.000000e+00> : vector<8x128xf32>
    %3 = tpu.matmul %2, %0, %cst {dimension_numbers = #tpu.dot_dimension_numbers<[1], [0], [0], [1], [0, 0, 1, 1], [], []>} : vector<8x256xf32>, vector<256x128xf32>, vector<8x128xf32> -> vector<8x128xf32>
    %4 = vector.broadcast %1 : vector<1x128xf32> to vector<8x128xf32>
    %5 = arith.addf %3, %4 : vector<8x128xf32>
    %cst_5 = arith.constant 0.000000e+00 : f32
    %6 = vector.broadcast %cst_5 : f32 to vector<8x128xf32>
    %7 = arith.maximumf %5, %6 : vector<8x128xf32>
    %c0_6 = arith.constant 0 : index
    %c0_7 = arith.constant 0 : index
    %8 = vector.load %arg1[%c0_6, %c0_7] : memref<8x256xf32, #tpu.memory_space<vmem>>, vector<8x256xf32>
    %cst_8 = arith.constant dense<0.000000e+00> : vector<8x128xf32>
    %9 = tpu.matmul %8, %0, %cst_8 {dimension_numbers = #tpu.dot_dimension_numbers<[1], [0], [0], [1], [0, 0, 1, 1], [], []>} : vector<8x256xf32>, vector<256x128xf32>, vector<8x128xf32> -> vector<8x128xf32>
    %10 = vector.broadcast %1 : vector<1x128xf32> to vector<8x128xf32>
    %11 = arith.addf %9, %10 : vector<8x128xf32>
    %cst_9 = arith.constant 0.000000e+00 : f32
    %12 = vector.broadcast %cst_9 : f32 to vector<8x128xf32>
    %13 = arith.maximumf %11, %12 : vector<8x128xf32>
    %14 = arith.maximumf %7, %13 : vector<8x128xf32>
    %c0_10 = arith.constant 0 : index
    %c0_11 = arith.constant 0 : index
    %15 = vector.load %arg2[%c0_10, %c0_11] : memref<8x256xf32, #tpu.memory_space<vmem>>, vector<8x256xf32>
    %cst_12 = arith.constant dense<0.000000e+00> : vector<8x128xf32>
    %16 = tpu.matmul %15, %0, %cst_12 {dimension_numbers = #tpu.dot_dimension_numbers<[1], [0], [0], [1], [0, 0, 1, 1], [], []>} : vector<8x256xf32>, vector<256x128xf32>, vector<8x128xf32> -> vector<8x128xf32>
    %17 = vector.broadcast %1 : vector<1x128xf32> to vector<8x128xf32>
    %18 = arith.addf %16, %17 : vector<8x128xf32>
    %cst_13 = arith.constant 0.000000e+00 : f32
    %19 = vector.broadcast %cst_13 : f32 to vector<8x128xf32>
    %20 = arith.maximumf %18, %19 : vector<8x128xf32>
    %c0_14 = arith.constant 0 : index
    %c0_15 = arith.constant 0 : index
    %21 = vector.load %arg3[%c0_14, %c0_15] : memref<8x256xf32, #tpu.memory_space<vmem>>, vector<8x256xf32>
    %cst_16 = arith.constant dense<0.000000e+00> : vector<8x128xf32>
    %22 = tpu.matmul %21, %0, %cst_16 {dimension_numbers = #tpu.dot_dimension_numbers<[1], [0], [0], [1], [0, 0, 1, 1], [], []>} : vector<8x256xf32>, vector<256x128xf32>, vector<8x128xf32> -> vector<8x128xf32>
    %23 = vector.broadcast %1 : vector<1x128xf32> to vector<8x128xf32>
    %24 = arith.addf %22, %23 : vector<8x128xf32>
    %cst_17 = arith.constant 0.000000e+00 : f32
    %25 = vector.broadcast %cst_17 : f32 to vector<8x128xf32>
    %26 = arith.maximumf %24, %25 : vector<8x128xf32>
    %27 = arith.maximumf %20, %26 : vector<8x128xf32>
    %28 = arith.maximumf %14, %27 : vector<8x128xf32>
    %c0_18 = arith.constant 0 : index
    %c0_19 = arith.constant 0 : index
    %29 = vector.load %arg6[%c0_18, %c0_19] : memref<8x128xf32, #tpu.memory_space<vmem>>, vector<8x128xf32>
    tpu.vector_store %arg6[%c0_18, %c0_19], %28 {strides = array<i32>} : memref<8x128xf32, #tpu.memory_space<vmem>>, vector<8x128xf32>,
    return
  }
}

module attributes {stable_mosaic.version = 11 : i64} {
  func.func @_mm_bias_relu_kernel(%arg0: memref<50x128xf32, #tpu.memory_space<vmem>>, %arg1: memref<128x128xf32, #tpu.memory_space<vmem>>, %arg2: memref<1x128xf32, #tpu.memory_space<vmem>>, %arg3: memref<50x128xf32, #tpu.memory_space<vmem>>) attributes {dimension_semantics = [], scalar_prefetch = 0 : i64, scratch_operands = 0 : i64, tpu.core_type = #tpu.core_type<tc>} {
    %c0 = arith.constant 0 : index
    %c0_0 = arith.constant 0 : index
    %0 = vector.load %arg0[%c0, %c0_0] : memref<50x128xf32, #tpu.memory_space<vmem>>, vector<50x128xf32>
    %c0_1 = arith.constant 0 : index
    %c0_2 = arith.constant 0 : index
    %1 = vector.load %arg1[%c0_1, %c0_2] : memref<128x128xf32, #tpu.memory_space<vmem>>, vector<128x128xf32>
    %cst = arith.constant dense<0.000000e+00> : vector<50x128xf32>
    %2 = tpu.matmul %0, %1, %cst {dimension_numbers = #tpu.dot_dimension_numbers<[1], [0], [0], [1], [0, 0, 1, 1], [], []>} : vector<50x128xf32>, vector<128x128xf32>, vector<50x128xf32> -> vector<50x128xf32>
    %c0_3 = arith.constant 0 : index
    %c0_4 = arith.constant 0 : index
    %3 = vector.load %arg2[%c0_3, %c0_4] : memref<1x128xf32, #tpu.memory_space<vmem>>, vector<1x128xf32>
    %4 = vector.broadcast %3 : vector<1x128xf32> to vector<50x128xf32>
    %5 = arith.addf %2, %4 : vector<50x128xf32>
    %cst_5 = arith.constant 0.000000e+00 : f32
    %6 = vector.broadcast %cst_5 : f32 to vector<50x128xf32>
    %7 = arith.maximumf %5, %6 : vector<50x128xf32>
    %c0_6 = arith.constant 0 : index
    %c0_7 = arith.constant 0 : index
    %8 = vector.load %arg3[%c0_6, %c0_7] : memref<50x128xf32, #tpu.memory_space<vmem>>, vector<50x128xf32>
    tpu.vector_store %arg3[%c0_6, %c0_7], %7 {strides = array<i32>} : memref<50x128xf32, #tpu.memory_space<vmem>>, vector<50x128xf32>,
    return
  }
}

module attributes {stable_mosaic.version = 11 : i64} {
  func.func @_mm_bias_relu_kernel(%arg0: memref<450x512xf32, #tpu.memory_space<vmem>>, %arg1: memref<512x128xf32, #tpu.memory_space<vmem>>, %arg2: memref<1x128xf32, #tpu.memory_space<vmem>>, %arg3: memref<450x128xf32, #tpu.memory_space<vmem>>) attributes {dimension_semantics = [], scalar_prefetch = 0 : i64, scratch_operands = 0 : i64, tpu.core_type = #tpu.core_type<tc>} {
    %c0 = arith.constant 0 : index
    %c0_0 = arith.constant 0 : index
    %0 = vector.load %arg0[%c0, %c0_0] : memref<450x512xf32, #tpu.memory_space<vmem>>, vector<450x512xf32>
    %c0_1 = arith.constant 0 : index
    %c0_2 = arith.constant 0 : index
    %1 = vector.load %arg1[%c0_1, %c0_2] : memref<512x128xf32, #tpu.memory_space<vmem>>, vector<512x128xf32>
    %cst = arith.constant dense<0.000000e+00> : vector<450x128xf32>
    %2 = tpu.matmul %0, %1, %cst {dimension_numbers = #tpu.dot_dimension_numbers<[1], [0], [0], [1], [0, 0, 1, 1], [], []>} : vector<450x512xf32>, vector<512x128xf32>, vector<450x128xf32> -> vector<450x128xf32>
    %c0_3 = arith.constant 0 : index
    %c0_4 = arith.constant 0 : index
    %3 = vector.load %arg2[%c0_3, %c0_4] : memref<1x128xf32, #tpu.memory_space<vmem>>, vector<1x128xf32>
    %4 = vector.broadcast %3 : vector<1x128xf32> to vector<450x128xf32>
    %5 = arith.addf %2, %4 : vector<450x128xf32>
    %cst_5 = arith.constant 0.000000e+00 : f32
    %6 = vector.broadcast %cst_5 : f32 to vector<450x128xf32>
    %7 = arith.maximumf %5, %6 : vector<450x128xf32>
    %c0_6 = arith.constant 0 : index
    %c0_7 = arith.constant 0 : index
    %8 = vector.load %arg3[%c0_6, %c0_7] : memref<450x128xf32, #tpu.memory_space<vmem>>, vector<450x128xf32>
    tpu.vector_store %arg3[%c0_6, %c0_7], %7 {strides = array<i32>} : memref<450x128xf32, #tpu.memory_space<vmem>>, vector<450x128xf32>,
    return
  }
}

module attributes {stable_mosaic.version = 11 : i64} {
  func.func @_mm_bias_relu_kernel(%arg0: memref<1568x128xf32, #tpu.memory_space<vmem>>, %arg1: memref<128x128xf32, #tpu.memory_space<vmem>>, %arg2: memref<1x128xf32, #tpu.memory_space<vmem>>, %arg3: memref<1568x128xf32, #tpu.memory_space<vmem>>) attributes {dimension_semantics = [], scalar_prefetch = 0 : i64, scratch_operands = 0 : i64, tpu.core_type = #tpu.core_type<tc>} {
    %c0 = arith.constant 0 : index
    %c0_0 = arith.constant 0 : index
    %0 = vector.load %arg0[%c0, %c0_0] : memref<1568x128xf32, #tpu.memory_space<vmem>>, vector<1568x128xf32>
    %c0_1 = arith.constant 0 : index
    %c0_2 = arith.constant 0 : index
    %1 = vector.load %arg1[%c0_1, %c0_2] : memref<128x128xf32, #tpu.memory_space<vmem>>, vector<128x128xf32>
    %cst = arith.constant dense<0.000000e+00> : vector<1568x128xf32>
    %2 = tpu.matmul %0, %1, %cst {dimension_numbers = #tpu.dot_dimension_numbers<[1], [0], [0], [1], [0, 0, 1, 1], [], []>} : vector<1568x128xf32>, vector<128x128xf32>, vector<1568x128xf32> -> vector<1568x128xf32>
    %c0_3 = arith.constant 0 : index
    %c0_4 = arith.constant 0 : index
    %3 = vector.load %arg2[%c0_3, %c0_4] : memref<1x128xf32, #tpu.memory_space<vmem>>, vector<1x128xf32>
    %4 = vector.broadcast %3 : vector<1x128xf32> to vector<1568x128xf32>
    %5 = arith.addf %2, %4 : vector<1568x128xf32>
    %cst_5 = arith.constant 0.000000e+00 : f32
    %6 = vector.broadcast %cst_5 : f32 to vector<1568x128xf32>
    %7 = arith.maximumf %5, %6 : vector<1568x128xf32>
    %c0_6 = arith.constant 0 : index
    %c0_7 = arith.constant 0 : index
    %8 = vector.load %arg3[%c0_6, %c0_7] : memref<1568x128xf32, #tpu.memory_space<vmem>>, vector<1568x128xf32>
    tpu.vector_store %arg3[%c0_6, %c0_7], %7 {strides = array<i32>} : memref<1568x128xf32, #tpu.memory_space<vmem>>, vector<1568x128xf32>,
    return
  }
}

</mosaic_0001>

<llo_original>
// kernel: autoencoder_forward.5
$region0: #{autoencoder_forward.5}
  #allocation0 [shape = 'u32[]', space=smem, size = 0x4, offset = 0x4, fixed_abs, tag = 'smem constant byte address 0x4 - core index']
  #allocation1 [shape = 'u32[144,128]{1,0:T(1,128)}', space=vmem, size = 0x12000, scoped, tag = 'internal scratch']
  %s0 = inlined_call_operand.vmem [shape: f32[50,128], index: 0, kind: input, shape index: {}]
  %s1 = inlined_call_operand.vmem [shape: f32[50,128], index: 1, kind: input, shape index: {}]
  %s2 = inlined_call_operand.vmem [shape: f32[50,128], index: 2, kind: input, shape index: {}]
  %s3 = inlined_call_operand.vmem [shape: f32[50,128], index: 3, kind: input, shape index: {}]
  %s4 = inlined_call_operand.vmem [shape: f32[128,128], index: 4, kind: input, shape index: {}]
  %s5 = inlined_call_operand.vmem [shape: f32[1,128], index: 5, kind: input, shape index: {}]
  %s6 = inlined_call_operand.vmem [shape: f32[50,128], index: 6, kind: output, shape index: {}]
  %s7 = sld [smem:[#allocation0]]
  $region34: #{autoencoder_forward.5} parent=0
    _
  %s9 = ssub.s32 1, %s7
  %s10 = scalar_select 0, %s9, %s7
  // Predicated region
  $region2: #{autoencoder_forward.5} parent=0 // pred_check
    _
  $region3: #{autoencoder_forward.5} parent=0 // pred_check_branch
    %12 = sbr.rel (0) target = $region5
  $region4: #{autoencoder_forward.5} parent=0 // pred_region
    _
  $region5: #{autoencoder_forward.5} parent=0 // pred_fallthru
    _
  // Predicated region
  $region6: #{autoencoder_forward.5} parent=0 // pred_check
    _
  $region7: #{autoencoder_forward.5} parent=0 // pred_check_branch
    %14 = sbr.rel (0) target = $region9
  $region8: #{autoencoder_forward.5} parent=0 // pred_region
    _
  $region9: #{autoencoder_forward.5} parent=0 // pred_fallthru
    _
  // Predicated region
  $region10: #{autoencoder_forward.5} parent=0 // pred_check
    _
  $region11: #{autoencoder_forward.5} parent=0 // pred_check_branch
    %16 = sbr.rel (0) target = $region13
  $region12: #{autoencoder_forward.5} parent=0 // pred_region
    _
  $region13: #{autoencoder_forward.5} parent=0 // pred_fallthru
    _
  // Predicated region
  $region14: #{autoencoder_forward.5} parent=0 // pred_check
    _
  $region15: #{autoencoder_forward.5} parent=0 // pred_check_branch
    %18 = sbr.rel (0) target = $region17
  $region16: #{autoencoder_forward.5} parent=0 // pred_region
    _
  $region17: #{autoencoder_forward.5} parent=0 // pred_fallthru
    _
  // Predicated region
  $region18: #{autoencoder_forward.5} parent=0 // pred_check
    _
  $region19: #{autoencoder_forward.5} parent=0 // pred_check_branch
    %20 = sbr.rel (0) target = $region21
  $region20: #{autoencoder_forward.5} parent=0 // pred_region
    _
  $region21: #{autoencoder_forward.5} parent=0 // pred_fallthru
    _
  // Predicated region
  $region22: #{autoencoder_forward.5} parent=0 // pred_check
    _
  $region23: #{autoencoder_forward.5} parent=0 // pred_check_branch
    %22 = sbr.rel (0) target = $region25
  $region24: #{autoencoder_forward.5} parent=0 // pred_region
    _
  $region25: #{autoencoder_forward.5} parent=0 // pred_fallthru
    _
  %v23 = vld [vmem:[%s4] sm:$0xff]
  %v24 = vld [vmem:[%s4 + $0x8] sm:$0xff]
  %v25 = vld [vmem:[%s4 + $0x10] sm:$0xff]
  %v26 = vld [vmem:[%s4 + $0x18] sm:$0xff]
  %v27 = vld [vmem:[%s4 + $0x20] sm:$0xff]
  %v28 = vld [vmem:[%s4 + $0x28] sm:$0xff]
  %v29 = vld [vmem:[%s4 + $0x30] sm:$0xff]
  %v30 = vld [vmem:[%s4 + $0x38] sm:$0xff]
  %v31 = vld [vmem:[%s4 + $0x40] sm:$0xff]
  %v32 = vld [vmem:[%s4 + $0x48] sm:$0xff]
  %v33 = vld [vmem:[%s4 + $0x50] sm:$0xff]
  %v34 = vld [vmem:[%s4 + $0x58] sm:$0xff]
  %v35 = vld [vmem:[%s4 + $0x60] sm:$0xff]
  %v36 = vld [vmem:[%s4 + $0x68] sm:$0xff]
  %v37 = vld [vmem:[%s4 + $0x70] sm:$0xff]
  %v38 = vld [vmem:[%s4 + $0x78] sm:$0xff]
  %v39 = vld [vmem:[%s5] sm:$0x1]
  %v40 = vld [vmem:[%s0] sm:$0xff]
  %v41 = vld [vmem:[%s0 + $0x8] sm:$0xff]
  %v42 = vld [vmem:[%s0 + $0x10] sm:$0xff]
  %v43 = vld [vmem:[%s0 + $0x18] sm:$0xff]
  %v44 = vld [vmem:[%s0 + $0x20] sm:$0xff]
  %v45 = vld [vmem:[%s0 + $0x28] sm:$0xff]
  %v46 = vld [vmem:[%s0 + $0x30] sm:$0x3]
  %v48 = vlaneseq
  %v49 = vshrl.u32 %v48, 7
  %v50 = vsub.s32 0, %v49
  %v51 = vrot.slane %v39, %v50
  %53 = vmatprep.subr.mxu0 0.0
  %54 = vmatpush1.msra.mxu0 %v23
  %55 = vmatprep.subr.mxu0 0.0
  %56 = vmatpush1.msra.mxu0 %v24
  %57 = vmatprep.subr.mxu0 0.0
  %58 = vmatpush1.msra.mxu0 %v25
  %59 = vmatprep.subr.mxu0 0.0
  %60 = vmatpush1.msra.mxu0 %v26
  %61 = vmatprep.subr.mxu0 0.0
  %62 = vmatpush1.msra.mxu0 %v27
  %63 = vmatprep.subr.mxu0 0.0
  %64 = vmatpush1.msra.mxu0 %v28
  %65 = vmatprep.subr.mxu0 0.0
  %66 = vmatpush1.msra.mxu0 %v29
  %67 = vmatprep.subr.mxu0 0.0
  %68 = vmatpush1.msra.mxu0 %v30
  %69 = vmatprep.subr.mxu0 0.0
  %70 = vmatpush1.msra.mxu0 %v31
  %71 = vmatprep.subr.mxu0 0.0
  %72 = vmatpush1.msra.mxu0 %v32
  %73 = vmatprep.subr.mxu0 0.0
  %74 = vmatpush1.msra.mxu0 %v33
  %75 = vmatprep.subr.mxu0 0.0
  %76 = vmatpush1.msra.mxu0 %v34
  %77 = vmatprep.subr.mxu0 0.0
  %78 = vmatpush1.msra.mxu0 %v35
  %79 = vmatprep.subr.mxu0 0.0
  %80 = vmatpush1.msra.mxu0 %v36
  %81 = vmatprep.subr.mxu0 0.0
  %82 = vmatpush1.msra.mxu0 %v37
  %83 = vmatprep.subr.mxu0 0.0
  %84 = vmatpush1.msra.mxu0 %v38
  %85 = vmatprep.subr.mxu0 0.0
  %86 = vmatpush1.msra.mxu0 0.0
  %87 = vmatprep.subr.mxu0 0.0
  %88 = vmatpush1.msra.mxu0 0.0
  %89 = vmatprep.subr.mxu0 0.0
  %90 = vmatpush1.msra.mxu0 0.0
  %91 = vmatprep.subr.mxu0 0.0
  %92 = vmatpush1.msra.mxu0 0.0
  %93 = vmatprep.subr.mxu0 0.0
  %94 = vmatpush1.msra.mxu0 0.0
  %95 = vmatprep.subr.mxu0 0.0
  %96 = vmatpush1.msra.mxu0 0.0
  %97 = vmatprep.subr.mxu0 0.0
  %98 = vmatpush1.msra.mxu0 0.0
  %99 = vmatprep.subr.mxu0 0.0
  %100 = vmatpush1.msra.mxu0 0.0
  %101 = vmatprep.subr.mxu0 0.0
  %102 = vmatpush1.msra.mxu0 0.0
  %103 = vmatprep.subr.mxu0 0.0
  %104 = vmatpush1.msra.mxu0 0.0
  %105 = vmatprep.subr.mxu0 0.0
  %106 = vmatpush1.msra.mxu0 0.0
  %107 = vmatprep.subr.mxu0 0.0
  %108 = vmatpush1.msra.mxu0 0.0
  %109 = vmatprep.subr.mxu0 0.0
  %110 = vmatpush1.msra.mxu0 0.0
  %111 = vmatprep.subr.mxu0 0.0
  %112 = vmatpush1.msra.mxu0 0.0
  %113 = vmatprep.subr.mxu0 0.0
  %114 = vmatpush1.msra.mxu0 0.0
  %115 = vmatprep.subr.mxu0 0.0
  %116 = vmatpush1.msra.mxu0 0.0
  %117 = vmatprep.mubr.f32.mxu0 0.0
  %118 = vmatmul.mubr.f32.gmra.mrb[0].mxu0 %v40
  %v119 = vpop.f32.mrb[0].mxu0
  %v120 = vadd.f32 %v51, %v119
  %v121 = vpop.f32.mrb[0].mxu0
  %122 = vmatprep.mubr.f32.mxu0 0.0
  %123 = vmatmul.mubr.f32.gmra.mrb[0].mxu0 %v41
  %v124 = vpop.f32.mrb[0].mxu0
  %v125 = vadd.f32 %v51, %v124
  %v126 = vpop.f32.mrb[0].mxu0
  %127 = vmatprep.mubr.f32.mxu0 0.0
  %128 = vmatmul.mubr.f32.gmra.mrb[0].mxu0 %v42
  %v129 = vpop.f32.mrb[0].mxu0
  %v130 = vadd.f32 %v51, %v129
  %v131 = vpop.f32.mrb[0].mxu0
  %132 = vmatprep.mubr.f32.mxu0 0.0
  %133 = vmatmul.mubr.f32.gmra.mrb[0].mxu0 %v43
  %v134 = vpop.f32.mrb[0].mxu0
  %v135 = vadd.f32 %v51, %v134
  %v136 = vpop.f32.mrb[0].mxu0
  %137 = vmatprep.mubr.f32.mxu0 0.0
  %138 = vmatmul.mubr.f32.gmra.mrb[0].mxu0 %v44
  %v139 = vpop.f32.mrb[0].mxu0
  %v140 = vadd.f32 %v51, %v139
  %v141 = vpop.f32.mrb[0].mxu0
  %142 = vmatprep.mubr.f32.mxu0 0.0
  %143 = vmatmul.mubr.f32.gmra.mrb[0].mxu0 %v45
  %v144 = vpop.f32.mrb[0].mxu0
  %v145 = vadd.f32 %v51, %v144
  %v146 = vpop.f32.mrb[0].mxu0
  %147 = vmatprep.mubr.f32.mxu0 0.0
  %148 = vmatmul.mubr.f32.gmra.mrb[0].mxu0 %v46
  %v149 = vpop.f32.mrb[0].mxu0
  %v150 = vadd.f32 %v51, %v149
  %v151 = vpop.f32.mrb[0].mxu0
  %152 = vdwg.mxu0
  %v153 = vmax.f32 %v120, 0.0
  %v154 = vmax.f32 %v125, 0.0
  %v155 = vmax.f32 %v130, 0.0
  %v156 = vmax.f32 %v135, 0.0
  %v157 = vmax.f32 %v140, 0.0
  %v158 = vmax.f32 %v145, 0.0
  %v159 = vmax.f32 %v150, 0.0
  %v160 = vld [vmem:[%s1] sm:$0xff]
  %v161 = vld [vmem:[%s1 + $0x8] sm:$0xff]
  %v162 = vld [vmem:[%s1 + $0x10] sm:$0xff]
  %v163 = vld [vmem:[%s1 + $0x18] sm:$0xff]
  %v164 = vld [vmem:[%s1 + $0x20] sm:$0xff]
  %v165 = vld [vmem:[%s1 + $0x28] sm:$0xff]
  %v166 = vld [vmem:[%s1 + $0x30] sm:$0x3]
  %167 = vmatprep.subr.mxu0 0.0
  %168 = vmatpush1.msra.mxu0 %v23
  %169 = vmatprep.subr.mxu0 0.0
  %170 = vmatpush1.msra.mxu0 %v24
  %171 = vmatprep.subr.mxu0 0.0
  %172 = vmatpush1.msra.mxu0 %v25
  %173 = vmatprep.subr.mxu0 0.0
  %174 = vmatpush1.msra.mxu0 %v26
  %175 = vmatprep.subr.mxu0 0.0
  %176 = vmatpush1.msra.mxu0 %v27
  %177 = vmatprep.subr.mxu0 0.0
  %178 = vmatpush1.msra.mxu0 %v28
  %179 = vmatprep.subr.mxu0 0.0
  %180 = vmatpush1.msra.mxu0 %v29
  %181 = vmatprep.subr.mxu0 0.0
  %182 = vmatpush1.msra.mxu0 %v30
  %183 = vmatprep.subr.mxu0 0.0
  %184 = vmatpush1.msra.mxu0 %v31
  %185 = vmatprep.subr.mxu0 0.0
  %186 = vmatpush1.msra.mxu0 %v32
  %187 = vmatprep.subr.mxu0 0.0
  %188 = vmatpush1.msra.mxu0 %v33
  %189 = vmatprep.subr.mxu0 0.0
  %190 = vmatpush1.msra.mxu0 %v34
  %191 = vmatprep.subr.mxu0 0.0
  %192 = vmatpush1.msra.mxu0 %v35
  %193 = vmatprep.subr.mxu0 0.0
  %194 = vmatpush1.msra.mxu0 %v36
  %195 = vmatprep.subr.mxu0 0.0
  %196 = vmatpush1.msra.mxu0 %v37
  %197 = vmatprep.subr.mxu0 0.0
  %198 = vmatpush1.msra.mxu0 %v38
  %199 = vmatprep.subr.mxu0 0.0
  %200 = vmatpush1.msra.mxu0 0.0
  %201 = vmatprep.subr.mxu0 0.0
  %202 = vmatpush1.msra.mxu0 0.0
  %203 = vmatprep.subr.mxu0 0.0
  %204 = vmatpush1.msra.mxu0 0.0
  %205 = vmatprep.subr.mxu0 0.0
  %206 = vmatpush1.msra.mxu0 0.0
  %207 = vmatprep.subr.mxu0 0.0
  %208 = vmatpush1.msra.mxu0 0.0
  %209 = vmatprep.subr.mxu0 0.0
  %210 = vmatpush1.msra.mxu0 0.0
  %211 = vmatprep.subr.mxu0 0.0
  %212 = vmatpush1.msra.mxu0 0.0
  %213 = vmatprep.subr.mxu0 0.0
  %214 = vmatpush1.msra.mxu0 0.0
  %215 = vmatprep.subr.mxu0 0.0
  %216 = vmatpush1.msra.mxu0 0.0
  %217 = vmatprep.subr.mxu0 0.0
  %218 = vmatpush1.msra.mxu0 0.0
  %219 = vmatprep.subr.mxu0 0.0
  %220 = vmatpush1.msra.mxu0 0.0
  %221 = vmatprep.subr.mxu0 0.0
  %222 = vmatpush1.msra.mxu0 0.0
  %223 = vmatprep.subr.mxu0 0.0
  %224 = vmatpush1.msra.mxu0 0.0
  %225 = vmatprep.subr.mxu0 0.0
  %226 = vmatpush1.msra.mxu0 0.0
  %227 = vmatprep.subr.mxu0 0.0
  %228 = vmatpush1.msra.mxu0 0.0
  %229 = vmatprep.subr.mxu0 0.0
  %230 = vmatpush1.msra.mxu0 0.0
  %231 = vmatprep.mubr.f32.mxu0 0.0
  %232 = vmatmul.mubr.f32.gmra.mrb[0].mxu0 %v160
  %v233 = vpop.f32.mrb[0].mxu0
  %v234 = vadd.f32 %v51, %v233
  %v235 = vpop.f32.mrb[0].mxu0
  %236 = vmatprep.mubr.f32.mxu0 0.0
  %237 = vmatmul.mubr.f32.gmra.mrb[0].mxu0 %v161
  %v238 = vpop.f32.mrb[0].mxu0
  %v239 = vadd.f32 %v51, %v238
  %v240 = vpop.f32.mrb[0].mxu0
  %241 = vmatprep.mubr.f32.mxu0 0.0
  %242 = vmatmul.mubr.f32.gmra.mrb[0].mxu0 %v162
  %v243 = vpop.f32.mrb[0].mxu0
  %v244 = vadd.f32 %v51, %v243
  %v245 = vpop.f32.mrb[0].mxu0
  %246 = vmatprep.mubr.f32.mxu0 0.0
  %247 = vmatmul.mubr.f32.gmra.mrb[0].mxu0 %v163
  %v248 = vpop.f32.mrb[0].mxu0
  %v249 = vadd.f32 %v51, %v248
  %v250 = vpop.f32.mrb[0].mxu0
  %251 = vmatprep.mubr.f32.mxu0 0.0
  %252 = vmatmul.mubr.f32.gmra.mrb[0].mxu0 %v164
  %v253 = vpop.f32.mrb[0].mxu0
  %v254 = vadd.f32 %v51, %v253
  %v255 = vpop.f32.mrb[0].mxu0
  %256 = vmatprep.mubr.f32.mxu0 0.0
  %257 = vmatmul.mubr.f32.gmra.mrb[0].mxu0 %v165
  %v258 = vpop.f32.mrb[0].mxu0
  %v259 = vadd.f32 %v51, %v258
  %v260 = vpop.f32.mrb[0].mxu0
  %261 = vmatprep.mubr.f32.mxu0 0.0
  %262 = vmatmul.mubr.f32.gmra.mrb[0].mxu0 %v166
  %v263 = vpop.f32.mrb[0].mxu0
  %v264 = vadd.f32 %v51, %v263
  %v265 = vpop.f32.mrb[0].mxu0
  %266 = vdwg.mxu0
  %v267 = vmax.f32 %v234, 0.0
  %v268 = vmax.f32 %v239, 0.0
  %v269 = vmax.f32 %v244, 0.0
  %v270 = vmax.f32 %v249, 0.0
  %v271 = vmax.f32 %v254, 0.0
  %v272 = vmax.f32 %v259, 0.0
  %v273 = vmax.f32 %v264, 0.0
  %v274 = vmax.f32 %v153, %v267
  %v275 = vmax.f32 %v154, %v268
  %v276 = vmax.f32 %v155, %v269
  %v277 = vmax.f32 %v156, %v270
  %v278 = vmax.f32 %v157, %v271
  %v279 = vmax.f32 %v158, %v272
  %v280 = vmax.f32 %v159, %v273
  %v281 = vld [vmem:[%s2] sm:$0xff]
  %v282 = vld [vmem:[%s2 + $0x8] sm:$0xff]
  %v283 = vld [vmem:[%s2 + $0x10] sm:$0xff]
  %v284 = vld [vmem:[%s2 + $0x18] sm:$0xff]
  %v285 = vld [vmem:[%s2 + $0x20] sm:$0xff]
  %v286 = vld [vmem:[%s2 + $0x28] sm:$0xff]
  %v287 = vld [vmem:[%s2 + $0x30] sm:$0x3]
  %288 = vmatprep.subr.mxu0 0.0
  %289 = vmatpush1.msra.mxu0 %v23
  %290 = vmatprep.subr.mxu0 0.0
  %291 = vmatpush1.msra.mxu0 %v24
  %292 = vmatprep.subr.mxu0 0.0
  %293 = vmatpush1.msra.mxu0 %v25
  %294 = vmatprep.subr.mxu0 0.0
  %295 = vmatpush1.msra.mxu0 %v26
  %296 = vmatprep.subr.mxu0 0.0
  %297 = vmatpush1.msra.mxu0 %v27
  %298 = vmatprep.subr.mxu0 0.0
  %299 = vmatpush1.msra.mxu0 %v28
  %300 = vmatprep.subr.mxu0 0.0
  %301 = vmatpush1.msra.mxu0 %v29
  %302 = vmatprep.subr.mxu0 0.0
  %303 = vmatpush1.msra.mxu0 %v30
  %304 = vmatprep.subr.mxu0 0.0
  %305 = vmatpush1.msra.mxu0 %v31
  %306 = vmatprep.subr.mxu0 0.0
  %307 = vmatpush1.msra.mxu0 %v32
  %308 = vmatprep.subr.mxu0 0.0
  %309 = vmatpush1.msra.mxu0 %v33
  %310 = vmatprep.subr.mxu0 0.0
  %311 = vmatpush1.msra.mxu0 %v34
  %312 = vmatprep.subr.mxu0 0.0
  %313 = vmatpush1.msra.mxu0 %v35
  %314 = vmatprep.subr.mxu0 0.0
  %315 = vmatpush1.msra.mxu0 %v36
  %316 = vmatprep.subr.mxu0 0.0
  %317 = vmatpush1.msra.mxu0 %v37
  %318 = vmatprep.subr.mxu0 0.0
  %319 = vmatpush1.msra.mxu0 %v38
  %320 = vmatprep.subr.mxu0 0.0
  %321 = vmatpush1.msra.mxu0 0.0
  %322 = vmatprep.subr.mxu0 0.0
  %323 = vmatpush1.msra.mxu0 0.0
  %324 = vmatprep.subr.mxu0 0.0
  %325 = vmatpush1.msra.mxu0 0.0
  %326 = vmatprep.subr.mxu0 0.0
  %327 = vmatpush1.msra.mxu0 0.0
  %328 = vmatprep.subr.mxu0 0.0
  %329 = vmatpush1.msra.mxu0 0.0
  %330 = vmatprep.subr.mxu0 0.0
  %331 = vmatpush1.msra.mxu0 0.0
  %332 = vmatprep.subr.mxu0 0.0
  %333 = vmatpush1.msra.mxu0 0.0
  %334 = vmatprep.subr.mxu0 0.0
  %335 = vmatpush1.msra.mxu0 0.0
  %336 = vmatprep.subr.mxu0 0.0
  %337 = vmatpush1.msra.mxu0 0.0
  %338 = vmatprep.subr.mxu0 0.0
  %339 = vmatpush1.msra.mxu0 0.0
  %340 = vmatprep.subr.mxu0 0.0
  %341 = vmatpush1.msra.mxu0 0.0
  %342 = vmatprep.subr.mxu0 0.0
  %343 = vmatpush1.msra.mxu0 0.0
  %344 = vmatprep.subr.mxu0 0.0
  %345 = vmatpush1.msra.mxu0 0.0
  %346 = vmatprep.subr.mxu0 0.0
  %347 = vmatpush1.msra.mxu0 0.0
  %348 = vmatprep.subr.mxu0 0.0
  %349 = vmatpush1.msra.mxu0 0.0
  %350 = vmatprep.subr.mxu0 0.0
  %351 = vmatpush1.msra.mxu0 0.0
  %352 = vmatprep.mubr.f32.mxu0 0.0
  %353 = vmatmul.mubr.f32.gmra.mrb[0].mxu0 %v281
  %v354 = vpop.f32.mrb[0].mxu0
  %v355 = vadd.f32 %v51, %v354
  %v356 = vpop.f32.mrb[0].mxu0
  %357 = vmatprep.mubr.f32.mxu0 0.0
  %358 = vmatmul.mubr.f32.gmra.mrb[0].mxu0 %v282
  %v359 = vpop.f32.mrb[0].mxu0
  %v360 = vadd.f32 %v51, %v359
  %v361 = vpop.f32.mrb[0].mxu0
  %362 = vmatprep.mubr.f32.mxu0 0.0
  %363 = vmatmul.mubr.f32.gmra.mrb[0].mxu0 %v283
  %v364 = vpop.f32.mrb[0].mxu0
  %v365 = vadd.f32 %v51, %v364
  %v366 = vpop.f32.mrb[0].mxu0
  %367 = vmatprep.mubr.f32.mxu0 0.0
  %368 = vmatmul.mubr.f32.gmra.mrb[0].mxu0 %v284
  %v369 = vpop.f32.mrb[0].mxu0
  %v370 = vadd.f32 %v51, %v369
  %v371 = vpop.f32.mrb[0].mxu0
  %372 = vmatprep.mubr.f32.mxu0 0.0
  %373 = vmatmul.mubr.f32.gmra.mrb[0].mxu0 %v285
  %v374 = vpop.f32.mrb[0].mxu0
  %v375 = vadd.f32 %v51, %v374
  %v376 = vpop.f32.mrb[0].mxu0
  %377 = vmatprep.mubr.f32.mxu0 0.0
  %378 = vmatmul.mubr.f32.gmra.mrb[0].mxu0 %v286
  %v379 = vpop.f32.mrb[0].mxu0
  %v380 = vadd.f32 %v51, %v379
  %v381 = vpop.f32.mrb[0].mxu0
  %382 = vmatprep.mubr.f32.mxu0 0.0
  %383 = vmatmul.mubr.f32.gmra.mrb[0].mxu0 %v287
  %v384 = vpop.f32.mrb[0].mxu0
  %v385 = vadd.f32 %v51, %v384
  %v386 = vpop.f32.mrb[0].mxu0
  %387 = vdwg.mxu0
  %v388 = vmax.f32 %v355, 0.0
  %v389 = vmax.f32 %v360, 0.0
  %v390 = vmax.f32 %v365, 0.0
  %v391 = vmax.f32 %v370, 0.0
  %v392 = vmax.f32 %v375, 0.0
  %v393 = vmax.f32 %v380, 0.0
  %v394 = vmax.f32 %v385, 0.0
  %v395 = vld [vmem:[%s3] sm:$0xff]
  %v396 = vld [vmem:[%s3 + $0x8] sm:$0xff]
  %v397 = vld [vmem:[%s3 + $0x10] sm:$0xff]
  %v398 = vld [vmem:[%s3 + $0x18] sm:$0xff]
  %v399 = vld [vmem:[%s3 + $0x20] sm:$0xff]
  %v400 = vld [vmem:[%s3 + $0x28] sm:$0xff]
  %v401 = vld [vmem:[%s3 + $0x30] sm:$0x3]
  %402 = vmatprep.subr.mxu0 0.0
  %403 = vmatpush1.msra.mxu0 %v23
  %404 = vmatprep.subr.mxu0 0.0
  %405 = vmatpush1.msra.mxu0 %v24
  %406 = vmatprep.subr.mxu0 0.0
  %407 = vmatpush1.msra.mxu0 %v25
  %408 = vmatprep.subr.mxu0 0.0
  %409 = vmatpush1.msra.mxu0 %v26
  %410 = vmatprep.subr.mxu0 0.0
  %411 = vmatpush1.msra.mxu0 %v27
  %412 = vmatprep.subr.mxu0 0.0
  %413 = vmatpush1.msra.mxu0 %v28
  %414 = vmatprep.subr.mxu0 0.0
  %415 = vmatpush1.msra.mxu0 %v29
  %416 = vmatprep.subr.mxu0 0.0
  %417 = vmatpush1.msra.mxu0 %v30
  %418 = vmatprep.subr.mxu0 0.0
  %419 = vmatpush1.msra.mxu0 %v31
  %420 = vmatprep.subr.mxu0 0.0
  %421 = vmatpush1.msra.mxu0 %v32
  %422 = vmatprep.subr.mxu0 0.0
  %423 = vmatpush1.msra.mxu0 %v33
  %424 = vmatprep.subr.mxu0 0.0
  %425 = vmatpush1.msra.mxu0 %v34
  %426 = vmatprep.subr.mxu0 0.0
  %427 = vmatpush1.msra.mxu0 %v35
  %428 = vmatprep.subr.mxu0 0.0
  %429 = vmatpush1.msra.mxu0 %v36
  %430 = vmatprep.subr.mxu0 0.0
  %431 = vmatpush1.msra.mxu0 %v37
  %432 = vmatprep.subr.mxu0 0.0
  %433 = vmatpush1.msra.mxu0 %v38
  %434 = vmatprep.subr.mxu0 0.0
  %435 = vmatpush1.msra.mxu0 0.0
  %436 = vmatprep.subr.mxu0 0.0
  %437 = vmatpush1.msra.mxu0 0.0
  %438 = vmatprep.subr.mxu0 0.0
  %439 = vmatpush1.msra.mxu0 0.0
  %440 = vmatprep.subr.mxu0 0.0
  %441 = vmatpush1.msra.mxu0 0.0
  %442 = vmatprep.subr.mxu0 0.0
  %443 = vmatpush1.msra.mxu0 0.0
  %444 = vmatprep.subr.mxu0 0.0
  %445 = vmatpush1.msra.mxu0 0.0
  %446 = vmatprep.subr.mxu0 0.0
  %447 = vmatpush1.msra.mxu0 0.0
  %448 = vmatprep.subr.mxu0 0.0
  %449 = vmatpush1.msra.mxu0 0.0
  %450 = vmatprep.subr.mxu0 0.0
  %451 = vmatpush1.msra.mxu0 0.0
  %452 = vmatprep.subr.mxu0 0.0
  %453 = vmatpush1.msra.mxu0 0.0
  %454 = vmatprep.subr.mxu0 0.0
  %455 = vmatpush1.msra.mxu0 0.0
  %456 = vmatprep.subr.mxu0 0.0
  %457 = vmatpush1.msra.mxu0 0.0
  %458 = vmatprep.subr.mxu0 0.0
  %459 = vmatpush1.msra.mxu0 0.0
  %460 = vmatprep.subr.mxu0 0.0
  %461 = vmatpush1.msra.mxu0 0.0
  %462 = vmatprep.subr.mxu0 0.0
  %463 = vmatpush1.msra.mxu0 0.0
  %464 = vmatprep.subr.mxu0 0.0
  %465 = vmatpush1.msra.mxu0 0.0
  %466 = vmatprep.mubr.f32.mxu0 0.0
  %467 = vmatmul.mubr.f32.gmra.mrb[0].mxu0 %v395
  %v468 = vpop.f32.mrb[0].mxu0
  %v469 = vadd.f32 %v51, %v468
  %v470 = vpop.f32.mrb[0].mxu0
  %471 = vmatprep.mubr.f32.mxu0 0.0
  %472 = vmatmul.mubr.f32.gmra.mrb[0].mxu0 %v396
  %v473 = vpop.f32.mrb[0].mxu0
  %v474 = vadd.f32 %v51, %v473
  %v475 = vpop.f32.mrb[0].mxu0
  %476 = vmatprep.mubr.f32.mxu0 0.0
  %477 = vmatmul.mubr.f32.gmra.mrb[0].mxu0 %v397
  %v478 = vpop.f32.mrb[0].mxu0
  %v479 = vadd.f32 %v51, %v478
  %v480 = vpop.f32.mrb[0].mxu0
  %481 = vmatprep.mubr.f32.mxu0 0.0
  %482 = vmatmul.mubr.f32.gmra.mrb[0].mxu0 %v398
  %v483 = vpop.f32.mrb[0].mxu0
  %v484 = vadd.f32 %v51, %v483
  %v485 = vpop.f32.mrb[0].mxu0
  %486 = vmatprep.mubr.f32.mxu0 0.0
  %487 = vmatmul.mubr.f32.gmra.mrb[0].mxu0 %v399
  %v488 = vpop.f32.mrb[0].mxu0
  %v489 = vadd.f32 %v51, %v488
  %v490 = vpop.f32.mrb[0].mxu0
  %491 = vmatprep.mubr.f32.mxu0 0.0
  %492 = vmatmul.mubr.f32.gmra.mrb[0].mxu0 %v400
  %v493 = vpop.f32.mrb[0].mxu0
  %v494 = vadd.f32 %v51, %v493
  %v495 = vpop.f32.mrb[0].mxu0
  %496 = vmatprep.mubr.f32.mxu0 0.0
  %497 = vmatmul.mubr.f32.gmra.mrb[0].mxu0 %v401
  %v498 = vpop.f32.mrb[0].mxu0
  %v499 = vadd.f32 %v51, %v498
  %v500 = vpop.f32.mrb[0].mxu0
  %501 = vdwg.mxu0
  %v502 = vmax.f32 %v469, 0.0
  %v503 = vmax.f32 %v474, 0.0
  %v504 = vmax.f32 %v479, 0.0
  %v505 = vmax.f32 %v484, 0.0
  %v506 = vmax.f32 %v489, 0.0
  %v507 = vmax.f32 %v494, 0.0
  %v508 = vmax.f32 %v499, 0.0
  %v509 = vmax.f32 %v388, %v502
  %v510 = vmax.f32 %v389, %v503
  %v511 = vmax.f32 %v390, %v504
  %v512 = vmax.f32 %v391, %v505
  %v513 = vmax.f32 %v392, %v506
  %v514 = vmax.f32 %v393, %v507
  %v515 = vmax.f32 %v394, %v508
  %v516 = vmax.f32 %v274, %v509
  %v517 = vmax.f32 %v275, %v510
  %v518 = vmax.f32 %v276, %v511
  %v519 = vmax.f32 %v277, %v512
  %v520 = vmax.f32 %v278, %v513
  %v521 = vmax.f32 %v279, %v514
  %v522 = vmax.f32 %v280, %v515
  %523 = vst [vmem:[%s6] sm:$0xff] %v516
  %524 = vst [vmem:[%s6 + $0x8] sm:$0xff] %v517
  %525 = vst [vmem:[%s6 + $0x10] sm:$0xff] %v518
  %526 = vst [vmem:[%s6 + $0x18] sm:$0xff] %v519
  %527 = vst [vmem:[%s6 + $0x20] sm:$0xff] %v520
  %528 = vst [vmem:[%s6 + $0x28] sm:$0xff] %v521
  %529 = vst [vmem:[%s6 + $0x30] sm:$0x3] %v522
  // Predicated region
  $region26: #{autoencoder_forward.5} parent=0 // pred_check
    _
  $region27: #{autoencoder_forward.5} parent=0 // pred_check_branch
    %531 = sbr.rel (0) target = $region29
  $region28: #{autoencoder_forward.5} parent=0 // pred_region
    _
  $region29: #{autoencoder_forward.5} parent=0 // pred_fallthru
    _
  // Predicated region
  $region30: #{autoencoder_forward.5} parent=0 // pred_check
    _
  $region31: #{autoencoder_forward.5} parent=0 // pred_check_branch
    %533 = sbr.rel (0) target = $region33
  $region32: #{autoencoder_forward.5} parent=0 // pred_region
    _
  $region33: #{autoencoder_forward.5} parent=0 // pred_fallthru
    _

// kernel: autoencoder_forward.6
$region0: #{autoencoder_forward.6}
  #allocation0 [shape = 'u32[]', space=smem, size = 0x4, offset = 0x4, fixed_abs, tag = 'smem constant byte address 0x4 - core index']
  #allocation1 [shape = 'u32[144,128]{1,0:T(1,128)}', space=vmem, size = 0x12000, scoped, tag = 'internal scratch']
  %s0 = inlined_call_operand.vmem [shape: f32[8,256], index: 0, kind: input, shape index: {}]
  %s1 = inlined_call_operand.vmem [shape: f32[8,256], index: 1, kind: input, shape index: {}]
  %s2 = inlined_call_operand.vmem [shape: f32[8,256], index: 2, kind: input, shape index: {}]
  %s3 = inlined_call_operand.vmem [shape: f32[8,256], index: 3, kind: input, shape index: {}]
  %s4 = inlined_call_operand.vmem [shape: f32[256,128], index: 4, kind: input, shape index: {}]
  %s5 = inlined_call_operand.vmem [shape: f32[1,128], index: 5, kind: input, shape index: {}]
  %s6 = inlined_call_operand.vmem [shape: f32[8,128], index: 6, kind: output, shape index: {}]
  %s7 = sld [smem:[#allocation0]]
  $region34: #{autoencoder_forward.6} parent=0
    _
  %s9 = ssub.s32 1, %s7
  %s10 = scalar_select 0, %s9, %s7
  // Predicated region
  $region2: #{autoencoder_forward.6} parent=0 // pred_check
    _
  $region3: #{autoencoder_forward.6} parent=0 // pred_check_branch
    %12 = sbr.rel (0) target = $region5
  $region4: #{autoencoder_forward.6} parent=0 // pred_region
    _
  $region5: #{autoencoder_forward.6} parent=0 // pred_fallthru
    _
  // Predicated region
  $region6: #{autoencoder_forward.6} parent=0 // pred_check
    _
  $region7: #{autoencoder_forward.6} parent=0 // pred_check_branch
    %14 = sbr.rel (0) target = $region9
  $region8: #{autoencoder_forward.6} parent=0 // pred_region
    _
  $region9: #{autoencoder_forward.6} parent=0 // pred_fallthru
    _
  // Predicated region
  $region10: #{autoencoder_forward.6} parent=0 // pred_check
    _
  $region11: #{autoencoder_forward.6} parent=0 // pred_check_branch
    %16 = sbr.rel (0) target = $region13
  $region12: #{autoencoder_forward.6} parent=0 // pred_region
    _
  $region13: #{autoencoder_forward.6} parent=0 // pred_fallthru
    _
  // Predicated region
  $region14: #{autoencoder_forward.6} parent=0 // pred_check
    _
  $region15: #{autoencoder_forward.6} parent=0 // pred_check_branch
    %18 = sbr.rel (0) target = $region17
  $region16: #{autoencoder_forward.6} parent=0 // pred_region
    _
  $region17: #{autoencoder_forward.6} parent=0 // pred_fallthru
    _
  // Predicated region
  $region18: #{autoencoder_forward.6} parent=0 // pred_check
    _
  $region19: #{autoencoder_forward.6} parent=0 // pred_check_branch
    %20 = sbr.rel (0) target = $region21
  $region20: #{autoencoder_forward.6} parent=0 // pred_region
    _
  $region21: #{autoencoder_forward.6} parent=0 // pred_fallthru
    _
  // Predicated region
  $region22: #{autoencoder_forward.6} parent=0 // pred_check
    _
  $region23: #{autoencoder_forward.6} parent=0 // pred_check_branch
    %22 = sbr.rel (0) target = $region25
  $region24: #{autoencoder_forward.6} parent=0 // pred_region
    _
  $region25: #{autoencoder_forward.6} parent=0 // pred_fallthru
    _
  %v23 = vld [vmem:[%s4] sm:$0xff]
  %v24 = vld [vmem:[%s4 + $0x8] sm:$0xff]
  %v25 = vld [vmem:[%s4 + $0x10] sm:$0xff]
  %v26 = vld [vmem:[%s4 + $0x18] sm:$0xff]
  %v27 = vld [vmem:[%s4 + $0x20] sm:$0xff]
  %v28 = vld [vmem:[%s4 + $0x28] sm:$0xff]
  %v29 = vld [vmem:[%s4 + $0x30] sm:$0xff]
  %v30 = vld [vmem:[%s4 + $0x38] sm:$0xff]
  %v31 = vld [vmem:[%s4 + $0x40] sm:$0xff]
  %v32 = vld [vmem:[%s4 + $0x48] sm:$0xff]
  %v33 = vld [vmem:[%s4 + $0x50] sm:$0xff]
  %v34 = vld [vmem:[%s4 + $0x58] sm:$0xff]
  %v35 = vld [vmem:[%s4 + $0x60] sm:$0xff]
  %v36 = vld [vmem:[%s4 + $0x68] sm:$0xff]
  %v37 = vld [vmem:[%s4 + $0x70] sm:$0xff]
  %v38 = vld [vmem:[%s4 + $0x78] sm:$0xff]
  %v39 = vld [vmem:[%s4 + $0x80] sm:$0xff]
  %v40 = vld [vmem:[%s4 + $0x88] sm:$0xff]
  %v41 = vld [vmem:[%s4 + $0x90] sm:$0xff]
  %v42 = vld [vmem:[%s4 + $0x98] sm:$0xff]
  %v43 = vld [vmem:[%s4 + $0xa0] sm:$0xff]
  %v44 = vld [vmem:[%s4 + $0xa8] sm:$0xff]
  %v45 = vld [vmem:[%s4 + $0xb0] sm:$0xff]
  %v46 = vld [vmem:[%s4 + $0xb8] sm:$0xff]
  %v47 = vld [vmem:[%s4 + $0xc0] sm:$0xff]
  %v48 = vld [vmem:[%s4 + $0xc8] sm:$0xff]
  %v49 = vld [vmem:[%s4 + $0xd0] sm:$0xff]
  %v50 = vld [vmem:[%s4 + $0xd8] sm:$0xff]
  %v51 = vld [vmem:[%s4 + $0xe0] sm:$0xff]
  %v52 = vld [vmem:[%s4 + $0xe8] sm:$0xff]
  %v53 = vld [vmem:[%s4 + $0xf0] sm:$0xff]
  %v54 = vld [vmem:[%s4 + $0xf8] sm:$0xff]
  %v55 = vld [vmem:[%s5] sm:$0x1]
  %v56 = vld [vmem:[%s0] sm:$0xff]
  %v57 = vld [vmem:[%s0 + $0x8] sm:$0xff]
  %v59 = vlaneseq
  %v60 = vshrl.u32 %v59, 7
  %v61 = vsub.s32 0, %v60
  %v62 = vrot.slane %v55, %v61
  %64 = vmatprep.subr.mxu0 0.0
  %65 = vmatpush1.msra.mxu0 %v23
  %66 = vmatprep.subr.mxu0 0.0
  %67 = vmatpush1.msra.mxu0 %v24
  %68 = vmatprep.subr.mxu0 0.0
  %69 = vmatpush1.msra.mxu0 %v25
  %70 = vmatprep.subr.mxu0 0.0
  %71 = vmatpush1.msra.mxu0 %v26
  %72 = vmatprep.subr.mxu0 0.0
  %73 = vmatpush1.msra.mxu0 %v27
  %74 = vmatprep.subr.mxu0 0.0
  %75 = vmatpush1.msra.mxu0 %v28
  %76 = vmatprep.subr.mxu0 0.0
  %77 = vmatpush1.msra.mxu0 %v29
  %78 = vmatprep.subr.mxu0 0.0
  %79 = vmatpush1.msra.mxu0 %v30
  %80 = vmatprep.subr.mxu0 0.0
  %81 = vmatpush1.msra.mxu0 %v31
  %82 = vmatprep.subr.mxu0 0.0
  %83 = vmatpush1.msra.mxu0 %v32
  %84 = vmatprep.subr.mxu0 0.0
  %85 = vmatpush1.msra.mxu0 %v33
  %86 = vmatprep.subr.mxu0 0.0
  %87 = vmatpush1.msra.mxu0 %v34
  %88 = vmatprep.subr.mxu0 0.0
  %89 = vmatpush1.msra.mxu0 %v35
  %90 = vmatprep.subr.mxu0 0.0
  %91 = vmatpush1.msra.mxu0 %v36
  %92 = vmatprep.subr.mxu0 0.0
  %93 = vmatpush1.msra.mxu0 %v37
  %94 = vmatprep.subr.mxu0 0.0
  %95 = vmatpush1.msra.mxu0 %v38
  %96 = vmatprep.subr.mxu0 0.0
  %97 = vmatpush1.msra.mxu0 %v39
  %98 = vmatprep.subr.mxu0 0.0
  %99 = vmatpush1.msra.mxu0 %v40
  %100 = vmatprep.subr.mxu0 0.0
  %101 = vmatpush1.msra.mxu0 %v41
  %102 = vmatprep.subr.mxu0 0.0
  %103 = vmatpush1.msra.mxu0 %v42
  %104 = vmatprep.subr.mxu0 0.0
  %105 = vmatpush1.msra.mxu0 %v43
  %106 = vmatprep.subr.mxu0 0.0
  %107 = vmatpush1.msra.mxu0 %v44
  %108 = vmatprep.subr.mxu0 0.0
  %109 = vmatpush1.msra.mxu0 %v45
  %110 = vmatprep.subr.mxu0 0.0
  %111 = vmatpush1.msra.mxu0 %v46
  %112 = vmatprep.subr.mxu0 0.0
  %113 = vmatpush1.msra.mxu0 %v47
  %114 = vmatprep.subr.mxu0 0.0
  %115 = vmatpush1.msra.mxu0 %v48
  %116 = vmatprep.subr.mxu0 0.0
  %117 = vmatpush1.msra.mxu0 %v49
  %118 = vmatprep.subr.mxu0 0.0
  %119 = vmatpush1.msra.mxu0 %v50
  %120 = vmatprep.subr.mxu0 0.0
  %121 = vmatpush1.msra.mxu0 %v51
  %122 = vmatprep.subr.mxu0 0.0
  %123 = vmatpush1.msra.mxu0 %v52
  %124 = vmatprep.subr.mxu0 0.0
  %125 = vmatpush1.msra.mxu0 %v53
  %126 = vmatprep.subr.mxu0 0.0
  %127 = vmatpush1.msra.mxu0 %v54
  %128 = vmatprep.mubr.f32.mxu0 %v57
  %129 = vmatmul.mubr.f32.gmra.mrb[0].mxu0 %v56
  %v130 = vpop.f32.mrb[0].mxu0
  %v131 = vadd.f32 %v62, %v130
  %v132 = vpop.f32.mrb[0].mxu0
  %133 = vdwg.mxu0
  %v134 = vmax.f32 %v131, 0.0
  %v135 = vld [vmem:[%s1] sm:$0xff]
  %v136 = vld [vmem:[%s1 + $0x8] sm:$0xff]
  %137 = vmatprep.subr.mxu0 0.0
  %138 = vmatpush1.msra.mxu0 %v23
  %139 = vmatprep.subr.mxu0 0.0
  %140 = vmatpush1.msra.mxu0 %v24
  %141 = vmatprep.subr.mxu0 0.0
  %142 = vmatpush1.msra.mxu0 %v25
  %143 = vmatprep.subr.mxu0 0.0
  %144 = vmatpush1.msra.mxu0 %v26
  %145 = vmatprep.subr.mxu0 0.0
  %146 = vmatpush1.msra.mxu0 %v27
  %147 = vmatprep.subr.mxu0 0.0
  %148 = vmatpush1.msra.mxu0 %v28
  %149 = vmatprep.subr.mxu0 0.0
  %150 = vmatpush1.msra.mxu0 %v29
  %151 = vmatprep.subr.mxu0 0.0
  %152 = vmatpush1.msra.mxu0 %v30
  %153 = vmatprep.subr.mxu0 0.0
  %154 = vmatpush1.msra.mxu0 %v31
  %155 = vmatprep.subr.mxu0 0.0
  %156 = vmatpush1.msra.mxu0 %v32
  %157 = vmatprep.subr.mxu0 0.0
  %158 = vmatpush1.msra.mxu0 %v33
  %159 = vmatprep.subr.mxu0 0.0
  %160 = vmatpush1.msra.mxu0 %v34
  %161 = vmatprep.subr.mxu0 0.0
  %162 = vmatpush1.msra.mxu0 %v35
  %163 = vmatprep.subr.mxu0 0.0
  %164 = vmatpush1.msra.mxu0 %v36
  %165 = vmatprep.subr.mxu0 0.0
  %166 = vmatpush1.msra.mxu0 %v37
  %167 = vmatprep.subr.mxu0 0.0
  %168 = vmatpush1.msra.mxu0 %v38
  %169 = vmatprep.subr.mxu0 0.0
  %170 = vmatpush1.msra.mxu0 %v39
  %171 = vmatprep.subr.mxu0 0.0
  %172 = vmatpush1.msra.mxu0 %v40
  %173 = vmatprep.subr.mxu0 0.0
  %174 = vmatpush1.msra.mxu0 %v41
  %175 = vmatprep.subr.mxu0 0.0
  %176 = vmatpush1.msra.mxu0 %v42
  %177 = vmatprep.subr.mxu0 0.0
  %178 = vmatpush1.msra.mxu0 %v43
  %179 = vmatprep.subr.mxu0 0.0
  %180 = vmatpush1.msra.mxu0 %v44
  %181 = vmatprep.subr.mxu0 0.0
  %182 = vmatpush1.msra.mxu0 %v45
  %183 = vmatprep.subr.mxu0 0.0
  %184 = vmatpush1.msra.mxu0 %v46
  %185 = vmatprep.subr.mxu0 0.0
  %186 = vmatpush1.msra.mxu0 %v47
  %187 = vmatprep.subr.mxu0 0.0
  %188 = vmatpush1.msra.mxu0 %v48
  %189 = vmatprep.subr.mxu0 0.0
  %190 = vmatpush1.msra.mxu0 %v49
  %191 = vmatprep.subr.mxu0 0.0
  %192 = vmatpush1.msra.mxu0 %v50
  %193 = vmatprep.subr.mxu0 0.0
  %194 = vmatpush1.msra.mxu0 %v51
  %195 = vmatprep.subr.mxu0 0.0
  %196 = vmatpush1.msra.mxu0 %v52
  %197 = vmatprep.subr.mxu0 0.0
  %198 = vmatpush1.msra.mxu0 %v53
  %199 = vmatprep.subr.mxu0 0.0
  %200 = vmatpush1.msra.mxu0 %v54
  %201 = vmatprep.mubr.f32.mxu0 %v136
  %202 = vmatmul.mubr.f32.gmra.mrb[0].mxu0 %v135
  %v203 = vpop.f32.mrb[0].mxu0
  %v204 = vadd.f32 %v62, %v203
  %v205 = vpop.f32.mrb[0].mxu0
  %206 = vdwg.mxu0
  %v207 = vmax.f32 %v204, 0.0
  %v208 = vmax.f32 %v134, %v207
  %v209 = vld [vmem:[%s2] sm:$0xff]
  %v210 = vld [vmem:[%s2 + $0x8] sm:$0xff]
  %211 = vmatprep.subr.mxu0 0.0
  %212 = vmatpush1.msra.mxu0 %v23
  %213 = vmatprep.subr.mxu0 0.0
  %214 = vmatpush1.msra.mxu0 %v24
  %215 = vmatprep.subr.mxu0 0.0
  %216 = vmatpush1.msra.mxu0 %v25
  %217 = vmatprep.subr.mxu0 0.0
  %218 = vmatpush1.msra.mxu0 %v26
  %219 = vmatprep.subr.mxu0 0.0
  %220 = vmatpush1.msra.mxu0 %v27
  %221 = vmatprep.subr.mxu0 0.0
  %222 = vmatpush1.msra.mxu0 %v28
  %223 = vmatprep.subr.mxu0 0.0
  %224 = vmatpush1.msra.mxu0 %v29
  %225 = vmatprep.subr.mxu0 0.0
  %226 = vmatpush1.msra.mxu0 %v30
  %227 = vmatprep.subr.mxu0 0.0
  %228 = vmatpush1.msra.mxu0 %v31
  %229 = vmatprep.subr.mxu0 0.0
  %230 = vmatpush1.msra.mxu0 %v32
  %231 = vmatprep.subr.mxu0 0.0
  %232 = vmatpush1.msra.mxu0 %v33
  %233 = vmatprep.subr.mxu0 0.0
  %234 = vmatpush1.msra.mxu0 %v34
  %235 = vmatprep.subr.mxu0 0.0
  %236 = vmatpush1.msra.mxu0 %v35
  %237 = vmatprep.subr.mxu0 0.0
  %238 = vmatpush1.msra.mxu0 %v36
  %239 = vmatprep.subr.mxu0 0.0
  %240 = vmatpush1.msra.mxu0 %v37
  %241 = vmatprep.subr.mxu0 0.0
  %242 = vmatpush1.msra.mxu0 %v38
  %243 = vmatprep.subr.mxu0 0.0
  %244 = vmatpush1.msra.mxu0 %v39
  %245 = vmatprep.subr.mxu0 0.0
  %246 = vmatpush1.msra.mxu0 %v40
  %247 = vmatprep.subr.mxu0 0.0
  %248 = vmatpush1.msra.mxu0 %v41
  %249 = vmatprep.subr.mxu0 0.0
  %250 = vmatpush1.msra.mxu0 %v42
  %251 = vmatprep.subr.mxu0 0.0
  %252 = vmatpush1.msra.mxu0 %v43
  %253 = vmatprep.subr.mxu0 0.0
  %254 = vmatpush1.msra.mxu0 %v44
  %255 = vmatprep.subr.mxu0 0.0
  %256 = vmatpush1.msra.mxu0 %v45
  %257 = vmatprep.subr.mxu0 0.0
  %258 = vmatpush1.msra.mxu0 %v46
  %259 = vmatprep.subr.mxu0 0.0
  %260 = vmatpush1.msra.mxu0 %v47
  %261 = vmatprep.subr.mxu0 0.0
  %262 = vmatpush1.msra.mxu0 %v48
  %263 = vmatprep.subr.mxu0 0.0
  %264 = vmatpush1.msra.mxu0 %v49
  %265 = vmatprep.subr.mxu0 0.0
  %266 = vmatpush1.msra.mxu0 %v50
  %267 = vmatprep.subr.mxu0 0.0
  %268 = vmatpush1.msra.mxu0 %v51
  %269 = vmatprep.subr.mxu0 0.0
  %270 = vmatpush1.msra.mxu0 %v52
  %271 = vmatprep.subr.mxu0 0.0
  %272 = vmatpush1.msra.mxu0 %v53
  %273 = vmatprep.subr.mxu0 0.0
  %274 = vmatpush1.msra.mxu0 %v54
  %275 = vmatprep.mubr.f32.mxu0 %v210
  %276 = vmatmul.mubr.f32.gmra.mrb[0].mxu0 %v209
  %v277 = vpop.f32.mrb[0].mxu0
  %v278 = vadd.f32 %v62, %v277
  %v279 = vpop.f32.mrb[0].mxu0
  %280 = vdwg.mxu0
  %v281 = vmax.f32 %v278, 0.0
  %v282 = vld [vmem:[%s3] sm:$0xff]
  %v283 = vld [vmem:[%s3 + $0x8] sm:$0xff]
  %284 = vmatprep.subr.mxu0 0.0
  %285 = vmatpush1.msra.mxu0 %v23
  %286 = vmatprep.subr.mxu0 0.0
  %287 = vmatpush1.msra.mxu0 %v24
  %288 = vmatprep.subr.mxu0 0.0
  %289 = vmatpush1.msra.mxu0 %v25
  %290 = vmatprep.subr.mxu0 0.0
  %291 = vmatpush1.msra.mxu0 %v26
  %292 = vmatprep.subr.mxu0 0.0
  %293 = vmatpush1.msra.mxu0 %v27
  %294 = vmatprep.subr.mxu0 0.0
  %295 = vmatpush1.msra.mxu0 %v28
  %296 = vmatprep.subr.mxu0 0.0
  %297 = vmatpush1.msra.mxu0 %v29
  %298 = vmatprep.subr.mxu0 0.0
  %299 = vmatpush1.msra.mxu0 %v30
  %300 = vmatprep.subr.mxu0 0.0
  %301 = vmatpush1.msra.mxu0 %v31
  %302 = vmatprep.subr.mxu0 0.0
  %303 = vmatpush1.msra.mxu0 %v32
  %304 = vmatprep.subr.mxu0 0.0
  %305 = vmatpush1.msra.mxu0 %v33
  %306 = vmatprep.subr.mxu0 0.0
  %307 = vmatpush1.msra.mxu0 %v34
  %308 = vmatprep.subr.mxu0 0.0
  %309 = vmatpush1.msra.mxu0 %v35
  %310 = vmatprep.subr.mxu0 0.0
  %311 = vmatpush1.msra.mxu0 %v36
  %312 = vmatprep.subr.mxu0 0.0
  %313 = vmatpush1.msra.mxu0 %v37
  %314 = vmatprep.subr.mxu0 0.0
  %315 = vmatpush1.msra.mxu0 %v38
  %316 = vmatprep.subr.mxu0 0.0
  %317 = vmatpush1.msra.mxu0 %v39
  %318 = vmatprep.subr.mxu0 0.0
  %319 = vmatpush1.msra.mxu0 %v40
  %320 = vmatprep.subr.mxu0 0.0
  %321 = vmatpush1.msra.mxu0 %v41
  %322 = vmatprep.subr.mxu0 0.0
  %323 = vmatpush1.msra.mxu0 %v42
  %324 = vmatprep.subr.mxu0 0.0
  %325 = vmatpush1.msra.mxu0 %v43
  %326 = vmatprep.subr.mxu0 0.0
  %327 = vmatpush1.msra.mxu0 %v44
  %328 = vmatprep.subr.mxu0 0.0
  %329 = vmatpush1.msra.mxu0 %v45
  %330 = vmatprep.subr.mxu0 0.0
  %331 = vmatpush1.msra.mxu0 %v46
  %332 = vmatprep.subr.mxu0 0.0
  %333 = vmatpush1.msra.mxu0 %v47
  %334 = vmatprep.subr.mxu0 0.0
  %335 = vmatpush1.msra.mxu0 %v48
  %336 = vmatprep.subr.mxu0 0.0
  %337 = vmatpush1.msra.mxu0 %v49
  %338 = vmatprep.subr.mxu0 0.0
  %339 = vmatpush1.msra.mxu0 %v50
  %340 = vmatprep.subr.mxu0 0.0
  %341 = vmatpush1.msra.mxu0 %v51
  %342 = vmatprep.subr.mxu0 0.0
  %343 = vmatpush1.msra.mxu0 %v52
  %344 = vmatprep.subr.mxu0 0.0
  %345 = vmatpush1.msra.mxu0 %v53
  %346 = vmatprep.subr.mxu0 0.0
  %347 = vmatpush1.msra.mxu0 %v54
  %348 = vmatprep.mubr.f32.mxu0 %v283
  %349 = vmatmul.mubr.f32.gmra.mrb[0].mxu0 %v282
  %v350 = vpop.f32.mrb[0].mxu0
  %v351 = vadd.f32 %v62, %v350
  %v352 = vpop.f32.mrb[0].mxu0
  %353 = vdwg.mxu0
  %v354 = vmax.f32 %v351, 0.0
  %v355 = vmax.f32 %v281, %v354
  %v356 = vmax.f32 %v208, %v355
  %357 = vst [vmem:[%s6] sm:$0xff] %v356
  // Predicated region
  $region26: #{autoencoder_forward.6} parent=0 // pred_check
    _
  $region27: #{autoencoder_forward.6} parent=0 // pred_check_branch
    %359 = sbr.rel (0) target = $region29
  $region28: #{autoencoder_forward.6} parent=0 // pred_region
    _
  $region29: #{autoencoder_forward.6} parent=0 // pred_fallthru
    _
  // Predicated region
  $region30: #{autoencoder_forward.6} parent=0 // pred_check
    _
  $region31: #{autoencoder_forward.6} parent=0 // pred_check_branch
    %361 = sbr.rel (0) target = $region33
  $region32: #{autoencoder_forward.6} parent=0 // pred_region
    _
  $region33: #{autoencoder_forward.6} parent=0 // pred_fallthru
    _

// kernel: autoencoder_forward.7
$region0: #{autoencoder_forward.7}
  #allocation0 [shape = 'u32[]', space=smem, size = 0x4, offset = 0x4, fixed_abs, tag = 'smem constant byte address 0x4 - core index']
  #allocation1 [shape = 'u32[144,128]{1,0:T(1,128)}', space=vmem, size = 0x12000, scoped, tag = 'internal scratch']
  %s0 = inlined_call_operand.vmem [shape: f32[50,128], index: 0, kind: input, shape index: {}]
  %s1 = inlined_call_operand.vmem [shape: f32[128,128], index: 1, kind: input, shape index: {}]
  %s2 = inlined_call_operand.vmem [shape: f32[1,128], index: 2, kind: input, shape index: {}]
  %s3 = inlined_call_operand.vmem [shape: f32[50,128], index: 3, kind: output, shape index: {}]
  %s4 = sld [smem:[#allocation0]]
  $region22: #{autoencoder_forward.7} parent=0
    _
  %s6 = ssub.s32 1, %s4
  %s7 = scalar_select 0, %s6, %s4
  // Predicated region
  $region2: #{autoencoder_forward.7} parent=0 // pred_check
    _
  $region3: #{autoencoder_forward.7} parent=0 // pred_check_branch
    %9 = sbr.rel (0) target = $region5
  $region4: #{autoencoder_forward.7} parent=0 // pred_region
    _
  $region5: #{autoencoder_forward.7} parent=0 // pred_fallthru
    _
  // Predicated region
  $region6: #{autoencoder_forward.7} parent=0 // pred_check
    _
  $region7: #{autoencoder_forward.7} parent=0 // pred_check_branch
    %11 = sbr.rel (0) target = $region9
  $region8: #{autoencoder_forward.7} parent=0 // pred_region
    _
  $region9: #{autoencoder_forward.7} parent=0 // pred_fallthru
    _
  // Predicated region
  $region10: #{autoencoder_forward.7} parent=0 // pred_check
    _
  $region11: #{autoencoder_forward.7} parent=0 // pred_check_branch
    %13 = sbr.rel (0) target = $region13
  $region12: #{autoencoder_forward.7} parent=0 // pred_region
    _
  $region13: #{autoencoder_forward.7} parent=0 // pred_fallthru
    _
  %v14 = vld [vmem:[%s0] sm:$0xff]
  %v15 = vld [vmem:[%s0 + $0x8] sm:$0xff]
  %v16 = vld [vmem:[%s0 + $0x10] sm:$0xff]
  %v17 = vld [vmem:[%s0 + $0x18] sm:$0xff]
  %v18 = vld [vmem:[%s0 + $0x20] sm:$0xff]
  %v19 = vld [vmem:[%s0 + $0x28] sm:$0xff]
  %v20 = vld [vmem:[%s0 + $0x30] sm:$0x3]
  %v21 = vld [vmem:[%s1] sm:$0xff]
  %v22 = vld [vmem:[%s1 + $0x8] sm:$0xff]
  %v23 = vld [vmem:[%s1 + $0x10] sm:$0xff]
  %v24 = vld [vmem:[%s1 + $0x18] sm:$0xff]
  %v25 = vld [vmem:[%s1 + $0x20] sm:$0xff]
  %v26 = vld [vmem:[%s1 + $0x28] sm:$0xff]
  %v27 = vld [vmem:[%s1 + $0x30] sm:$0xff]
  %v28 = vld [vmem:[%s1 + $0x38] sm:$0xff]
  %v29 = vld [vmem:[%s1 + $0x40] sm:$0xff]
  %v30 = vld [vmem:[%s1 + $0x48] sm:$0xff]
  %v31 = vld [vmem:[%s1 + $0x50] sm:$0xff]
  %v32 = vld [vmem:[%s1 + $0x58] sm:$0xff]
  %v33 = vld [vmem:[%s1 + $0x60] sm:$0xff]
  %v34 = vld [vmem:[%s1 + $0x68] sm:$0xff]
  %v35 = vld [vmem:[%s1 + $0x70] sm:$0xff]
  %v36 = vld [vmem:[%s1 + $0x78] sm:$0xff]
  %v37 = vld [vmem:[%s2] sm:$0x1]
  %v39 = vlaneseq
  %v40 = vshrl.u32 %v39, 7
  %v41 = vsub.s32 0, %v40
  %v42 = vrot.slane %v37, %v41
  %44 = vmatprep.subr.mxu0 0.0
  %45 = vmatpush1.msra.mxu0 %v21
  %46 = vmatprep.subr.mxu0 0.0
  %47 = vmatpush1.msra.mxu0 %v22
  %48 = vmatprep.subr.mxu0 0.0
  %49 = vmatpush1.msra.mxu0 %v23
  %50 = vmatprep.subr.mxu0 0.0
  %51 = vmatpush1.msra.mxu0 %v24
  %52 = vmatprep.subr.mxu0 0.0
  %53 = vmatpush1.msra.mxu0 %v25
  %54 = vmatprep.subr.mxu0 0.0
  %55 = vmatpush1.msra.mxu0 %v26
  %56 = vmatprep.subr.mxu0 0.0
  %57 = vmatpush1.msra.mxu0 %v27
  %58 = vmatprep.subr.mxu0 0.0
  %59 = vmatpush1.msra.mxu0 %v28
  %60 = vmatprep.subr.mxu0 0.0
  %61 = vmatpush1.msra.mxu0 %v29
  %62 = vmatprep.subr.mxu0 0.0
  %63 = vmatpush1.msra.mxu0 %v30
  %64 = vmatprep.subr.mxu0 0.0
  %65 = vmatpush1.msra.mxu0 %v31
  %66 = vmatprep.subr.mxu0 0.0
  %67 = vmatpush1.msra.mxu0 %v32
  %68 = vmatprep.subr.mxu0 0.0
  %69 = vmatpush1.msra.mxu0 %v33
  %70 = vmatprep.subr.mxu0 0.0
  %71 = vmatpush1.msra.mxu0 %v34
  %72 = vmatprep.subr.mxu0 0.0
  %73 = vmatpush1.msra.mxu0 %v35
  %74 = vmatprep.subr.mxu0 0.0
  %75 = vmatpush1.msra.mxu0 %v36
  %76 = vmatprep.subr.mxu0 0.0
  %77 = vmatpush1.msra.mxu0 0.0
  %78 = vmatprep.subr.mxu0 0.0
  %79 = vmatpush1.msra.mxu0 0.0
  %80 = vmatprep.subr.mxu0 0.0
  %81 = vmatpush1.msra.mxu0 0.0
  %82 = vmatprep.subr.mxu0 0.0
  %83 = vmatpush1.msra.mxu0 0.0
  %84 = vmatprep.subr.mxu0 0.0
  %85 = vmatpush1.msra.mxu0 0.0
  %86 = vmatprep.subr.mxu0 0.0
  %87 = vmatpush1.msra.mxu0 0.0
  %88 = vmatprep.subr.mxu0 0.0
  %89 = vmatpush1.msra.mxu0 0.0
  %90 = vmatprep.subr.mxu0 0.0
  %91 = vmatpush1.msra.mxu0 0.0
  %92 = vmatprep.subr.mxu0 0.0
  %93 = vmatpush1.msra.mxu0 0.0
  %94 = vmatprep.subr.mxu0 0.0
  %95 = vmatpush1.msra.mxu0 0.0
  %96 = vmatprep.subr.mxu0 0.0
  %97 = vmatpush1.msra.mxu0 0.0
  %98 = vmatprep.subr.mxu0 0.0
  %99 = vmatpush1.msra.mxu0 0.0
  %100 = vmatprep.subr.mxu0 0.0
  %101 = vmatpush1.msra.mxu0 0.0
  %102 = vmatprep.subr.mxu0 0.0
  %103 = vmatpush1.msra.mxu0 0.0
  %104 = vmatprep.subr.mxu0 0.0
  %105 = vmatpush1.msra.mxu0 0.0
  %106 = vmatprep.subr.mxu0 0.0
  %107 = vmatpush1.msra.mxu0 0.0
  %108 = vmatprep.mubr.f32.mxu0 0.0
  %109 = vmatmul.mubr.f32.gmra.mrb[0].mxu0 %v14
  %v110 = vpop.f32.mrb[0].mxu0
  %v111 = vadd.f32 %v42, %v110
  %v112 = vpop.f32.mrb[0].mxu0
  %113 = vmatprep.mubr.f32.mxu0 0.0
  %114 = vmatmul.mubr.f32.gmra.mrb[0].mxu0 %v15
  %v115 = vpop.f32.mrb[0].mxu0
  %v116 = vadd.f32 %v42, %v115
  %v117 = vpop.f32.mrb[0].mxu0
  %118 = vmatprep.mubr.f32.mxu0 0.0
  %119 = vmatmul.mubr.f32.gmra.mrb[0].mxu0 %v16
  %v120 = vpop.f32.mrb[0].mxu0
  %v121 = vadd.f32 %v42, %v120
  %v122 = vpop.f32.mrb[0].mxu0
  %123 = vmatprep.mubr.f32.mxu0 0.0
  %124 = vmatmul.mubr.f32.gmra.mrb[0].mxu0 %v17
  %v125 = vpop.f32.mrb[0].mxu0
  %v126 = vadd.f32 %v42, %v125
  %v127 = vpop.f32.mrb[0].mxu0
  %128 = vmatprep.mubr.f32.mxu0 0.0
  %129 = vmatmul.mubr.f32.gmra.mrb[0].mxu0 %v18
  %v130 = vpop.f32.mrb[0].mxu0
  %v131 = vadd.f32 %v42, %v130
  %v132 = vpop.f32.mrb[0].mxu0
  %133 = vmatprep.mubr.f32.mxu0 0.0
  %134 = vmatmul.mubr.f32.gmra.mrb[0].mxu0 %v19
  %v135 = vpop.f32.mrb[0].mxu0
  %v136 = vadd.f32 %v42, %v135
  %v137 = vpop.f32.mrb[0].mxu0
  %138 = vmatprep.mubr.f32.mxu0 0.0
  %139 = vmatmul.mubr.f32.gmra.mrb[0].mxu0 %v20
  %v140 = vpop.f32.mrb[0].mxu0
  %v141 = vadd.f32 %v42, %v140
  %v142 = vpop.f32.mrb[0].mxu0
  %143 = vdwg.mxu0
  %v144 = vmax.f32 %v111, 0.0
  %v145 = vmax.f32 %v116, 0.0
  %v146 = vmax.f32 %v121, 0.0
  %v147 = vmax.f32 %v126, 0.0
  %v148 = vmax.f32 %v131, 0.0
  %v149 = vmax.f32 %v136, 0.0
  %v150 = vmax.f32 %v141, 0.0
  %151 = vst [vmem:[%s3] sm:$0xff] %v144
  %152 = vst [vmem:[%s3 + $0x8] sm:$0xff] %v145
  %153 = vst [vmem:[%s3 + $0x10] sm:$0xff] %v146
  %154 = vst [vmem:[%s3 + $0x18] sm:$0xff] %v147
  %155 = vst [vmem:[%s3 + $0x20] sm:$0xff] %v148
  %156 = vst [vmem:[%s3 + $0x28] sm:$0xff] %v149
  %157 = vst [vmem:[%s3 + $0x30] sm:$0x3] %v150
  // Predicated region
  $region14: #{autoencoder_forward.7} parent=0 // pred_check
    _
  $region15: #{autoencoder_forward.7} parent=0 // pred_check_branch
    %159 = sbr.rel (0) target = $region17
  $region16: #{autoencoder_forward.7} parent=0 // pred_region
    _
  $region17: #{autoencoder_forward.7} parent=0 // pred_fallthru
    _
  // Predicated region
  $region18: #{autoencoder_forward.7} parent=0 // pred_check
    _
  $region19: #{autoencoder_forward.7} parent=0 // pred_check_branch
    %161 = sbr.rel (0) target = $region21
  $region20: #{autoencoder_forward.7} parent=0 // pred_region
    _
  $region21: #{autoencoder_forward.7} parent=0 // pred_fallthru
    _

// kernel: autoencoder_forward.8
$region0: #{autoencoder_forward.8}
  #allocation0 [shape = 'u32[]', space=smem, size = 0x4, offset = 0x4, fixed_abs, tag = 'smem constant byte address 0x4 - core index']
  #allocation1 [shape = 'u32[144,128]{1,0:T(1,128)}', space=vmem, size = 0x12000, scoped, tag = 'internal scratch']
  %s0 = inlined_call_operand.vmem [shape: f32[450,512], index: 0, kind: input, shape index: {}]
  %s1 = inlined_call_operand.vmem [shape: f32[512,128], index: 1, kind: input, shape index: {}]
  %s2 = inlined_call_operand.vmem [shape: f32[1,128], index: 2, kind: input, shape index: {}]
  %s3 = inlined_call_operand.vmem [shape: f32[450,128], index: 3, kind: output, shape index: {}]
  %s4 = sld [smem:[#allocation0]]
  $region22: #{autoencoder_forward.8} parent=0
    _
  %s6 = ssub.s32 1, %s4
  %s7 = scalar_select 0, %s6, %s4
  // Predicated region
  $region2: #{autoencoder_forward.8} parent=0 // pred_check
    _
  $region3: #{autoencoder_forward.8} parent=0 // pred_check_branch
    %9 = sbr.rel (0) target = $region5
  $region4: #{autoencoder_forward.8} parent=0 // pred_region
    _
  $region5: #{autoencoder_forward.8} parent=0 // pred_fallthru
    _
  // Predicated region
  $region6: #{autoencoder_forward.8} parent=0 // pred_check
    _
  $region7: #{autoencoder_forward.8} parent=0 // pred_check_branch
    %11 = sbr.rel (0) target = $region9
  $region8: #{autoencoder_forward.8} parent=0 // pred_region
    _
  $region9: #{autoencoder_forward.8} parent=0 // pred_fallthru
    _
  // Predicated region
  $region10: #{autoencoder_forward.8} parent=0 // pred_check
    _
  $region11: #{autoencoder_forward.8} parent=0 // pred_check_branch
    %13 = sbr.rel (0) target = $region13
  $region12: #{autoencoder_forward.8} parent=0 // pred_region
    _
  $region13: #{autoencoder_forward.8} parent=0 // pred_fallthru
    _
  %v14 = vld [vmem:[%s0] sm:$0xff]
  %v15 = vld [vmem:[%s0 + $0x8] sm:$0xff]
  %v16 = vld [vmem:[%s0 + $0x10] sm:$0xff]
  %v17 = vld [vmem:[%s0 + $0x18] sm:$0xff]
  %v18 = vld [vmem:[%s0 + $0x20] sm:$0xff]
  %v19 = vld [vmem:[%s0 + $0x28] sm:$0xff]
  %v20 = vld [vmem:[%s0 + $0x30] sm:$0xff]
  %v21 = vld [vmem:[%s0 + $0x38] sm:$0xff]
  %v22 = vld [vmem:[%s0 + $0x40] sm:$0xff]
  %v23 = vld [vmem:[%s0 + $0x48] sm:$0xff]
  %v24 = vld [vmem:[%s0 + $0x50] sm:$0xff]
  %v25 = vld [vmem:[%s0 + $0x58] sm:$0xff]
  %v26 = vld [vmem:[%s0 + $0x60] sm:$0xff]
  %v27 = vld [vmem:[%s0 + $0x68] sm:$0xff]
  %v28 = vld [vmem:[%s0 + $0x70] sm:$0xff]
  %v29 = vld [vmem:[%s0 + $0x78] sm:$0xff]
  %v30 = vld [vmem:[%s0 + $0x80] sm:$0xff]
  %v31 = vld [vmem:[%s0 + $0x88] sm:$0xff]
  %v32 = vld [vmem:[%s0 + $0x90] sm:$0xff]
  %v33 = vld [vmem:[%s0 + $0x98] sm:$0xff]
  %v34 = vld [vmem:[%s0 + $0xa0] sm:$0xff]
  %v35 = vld [vmem:[%s0 + $0xa8] sm:$0xff]
  %v36 = vld [vmem:[%s0 + $0xb0] sm:$0xff]
  %v37 = vld [vmem:[%s0 + $0xb8] sm:$0xff]
  %v38 = vld [vmem:[%s0 + $0xc0] sm:$0xff]
  %v39 = vld [vmem:[%s0 + $0xc8] sm:$0xff]
  %v40 = vld [vmem:[%s0 + $0xd0] sm:$0xff]
  %v41 = vld [vmem:[%s0 + $0xd8] sm:$0xff]
  %v42 = vld [vmem:[%s0 + $0xe0] sm:$0xff]
  %v43 = vld [vmem:[%s0 + $0xe8] sm:$0xff]
  %v44 = vld [vmem:[%s0 + $0xf0] sm:$0xff]
  %v45 = vld [vmem:[%s0 + $0xf8] sm:$0xff]
  %v46 = vld [vmem:[%s0 + $0x100] sm:$0xff]
  %v47 = vld [vmem:[%s0 + $0x108] sm:$0xff]
  %v48 = vld [vmem:[%s0 + $0x110] sm:$0xff]
  %v49 = vld [vmem:[%s0 + $0x118] sm:$0xff]
  %v50 = vld [vmem:[%s0 + $0x120] sm:$0xff]
  %v51 = vld [vmem:[%s0 + $0x128] sm:$0xff]
  %v52 = vld [vmem:[%s0 + $0x130] sm:$0xff]
  %v53 = vld [vmem:[%s0 + $0x138] sm:$0xff]
  %v54 = vld [vmem:[%s0 + $0x140] sm:$0xff]
  %v55 = vld [vmem:[%s0 + $0x148] sm:$0xff]
  %v56 = vld [vmem:[%s0 + $0x150] sm:$0xff]
  %v57 = vld [vmem:[%s0 + $0x158] sm:$0xff]
  %v58 = vld [vmem:[%s0 + $0x160] sm:$0xff]
  %v59 = vld [vmem:[%s0 + $0x168] sm:$0xff]
  %v60 = vld [vmem:[%s0 + $0x170] sm:$0xff]
  %v61 = vld [vmem:[%s0 + $0x178] sm:$0xff]
  %v62 = vld [vmem:[%s0 + $0x180] sm:$0xff]
  %v63 = vld [vmem:[%s0 + $0x188] sm:$0xff]
  %v64 = vld [vmem:[%s0 + $0x190] sm:$0xff]
  %v65 = vld [vmem:[%s0 + $0x198] sm:$0xff]
  %v66 = vld [vmem:[%s0 + $0x1a0] sm:$0xff]
  %v67 = vld [vmem:[%s0 + $0x1a8] sm:$0xff]
  %v68 = vld [vmem:[%s0 + $0x1b0] sm:$0xff]
  %v69 = vld [vmem:[%s0 + $0x1b8] sm:$0xff]
  %v70 = vld [vmem:[%s0 + $0x1c0] sm:$0xff]
  %v71 = vld [vmem:[%s0 + $0x1c8] sm:$0xff]
  %v72 = vld [vmem:[%s0 + $0x1d0] sm:$0xff]
  %v73 = vld [vmem:[%s0 + $0x1d8] sm:$0xff]
  %v74 = vld [vmem:[%s0 + $0x1e0] sm:$0xff]
  %v75 = vld [vmem:[%s0 + $0x1e8] sm:$0xff]
  %v76 = vld [vmem:[%s0 + $0x1f0] sm:$0xff]
  %v77 = vld [vmem:[%s0 + $0x1f8] sm:$0xff]
  %v78 = vld [vmem:[%s0 + $0x200] sm:$0xff]
  %v79 = vld [vmem:[%s0 + $0x208] sm:$0xff]
  %v80 = vld [vmem:[%s0 + $0x210] sm:$0xff]
  %v81 = vld [vmem:[%s0 + $0x218] sm:$0xff]
  %v82 = vld [vmem:[%s0 + $0x220] sm:$0xff]
  %v83 = vld [vmem:[%s0 + $0x228] sm:$0xff]
  %v84 = vld [vmem:[%s0 + $0x230] sm:$0xff]
  %v85 = vld [vmem:[%s0 + $0x238] sm:$0xff]
  %v86 = vld [vmem:[%s0 + $0x240] sm:$0xff]
  %v87 = vld [vmem:[%s0 + $0x248] sm:$0xff]
  %v88 = vld [vmem:[%s0 + $0x250] sm:$0xff]
  %v89 = vld [vmem:[%s0 + $0x258] sm:$0xff]
  %v90 = vld [vmem:[%s0 + $0x260] sm:$0xff]
  %v91 = vld [vmem:[%s0 + $0x268] sm:$0xff]
  %v92 = vld [vmem:[%s0 + $0x270] sm:$0xff]
  %v93 = vld [vmem:[%s0 + $0x278] sm:$0xff]
  %v94 = vld [vmem:[%s0 + $0x280] sm:$0xff]
  %v95 = vld [vmem:[%s0 + $0x288] sm:$0xff]
  %v96 = vld [vmem:[%s0 + $0x290] sm:$0xff]
  %v97 = vld [vmem:[%s0 + $0x298] sm:$0xff]
  %v98 = vld [vmem:[%s0 + $0x2a0] sm:$0xff]
  %v99 = vld [vmem:[%s0 + $0x2a8] sm:$0xff]
  %v100 = vld [vmem:[%s0 + $0x2b0] sm:$0xff]
  %v101 = vld [vmem:[%s0 + $0x2b8] sm:$0xff]
  %v102 = vld [vmem:[%s0 + $0x2c0] sm:$0xff]
  %v103 = vld [vmem:[%s0 + $0x2c8] sm:$0xff]
  %v104 = vld [vmem:[%s0 + $0x2d0] sm:$0xff]
  %v105 = vld [vmem:[%s0 + $0x2d8] sm:$0xff]
  %v106 = vld [vmem:[%s0 + $0x2e0] sm:$0xff]
  %v107 = vld [vmem:[%s0 + $0x2e8] sm:$0xff]
  %v108 = vld [vmem:[%s0 + $0x2f0] sm:$0xff]
  %v109 = vld [vmem:[%s0 + $0x2f8] sm:$0xff]
  %v110 = vld [vmem:[%s0 + $0x300] sm:$0xff]
  %v111 = vld [vmem:[%s0 + $0x308] sm:$0xff]
  %v112 = vld [vmem:[%s0 + $0x310] sm:$0xff]
  %v113 = vld [vmem:[%s0 + $0x318] sm:$0xff]
  %v114 = vld [vmem:[%s0 + $0x320] sm:$0xff]
  %v115 = vld [vmem:[%s0 + $0x328] sm:$0xff]
  %v116 = vld [vmem:[%s0 + $0x330] sm:$0xff]
  %v117 = vld [vmem:[%s0 + $0x338] sm:$0xff]
  %v118 = vld [vmem:[%s0 + $0x340] sm:$0xff]
  %v119 = vld [vmem:[%s0 + $0x348] sm:$0xff]
  %v120 = vld [vmem:[%s0 + $0x350] sm:$0xff]
  %v121 = vld [vmem:[%s0 + $0x358] sm:$0xff]
  %v122 = vld [vmem:[%s0 + $0x360] sm:$0xff]
  %v123 = vld [vmem:[%s0 + $0x368] sm:$0xff]
  %v124 = vld [vmem:[%s0 + $0x370] sm:$0xff]
  %v125 = vld [vmem:[%s0 + $0x378] sm:$0xff]
  %v126 = vld [vmem:[%s0 + $0x380] sm:$0xff]
  %v127 = vld [vmem:[%s0 + $0x388] sm:$0xff]
  %v128 = vld [vmem:[%s0 + $0x390] sm:$0xff]
  %v129 = vld [vmem:[%s0 + $0x398] sm:$0xff]
  %v130 = vld [vmem:[%s0 + $0x3a0] sm:$0xff]
  %v131 = vld [vmem:[%s0 + $0x3a8] sm:$0xff]
  %v132 = vld [vmem:[%s0 + $0x3b0] sm:$0xff]
  %v133 = vld [vmem:[%s0 + $0x3b8] sm:$0xff]
  %v134 = vld [vmem:[%s0 + $0x3c0] sm:$0xff]
  %v135 = vld [vmem:[%s0 + $0x3c8] sm:$0xff]
  %v136 = vld [vmem:[%s0 + $0x3d0] sm:$0xff]
  %v137 = vld [vmem:[%s0 + $0x3d8] sm:$0xff]
  %v138 = vld [vmem:[%s0 + $0x3e0] sm:$0xff]
  %v139 = vld [vmem:[%s0 + $0x3e8] sm:$0xff]
  %v140 = vld [vmem:[%s0 + $0x3f0] sm:$0xff]
  %v141 = vld [vmem:[%s0 + $0x3f8] sm:$0xff]
  %v142 = vld [vmem:[%s0 + $0x400] sm:$0xff]
  %v143 = vld [vmem:[%s0 + $0x408] sm:$0xff]
  %v144 = vld [vmem:[%s0 + $0x410] sm:$0xff]
  %v145 = vld [vmem:[%s0 + $0x418] sm:$0xff]
  %v146 = vld [vmem:[%s0 + $0x420] sm:$0xff]
  %v147 = vld [vmem:[%s0 + $0x428] sm:$0xff]
  %v148 = vld [vmem:[%s0 + $0x430] sm:$0xff]
  %v149 = vld [vmem:[%s0 + $0x438] sm:$0xff]
  %v150 = vld [vmem:[%s0 + $0x440] sm:$0xff]
  %v151 = vld [vmem:[%s0 + $0x448] sm:$0xff]
  %v152 = vld [vmem:[%s0 + $0x450] sm:$0xff]
  %v153 = vld [vmem:[%s0 + $0x458] sm:$0xff]
  %v154 = vld [vmem:[%s0 + $0x460] sm:$0xff]
  %v155 = vld [vmem:[%s0 + $0x468] sm:$0xff]
  %v156 = vld [vmem:[%s0 + $0x470] sm:$0xff]
  %v157 = vld [vmem:[%s0 + $0x478] sm:$0xff]
  %v158 = vld [vmem:[%s0 + $0x480] sm:$0xff]
  %v159 = vld [vmem:[%s0 + $0x488] sm:$0xff]
  %v160 = vld [vmem:[%s0 + $0x490] sm:$0xff]
  %v161 = vld [vmem:[%s0 + $0x498] sm:$0xff]
  %v162 = vld [vmem:[%s0 + $0x4a0] sm:$0xff]
  %v163 = vld [vmem:[%s0 + $0x4a8] sm:$0xff]
  %v164 = vld [vmem:[%s0 + $0x4b0] sm:$0xff]
  %v165 = vld [vmem:[%s0 + $0x4b8] sm:$0xff]
  %v166 = vld [vmem:[%s0 + $0x4c0] sm:$0xff]
  %v167 = vld [vmem:[%s0 + $0x4c8] sm:$0xff]
  %v168 = vld [vmem:[%s0 + $0x4d0] sm:$0xff]
  %v169 = vld [vmem:[%s0 + $0x4d8] sm:$0xff]
  %v170 = vld [vmem:[%s0 + $0x4e0] sm:$0xff]
  %v171 = vld [vmem:[%s0 + $0x4e8] sm:$0xff]
  %v172 = vld [vmem:[%s0 + $0x4f0] sm:$0xff]
  %v173 = vld [vmem:[%s0 + $0x4f8] sm:$0xff]
  %v174 = vld [vmem:[%s0 + $0x500] sm:$0xff]
  %v175 = vld [vmem:[%s0 + $0x508] sm:$0xff]
  %v176 = vld [vmem:[%s0 + $0x510] sm:$0xff]
  %v177 = vld [vmem:[%s0 + $0x518] sm:$0xff]
  %v178 = vld [vmem:[%s0 + $0x520] sm:$0xff]
  %v179 = vld [vmem:[%s0 + $0x528] sm:$0xff]
  %v180 = vld [vmem:[%s0 + $0x530] sm:$0xff]
  %v181 = vld [vmem:[%s0 + $0x538] sm:$0xff]
  %v182 = vld [vmem:[%s0 + $0x540] sm:$0xff]
  %v183 = vld [vmem:[%s0 + $0x548] sm:$0xff]
  %v184 = vld [vmem:[%s0 + $0x550] sm:$0xff]
  %v185 = vld [vmem:[%s0 + $0x558] sm:$0xff]
  %v186 = vld [vmem:[%s0 + $0x560] sm:$0xff]
  %v187 = vld [vmem:[%s0 + $0x568] sm:$0xff]
  %v188 = vld [vmem:[%s0 + $0x570] sm:$0xff]
  %v189 = vld [vmem:[%s0 + $0x578] sm:$0xff]
  %v190 = vld [vmem:[%s0 + $0x580] sm:$0xff]
  %v191 = vld [vmem:[%s0 + $0x588] sm:$0xff]
  %v192 = vld [vmem:[%s0 + $0x590] sm:$0xff]
  %v193 = vld [vmem:[%s0 + $0x598] sm:$0xff]
  %v194 = vld [vmem:[%s0 + $0x5a0] sm:$0xff]
  %v195 = vld [vmem:[%s0 + $0x5a8] sm:$0xff]
  %v196 = vld [vmem:[%s0 + $0x5b0] sm:$0xff]
  %v197 = vld [vmem:[%s0 + $0x5b8] sm:$0xff]
  %v198 = vld [vmem:[%s0 + $0x5c0] sm:$0xff]
  %v199 = vld [vmem:[%s0 + $0x5c8] sm:$0xff]
  %v200 = vld [vmem:[%s0 + $0x5d0] sm:$0xff]
  %v201 = vld [vmem:[%s0 + $0x5d8] sm:$0xff]
  %v202 = vld [vmem:[%s0 + $0x5e0] sm:$0xff]
  %v203 = vld [vmem:[%s0 + $0x5e8] sm:$0xff]
  %v204 = vld [vmem:[%s0 + $0x5f0] sm:$0xff]
  %v205 = vld [vmem:[%s0 + $0x5f8] sm:$0xff]
  %v206 = vld [vmem:[%s0 + $0x600] sm:$0xff]
  %v207 = vld [vmem:[%s0 + $0x608] sm:$0xff]
  %v208 = vld [vmem:[%s0 + $0x610] sm:$0xff]
  %v209 = vld [vmem:[%s0 + $0x618] sm:$0xff]
  %v210 = vld [vmem:[%s0 + $0x620] sm:$0xff]
  %v211 = vld [vmem:[%s0 + $0x628] sm:$0xff]
  %v212 = vld [vmem:[%s0 + $0x630] sm:$0xff]
  %v213 = vld [vmem:[%s0 + $0x638] sm:$0xff]
  %v214 = vld [vmem:[%s0 + $0x640] sm:$0xff]
  %v215 = vld [vmem:[%s0 + $0x648] sm:$0xff]
  %v216 = vld [vmem:[%s0 + $0x650] sm:$0xff]
  %v217 = vld [vmem:[%s0 + $0x658] sm:$0xff]
  %v218 = vld [vmem:[%s0 + $0x660] sm:$0xff]
  %v219 = vld [vmem:[%s0 + $0x668] sm:$0xff]
  %v220 = vld [vmem:[%s0 + $0x670] sm:$0xff]
  %v221 = vld [vmem:[%s0 + $0x678] sm:$0xff]
  %v222 = vld [vmem:[%s0 + $0x680] sm:$0xff]
  %v223 = vld [vmem:[%s0 + $0x688] sm:$0xff]
  %v224 = vld [vmem:[%s0 + $0x690] sm:$0xff]
  %v225 = vld [vmem:[%s0 + $0x698] sm:$0xff]
  %v226 = vld [vmem:[%s0 + $0x6a0] sm:$0xff]
  %v227 = vld [vmem:[%s0 + $0x6a8] sm:$0xff]
  %v228 = vld [vmem:[%s0 + $0x6b0] sm:$0xff]
  %v229 = vld [vmem:[%s0 + $0x6b8] sm:$0xff]
  %v230 = vld [vmem:[%s0 + $0x6c0] sm:$0xff]
  %v231 = vld [vmem:[%s0 + $0x6c8] sm:$0xff]
  %v232 = vld [vmem:[%s0 + $0x6d0] sm:$0xff]
  %v233 = vld [vmem:[%s0 + $0x6d8] sm:$0xff]
  %v234 = vld [vmem:[%s0 + $0x6e0] sm:$0xff]
  %v235 = vld [vmem:[%s0 + $0x6e8] sm:$0xff]
  %v236 = vld [vmem:[%s0 + $0x6f0] sm:$0xff]
  %v237 = vld [vmem:[%s0 + $0x6f8] sm:$0xff]
  %v238 = vld [vmem:[%s0 + $0x700] sm:$0x3]
  %v239 = vld [vmem:[%s0 + $0x708] sm:$0x3]
  %v240 = vld [vmem:[%s0 + $0x710] sm:$0x3]
  %v241 = vld [vmem:[%s0 + $0x718] sm:$0x3]
  %v242 = vld [vmem:[%s1] sm:$0xff]
  %v243 = vld [vmem:[%s1 + $0x8] sm:$0xff]
  %v244 = vld [vmem:[%s1 + $0x10] sm:$0xff]
  %v245 = vld [vmem:[%s1 + $0x18] sm:$0xff]
  %v246 = vld [vmem:[%s1 + $0x20] sm:$0xff]
  %v247 = vld [vmem:[%s1 + $0x28] sm:$0xff]
  %v248 = vld [vmem:[%s1 + $0x30] sm:$0xff]
  %v249 = vld [vmem:[%s1 + $0x38] sm:$0xff]
  %v250 = vld [vmem:[%s1 + $0x40] sm:$0xff]
  %v251 = vld [vmem:[%s1 + $0x48] sm:$0xff]
  %v252 = vld [vmem:[%s1 + $0x50] sm:$0xff]
  %v253 = vld [vmem:[%s1 + $0x58] sm:$0xff]
  %v254 = vld [vmem:[%s1 + $0x60] sm:$0xff]
  %v255 = vld [vmem:[%s1 + $0x68] sm:$0xff]
  %v256 = vld [vmem:[%s1 + $0x70] sm:$0xff]
  %v257 = vld [vmem:[%s1 + $0x78] sm:$0xff]
  %v258 = vld [vmem:[%s1 + $0x80] sm:$0xff]
  %v259 = vld [vmem:[%s1 + $0x88] sm:$0xff]
  %v260 = vld [vmem:[%s1 + $0x90] sm:$0xff]
  %v261 = vld [vmem:[%s1 + $0x98] sm:$0xff]
  %v262 = vld [vmem:[%s1 + $0xa0] sm:$0xff]
  %v263 = vld [vmem:[%s1 + $0xa8] sm:$0xff]
  %v264 = vld [vmem:[%s1 + $0xb0] sm:$0xff]
  %v265 = vld [vmem:[%s1 + $0xb8] sm:$0xff]
  %v266 = vld [vmem:[%s1 + $0xc0] sm:$0xff]
  %v267 = vld [vmem:[%s1 + $0xc8] sm:$0xff]
  %v268 = vld [vmem:[%s1 + $0xd0] sm:$0xff]
  %v269 = vld [vmem:[%s1 + $0xd8] sm:$0xff]
  %v270 = vld [vmem:[%s1 + $0xe0] sm:$0xff]
  %v271 = vld [vmem:[%s1 + $0xe8] sm:$0xff]
  %v272 = vld [vmem:[%s1 + $0xf0] sm:$0xff]
  %v273 = vld [vmem:[%s1 + $0xf8] sm:$0xff]
  %v274 = vld [vmem:[%s1 + $0x100] sm:$0xff]
  %v275 = vld [vmem:[%s1 + $0x108] sm:$0xff]
  %v276 = vld [vmem:[%s1 + $0x110] sm:$0xff]
  %v277 = vld [vmem:[%s1 + $0x118] sm:$0xff]
  %v278 = vld [vmem:[%s1 + $0x120] sm:$0xff]
  %v279 = vld [vmem:[%s1 + $0x128] sm:$0xff]
  %v280 = vld [vmem:[%s1 + $0x130] sm:$0xff]
  %v281 = vld [vmem:[%s1 + $0x138] sm:$0xff]
  %v282 = vld [vmem:[%s1 + $0x140] sm:$0xff]
  %v283 = vld [vmem:[%s1 + $0x148] sm:$0xff]
  %v284 = vld [vmem:[%s1 + $0x150] sm:$0xff]
  %v285 = vld [vmem:[%s1 + $0x158] sm:$0xff]
  %v286 = vld [vmem:[%s1 + $0x160] sm:$0xff]
  %v287 = vld [vmem:[%s1 + $0x168] sm:$0xff]
  %v288 = vld [vmem:[%s1 + $0x170] sm:$0xff]
  %v289 = vld [vmem:[%s1 + $0x178] sm:$0xff]
  %v290 = vld [vmem:[%s1 + $0x180] sm:$0xff]
  %v291 = vld [vmem:[%s1 + $0x188] sm:$0xff]
  %v292 = vld [vmem:[%s1 + $0x190] sm:$0xff]
  %v293 = vld [vmem:[%s1 + $0x198] sm:$0xff]
  %v294 = vld [vmem:[%s1 + $0x1a0] sm:$0xff]
  %v295 = vld [vmem:[%s1 + $0x1a8] sm:$0xff]
  %v296 = vld [vmem:[%s1 + $0x1b0] sm:$0xff]
  %v297 = vld [vmem:[%s1 + $0x1b8] sm:$0xff]
  %v298 = vld [vmem:[%s1 + $0x1c0] sm:$0xff]
  %v299 = vld [vmem:[%s1 + $0x1c8] sm:$0xff]
  %v300 = vld [vmem:[%s1 + $0x1d0] sm:$0xff]
  %v301 = vld [vmem:[%s1 + $0x1d8] sm:$0xff]
  %v302 = vld [vmem:[%s1 + $0x1e0] sm:$0xff]
  %v303 = vld [vmem:[%s1 + $0x1e8] sm:$0xff]
  %v304 = vld [vmem:[%s1 + $0x1f0] sm:$0xff]
  %v305 = vld [vmem:[%s1 + $0x1f8] sm:$0xff]
  %v306 = vld [vmem:[%s2] sm:$0x1]
  %v308 = vlaneseq
  %v309 = vshrl.u32 %v308, 7
  %v310 = vsub.s32 0, %v309
  %v311 = vrot.slane %v306, %v310
  %313 = vmatprep.subr.mxu0 0.0
  %314 = vmatpush1.msra.mxu0 %v242
  %315 = vmatprep.subr.mxu0 0.0
  %316 = vmatpush1.msra.mxu0 %v243
  %317 = vmatprep.subr.mxu0 0.0
  %318 = vmatpush1.msra.mxu0 %v244
  %319 = vmatprep.subr.mxu0 0.0
  %320 = vmatpush1.msra.mxu0 %v245
  %321 = vmatprep.subr.mxu0 0.0
  %322 = vmatpush1.msra.mxu0 %v246
  %323 = vmatprep.subr.mxu0 0.0
  %324 = vmatpush1.msra.mxu0 %v247
  %325 = vmatprep.subr.mxu0 0.0
  %326 = vmatpush1.msra.mxu0 %v248
  %327 = vmatprep.subr.mxu0 0.0
  %328 = vmatpush1.msra.mxu0 %v249
  %329 = vmatprep.subr.mxu0 0.0
  %330 = vmatpush1.msra.mxu0 %v250
  %331 = vmatprep.subr.mxu0 0.0
  %332 = vmatpush1.msra.mxu0 %v251
  %333 = vmatprep.subr.mxu0 0.0
  %334 = vmatpush1.msra.mxu0 %v252
  %335 = vmatprep.subr.mxu0 0.0
  %336 = vmatpush1.msra.mxu0 %v253
  %337 = vmatprep.subr.mxu0 0.0
  %338 = vmatpush1.msra.mxu0 %v254
  %339 = vmatprep.subr.mxu0 0.0
  %340 = vmatpush1.msra.mxu0 %v255
  %341 = vmatprep.subr.mxu0 0.0
  %342 = vmatpush1.msra.mxu0 %v256
  %343 = vmatprep.subr.mxu0 0.0
  %344 = vmatpush1.msra.mxu0 %v257
  %345 = vmatprep.subr.mxu0 0.0
  %346 = vmatpush1.msra.mxu0 %v258
  %347 = vmatprep.subr.mxu0 0.0
  %348 = vmatpush1.msra.mxu0 %v259
  %349 = vmatprep.subr.mxu0 0.0
  %350 = vmatpush1.msra.mxu0 %v260
  %351 = vmatprep.subr.mxu0 0.0
  %352 = vmatpush1.msra.mxu0 %v261
  %353 = vmatprep.subr.mxu0 0.0
  %354 = vmatpush1.msra.mxu0 %v262
  %355 = vmatprep.subr.mxu0 0.0
  %356 = vmatpush1.msra.mxu0 %v263
  %357 = vmatprep.subr.mxu0 0.0
  %358 = vmatpush1.msra.mxu0 %v264
  %359 = vmatprep.subr.mxu0 0.0
  %360 = vmatpush1.msra.mxu0 %v265
  %361 = vmatprep.subr.mxu0 0.0
  %362 = vmatpush1.msra.mxu0 %v266
  %363 = vmatprep.subr.mxu0 0.0
  %364 = vmatpush1.msra.mxu0 %v267
  %365 = vmatprep.subr.mxu0 0.0
  %366 = vmatpush1.msra.mxu0 %v268
  %367 = vmatprep.subr.mxu0 0.0
  %368 = vmatpush1.msra.mxu0 %v269
  %369 = vmatprep.subr.mxu0 0.0
  %370 = vmatpush1.msra.mxu0 %v270
  %371 = vmatprep.subr.mxu0 0.0
  %372 = vmatpush1.msra.mxu0 %v271
  %373 = vmatprep.subr.mxu0 0.0
  %374 = vmatpush1.msra.mxu0 %v272
  %375 = vmatprep.subr.mxu0 0.0
  %376 = vmatpush1.msra.mxu0 %v273
  %377 = vmatprep.mubr.f32.mxu0 %v15
  %378 = vmatmul.mubr.f32.gmra.mrb[0].mxu0 %v14
  %v379 = vpop.f32.mrb[0].mxu0
  %v380 = vadd.f32 %v311, %v379
  %v381 = vpop.f32.mrb[0].mxu0
  %382 = vmatprep.mubr.f32.mxu0 %v19
  %383 = vmatmul.mubr.f32.gmra.mrb[0].mxu0 %v18
  %v384 = vpop.f32.mrb[0].mxu0
  %v385 = vadd.f32 %v311, %v384
  %v386 = vpop.f32.mrb[0].mxu0
  %387 = vmatprep.mubr.f32.mxu0 %v23
  %388 = vmatmul.mubr.f32.gmra.mrb[0].mxu0 %v22
  %v389 = vpop.f32.mrb[0].mxu0
  %v390 = vadd.f32 %v311, %v389
  %v391 = vpop.f32.mrb[0].mxu0
  %392 = vmatprep.mubr.f32.mxu0 %v27
  %393 = vmatmul.mubr.f32.gmra.mrb[0].mxu0 %v26
  %v394 = vpop.f32.mrb[0].mxu0
  %v395 = vadd.f32 %v311, %v394
  %v396 = vpop.f32.mrb[0].mxu0
  %397 = vmatprep.mubr.f32.mxu0 %v31
  %398 = vmatmul.mubr.f32.gmra.mrb[0].mxu0 %v30
  %v399 = vpop.f32.mrb[0].mxu0
  %v400 = vadd.f32 %v311, %v399
  %v401 = vpop.f32.mrb[0].mxu0
  %402 = vmatprep.mubr.f32.mxu0 %v35
  %403 = vmatmul.mubr.f32.gmra.mrb[0].mxu0 %v34
  %v404 = vpop.f32.mrb[0].mxu0
  %v405 = vadd.f32 %v311, %v404
  %v406 = vpop.f32.mrb[0].mxu0
  %407 = vmatprep.mubr.f32.mxu0 %v39
  %408 = vmatmul.mubr.f32.gmra.mrb[0].mxu0 %v38
  %v409 = vpop.f32.mrb[0].mxu0
  %v410 = vadd.f32 %v311, %v409
  %v411 = vpop.f32.mrb[0].mxu0
  %412 = vmatprep.mubr.f32.mxu0 %v43
  %413 = vmatmul.mubr.f32.gmra.mrb[0].mxu0 %v42
  %v414 = vpop.f32.mrb[0].mxu0
  %v415 = vadd.f32 %v311, %v414
  %v416 = vpop.f32.mrb[0].mxu0
  %417 = vmatprep.mubr.f32.mxu0 %v47
  %418 = vmatmul.mubr.f32.gmra.mrb[0].mxu0 %v46
  %v419 = vpop.f32.mrb[0].mxu0
  %v420 = vadd.f32 %v311, %v419
  %v421 = vpop.f32.mrb[0].mxu0
  %422 = vmatprep.mubr.f32.mxu0 %v51
  %423 = vmatmul.mubr.f32.gmra.mrb[0].mxu0 %v50
  %v424 = vpop.f32.mrb[0].mxu0
  %v425 = vadd.f32 %v311, %v424
  %v426 = vpop.f32.mrb[0].mxu0
  %427 = vmatprep.mubr.f32.mxu0 %v55
  %428 = vmatmul.mubr.f32.gmra.mrb[0].mxu0 %v54
  %v429 = vpop.f32.mrb[0].mxu0
  %v430 = vadd.f32 %v311, %v429
  %v431 = vpop.f32.mrb[0].mxu0
  %432 = vmatprep.mubr.f32.mxu0 %v59
  %433 = vmatmul.mubr.f32.gmra.mrb[0].mxu0 %v58
  %v434 = vpop.f32.mrb[0].mxu0
  %v435 = vadd.f32 %v311, %v434
  %v436 = vpop.f32.mrb[0].mxu0
  %437 = vmatprep.mubr.f32.mxu0 %v63
  %438 = vmatmul.mubr.f32.gmra.mrb[0].mxu0 %v62
  %v439 = vpop.f32.mrb[0].mxu0
  %v440 = vadd.f32 %v311, %v439
  %v441 = vpop.f32.mrb[0].mxu0
  %442 = vmatprep.mubr.f32.mxu0 %v67
  %443 = vmatmul.mubr.f32.gmra.mrb[0].mxu0 %v66
  %v444 = vpop.f32.mrb[0].mxu0
  %v445 = vadd.f32 %v311, %v444
  %v446 = vpop.f32.mrb[0].mxu0
  %447 = vmatprep.mubr.f32.mxu0 %v71
  %448 = vmatmul.mubr.f32.gmra.mrb[0].mxu0 %v70
  %v449 = vpop.f32.mrb[0].mxu0
  %v450 = vadd.f32 %v311, %v449
  %v451 = vpop.f32.mrb[0].mxu0
  %452 = vmatprep.mubr.f32.mxu0 %v75
  %453 = vmatmul.mubr.f32.gmra.mrb[0].mxu0 %v74
  %v454 = vpop.f32.mrb[0].mxu0
  %v455 = vadd.f32 %v311, %v454
  %v456 = vpop.f32.mrb[0].mxu0
  %457 = vmatprep.mubr.f32.mxu0 %v79
  %458 = vmatmul.mubr.f32.gmra.mrb[0].mxu0 %v78
  %v459 = vpop.f32.mrb[0].mxu0
  %v460 = vadd.f32 %v311, %v459
  %v461 = vpop.f32.mrb[0].mxu0
  %462 = vmatprep.mubr.f32.mxu0 %v83
  %463 = vmatmul.mubr.f32.gmra.mrb[0].mxu0 %v82
  %v464 = vpop.f32.mrb[0].mxu0
  %v465 = vadd.f32 %v311, %v464
  %v466 = vpop.f32.mrb[0].mxu0
  %467 = vmatprep.mubr.f32.mxu0 %v87
  %468 = vmatmul.mubr.f32.gmra.mrb[0].mxu0 %v86
  %v469 = vpop.f32.mrb[0].mxu0
  %v470 = vadd.f32 %v311, %v469
  %v471 = vpop.f32.mrb[0].mxu0
  %472 = vmatprep.mubr.f32.mxu0 %v91
  %473 = vmatmul.mubr.f32.gmra.mrb[0].mxu0 %v90
  %v474 = vpop.f32.mrb[0].mxu0
  %v475 = vadd.f32 %v311, %v474
  %v476 = vpop.f32.mrb[0].mxu0
  %477 = vmatprep.mubr.f32.mxu0 %v95
  %478 = vmatmul.mubr.f32.gmra.mrb[0].mxu0 %v94
  %v479 = vpop.f32.mrb[0].mxu0
  %v480 = vadd.f32 %v311, %v479
  %v481 = vpop.f32.mrb[0].mxu0
  %482 = vmatprep.mubr.f32.mxu0 %v99
  %483 = vmatmul.mubr.f32.gmra.mrb[0].mxu0 %v98
  %v484 = vpop.f32.mrb[0].mxu0
  %v485 = vadd.f32 %v311, %v484
  %v486 = vpop.f32.mrb[0].mxu0
  %487 = vmatprep.mubr.f32.mxu0 %v103
  %488 = vmatmul.mubr.f32.gmra.mrb[0].mxu0 %v102
  %v489 = vpop.f32.mrb[0].mxu0
  %v490 = vadd.f32 %v311, %v489
  %v491 = vpop.f32.mrb[0].mxu0
  %492 = vmatprep.mubr.f32.mxu0 %v107
  %493 = vmatmul.mubr.f32.gmra.mrb[0].mxu0 %v106
  %v494 = vpop.f32.mrb[0].mxu0
  %v495 = vadd.f32 %v311, %v494
  %v496 = vpop.f32.mrb[0].mxu0
  %497 = vmatprep.mubr.f32.mxu0 %v111
  %498 = vmatmul.mubr.f32.gmra.mrb[0].mxu0 %v110
  %v499 = vpop.f32.mrb[0].mxu0
  %v500 = vadd.f32 %v311, %v499
  %v501 = vpop.f32.mrb[0].mxu0
  %502 = vmatprep.mubr.f32.mxu0 %v115
  %503 = vmatmul.mubr.f32.gmra.mrb[0].mxu0 %v114
  %v504 = vpop.f32.mrb[0].mxu0
  %v505 = vadd.f32 %v311, %v504
  %v506 = vpop.f32.mrb[0].mxu0
  %507 = vmatprep.mubr.f32.mxu0 %v119
  %508 = vmatmul.mubr.f32.gmra.mrb[0].mxu0 %v118
  %v509 = vpop.f32.mrb[0].mxu0
  %v510 = vadd.f32 %v311, %v509
  %v511 = vpop.f32.mrb[0].mxu0
  %512 = vmatprep.mubr.f32.mxu0 %v123
  %513 = vmatmul.mubr.f32.gmra.mrb[0].mxu0 %v122
  %v514 = vpop.f32.mrb[0].mxu0
  %v515 = vadd.f32 %v311, %v514
  %v516 = vpop.f32.mrb[0].mxu0
  %517 = vmatprep.mubr.f32.mxu0 %v127
  %518 = vmatmul.mubr.f32.gmra.mrb[0].mxu0 %v126
  %v519 = vpop.f32.mrb[0].mxu0
  %v520 = vadd.f32 %v311, %v519
  %v521 = vpop.f32.mrb[0].mxu0
  %522 = vmatprep.mubr.f32.mxu0 %v131
  %523 = vmatmul.mubr.f32.gmra.mrb[0].mxu0 %v130
  %v524 = vpop.f32.mrb[0].mxu0
  %v525 = vadd.f32 %v311, %v524
  %v526 = vpop.f32.mrb[0].mxu0
  %527 = vmatprep.mubr.f32.mxu0 %v135
  %528 = vmatmul.mubr.f32.gmra.mrb[0].mxu0 %v134
  %v529 = vpop.f32.mrb[0].mxu0
  %v530 = vadd.f32 %v311, %v529
  %v531 = vpop.f32.mrb[0].mxu0
  %532 = vmatprep.mubr.f32.mxu0 %v139
  %533 = vmatmul.mubr.f32.gmra.mrb[0].mxu0 %v138
  %v534 = vpop.f32.mrb[0].mxu0
  %v535 = vadd.f32 %v311, %v534
  %v536 = vpop.f32.mrb[0].mxu0
  %537 = vmatprep.mubr.f32.mxu0 %v143
  %538 = vmatmul.mubr.f32.gmra.mrb[0].mxu0 %v142
  %v539 = vpop.f32.mrb[0].mxu0
  %v540 = vadd.f32 %v311, %v539
  %v541 = vpop.f32.mrb[0].mxu0
  %542 = vmatprep.mubr.f32.mxu0 %v147
  %543 = vmatmul.mubr.f32.gmra.mrb[0].mxu0 %v146
  %v544 = vpop.f32.mrb[0].mxu0
  %v545 = vadd.f32 %v311, %v544
  %v546 = vpop.f32.mrb[0].mxu0
  %547 = vmatprep.mubr.f32.mxu0 %v151
  %548 = vmatmul.mubr.f32.gmra.mrb[0].mxu0 %v150
  %v549 = vpop.f32.mrb[0].mxu0
  %v550 = vadd.f32 %v311, %v549
  %v551 = vpop.f32.mrb[0].mxu0
  %552 = vmatprep.mubr.f32.mxu0 %v155
  %553 = vmatmul.mubr.f32.gmra.mrb[0].mxu0 %v154
  %v554 = vpop.f32.mrb[0].mxu0
  %v555 = vadd.f32 %v311, %v554
  %v556 = vpop.f32.mrb[0].mxu0
  %557 = vmatprep.mubr.f32.mxu0 %v159
  %558 = vmatmul.mubr.f32.gmra.mrb[0].mxu0 %v158
  %v559 = vpop.f32.mrb[0].mxu0
  %v560 = vadd.f32 %v311, %v559
  %v561 = vpop.f32.mrb[0].mxu0
  %562 = vmatprep.mubr.f32.mxu0 %v163
  %563 = vmatmul.mubr.f32.gmra.mrb[0].mxu0 %v162
  %v564 = vpop.f32.mrb[0].mxu0
  %v565 = vadd.f32 %v311, %v564
  %v566 = vpop.f32.mrb[0].mxu0
  %567 = vmatprep.mubr.f32.mxu0 %v167
  %568 = vmatmul.mubr.f32.gmra.mrb[0].mxu0 %v166
  %v569 = vpop.f32.mrb[0].mxu0
  %v570 = vadd.f32 %v311, %v569
  %v571 = vpop.f32.mrb[0].mxu0
  %572 = vmatprep.mubr.f32.mxu0 %v171
  %573 = vmatmul.mubr.f32.gmra.mrb[0].mxu0 %v170
  %v574 = vpop.f32.mrb[0].mxu0
  %v575 = vadd.f32 %v311, %v574
  %v576 = vpop.f32.mrb[0].mxu0
  %577 = vmatprep.mubr.f32.mxu0 %v175
  %578 = vmatmul.mubr.f32.gmra.mrb[0].mxu0 %v174
  %v579 = vpop.f32.mrb[0].mxu0
  %v580 = vadd.f32 %v311, %v579
  %v581 = vpop.f32.mrb[0].mxu0
  %582 = vmatprep.mubr.f32.mxu0 %v179
  %583 = vmatmul.mubr.f32.gmra.mrb[0].mxu0 %v178
  %v584 = vpop.f32.mrb[0].mxu0
  %v585 = vadd.f32 %v311, %v584
  %v586 = vpop.f32.mrb[0].mxu0
  %587 = vmatprep.mubr.f32.mxu0 %v183
  %588 = vmatmul.mubr.f32.gmra.mrb[0].mxu0 %v182
  %v589 = vpop.f32.mrb[0].mxu0
  %v590 = vadd.f32 %v311, %v589
  %v591 = vpop.f32.mrb[0].mxu0
  %592 = vmatprep.mubr.f32.mxu0 %v187
  %593 = vmatmul.mubr.f32.gmra.mrb[0].mxu0 %v186
  %v594 = vpop.f32.mrb[0].mxu0
  %v595 = vadd.f32 %v311, %v594
  %v596 = vpop.f32.mrb[0].mxu0
  %597 = vmatprep.mubr.f32.mxu0 %v191
  %598 = vmatmul.mubr.f32.gmra.mrb[0].mxu0 %v190
  %v599 = vpop.f32.mrb[0].mxu0
  %v600 = vadd.f32 %v311, %v599
  %v601 = vpop.f32.mrb[0].mxu0
  %602 = vmatprep.mubr.f32.mxu0 %v195
  %603 = vmatmul.mubr.f32.gmra.mrb[0].mxu0 %v194
  %v604 = vpop.f32.mrb[0].mxu0
  %v605 = vadd.f32 %v311, %v604
  %v606 = vpop.f32.mrb[0].mxu0
  %607 = vmatprep.mubr.f32.mxu0 %v199
  %608 = vmatmul.mubr.f32.gmra.mrb[0].mxu0 %v198
  %v609 = vpop.f32.mrb[0].mxu0
  %v610 = vadd.f32 %v311, %v609
  %v611 = vpop.f32.mrb[0].mxu0
  %612 = vmatprep.mubr.f32.mxu0 %v203
  %613 = vmatmul.mubr.f32.gmra.mrb[0].mxu0 %v202
  %v614 = vpop.f32.mrb[0].mxu0
  %v615 = vadd.f32 %v311, %v614
  %v616 = vpop.f32.mrb[0].mxu0
  %617 = vmatprep.mubr.f32.mxu0 %v207
  %618 = vmatmul.mubr.f32.gmra.mrb[0].mxu0 %v206
  %v619 = vpop.f32.mrb[0].mxu0
  %v620 = vadd.f32 %v311, %v619
  %v621 = vpop.f32.mrb[0].mxu0
  %622 = vmatprep.mubr.f32.mxu0 %v211
  %623 = vmatmul.mubr.f32.gmra.mrb[0].mxu0 %v210
  %v624 = vpop.f32.mrb[0].mxu0
  %v625 = vadd.f32 %v311, %v624
  %v626 = vpop.f32.mrb[0].mxu0
  %627 = vmatprep.mubr.f32.mxu0 %v215
  %628 = vmatmul.mubr.f32.gmra.mrb[0].mxu0 %v214
  %v629 = vpop.f32.mrb[0].mxu0
  %v630 = vadd.f32 %v311, %v629
  %v631 = vpop.f32.mrb[0].mxu0
  %632 = vmatprep.mubr.f32.mxu0 %v219
  %633 = vmatmul.mubr.f32.gmra.mrb[0].mxu0 %v218
  %v634 = vpop.f32.mrb[0].mxu0
  %v635 = vadd.f32 %v311, %v634
  %v636 = vpop.f32.mrb[0].mxu0
  %637 = vmatprep.mubr.f32.mxu0 %v223
  %638 = vmatmul.mubr.f32.gmra.mrb[0].mxu0 %v222
  %v639 = vpop.f32.mrb[0].mxu0
  %v640 = vadd.f32 %v311, %v639
  %v641 = vpop.f32.mrb[0].mxu0
  %642 = vmatprep.mubr.f32.mxu0 %v227
  %643 = vmatmul.mubr.f32.gmra.mrb[0].mxu0 %v226
  %v644 = vpop.f32.mrb[0].mxu0
  %v645 = vadd.f32 %v311, %v644
  %v646 = vpop.f32.mrb[0].mxu0
  %647 = vmatprep.mubr.f32.mxu0 %v231
  %648 = vmatmul.mubr.f32.gmra.mrb[0].mxu0 %v230
  %v649 = vpop.f32.mrb[0].mxu0
  %v650 = vadd.f32 %v311, %v649
  %v651 = vpop.f32.mrb[0].mxu0
  %652 = vmatprep.mubr.f32.mxu0 %v235
  %653 = vmatmul.mubr.f32.gmra.mrb[0].mxu0 %v234
  %v654 = vpop.f32.mrb[0].mxu0
  %v655 = vadd.f32 %v311, %v654
  %v656 = vpop.f32.mrb[0].mxu0
  %657 = vmatprep.mubr.f32.mxu0 %v239
  %658 = vmatmul.mubr.f32.gmra.mrb[0].mxu0 %v238
  %v659 = vpop.f32.mrb[0].mxu0
  %v660 = vadd.f32 %v311, %v659
  %v661 = vpop.f32.mrb[0].mxu0
  %662 = vdwg.mxu0
  %663 = vmatprep.subr.mxu0 0.0
  %664 = vmatpush1.msra.mxu0 %v274
  %665 = vmatprep.subr.mxu0 0.0
  %666 = vmatpush1.msra.mxu0 %v275
  %667 = vmatprep.subr.mxu0 0.0
  %668 = vmatpush1.msra.mxu0 %v276
  %669 = vmatprep.subr.mxu0 0.0
  %670 = vmatpush1.msra.mxu0 %v277
  %671 = vmatprep.subr.mxu0 0.0
  %672 = vmatpush1.msra.mxu0 %v278
  %673 = vmatprep.subr.mxu0 0.0
  %674 = vmatpush1.msra.mxu0 %v279
  %675 = vmatprep.subr.mxu0 0.0
  %676 = vmatpush1.msra.mxu0 %v280
  %677 = vmatprep.subr.mxu0 0.0
  %678 = vmatpush1.msra.mxu0 %v281
  %679 = vmatprep.subr.mxu0 0.0
  %680 = vmatpush1.msra.mxu0 %v282
  %681 = vmatprep.subr.mxu0 0.0
  %682 = vmatpush1.msra.mxu0 %v283
  %683 = vmatprep.subr.mxu0 0.0
  %684 = vmatpush1.msra.mxu0 %v284
  %685 = vmatprep.subr.mxu0 0.0
  %686 = vmatpush1.msra.mxu0 %v285
  %687 = vmatprep.subr.mxu0 0.0
  %688 = vmatpush1.msra.mxu0 %v286
  %689 = vmatprep.subr.mxu0 0.0
  %690 = vmatpush1.msra.mxu0 %v287
  %691 = vmatprep.subr.mxu0 0.0
  %692 = vmatpush1.msra.mxu0 %v288
  %693 = vmatprep.subr.mxu0 0.0
  %694 = vmatpush1.msra.mxu0 %v289
  %695 = vmatprep.subr.mxu0 0.0
  %696 = vmatpush1.msra.mxu0 %v290
  %697 = vmatprep.subr.mxu0 0.0
  %698 = vmatpush1.msra.mxu0 %v291
  %699 = vmatprep.subr.mxu0 0.0
  %700 = vmatpush1.msra.mxu0 %v292
  %701 = vmatprep.subr.mxu0 0.0
  %702 = vmatpush1.msra.mxu0 %v293
  %703 = vmatprep.subr.mxu0 0.0
  %704 = vmatpush1.msra.mxu0 %v294
  %705 = vmatprep.subr.mxu0 0.0
  %706 = vmatpush1.msra.mxu0 %v295
  %707 = vmatprep.subr.mxu0 0.0
  %708 = vmatpush1.msra.mxu0 %v296
  %709 = vmatprep.subr.mxu0 0.0
  %710 = vmatpush1.msra.mxu0 %v297
  %711 = vmatprep.subr.mxu0 0.0
  %712 = vmatpush1.msra.mxu0 %v298
  %713 = vmatprep.subr.mxu0 0.0
  %714 = vmatpush1.msra.mxu0 %v299
  %715 = vmatprep.subr.mxu0 0.0
  %716 = vmatpush1.msra.mxu0 %v300
  %717 = vmatprep.subr.mxu0 0.0
  %718 = vmatpush1.msra.mxu0 %v301
  %719 = vmatprep.subr.mxu0 0.0
  %720 = vmatpush1.msra.mxu0 %v302
  %721 = vmatprep.subr.mxu0 0.0
  %722 = vmatpush1.msra.mxu0 %v303
  %723 = vmatprep.subr.mxu0 0.0
  %724 = vmatpush1.msra.mxu0 %v304
  %725 = vmatprep.subr.mxu0 0.0
  %726 = vmatpush1.msra.mxu0 %v305
  %727 = vmatprep.mubr.f32.mxu0 %v17
  %728 = vmatmul.mubr.f32.gmra.mrb[0].mxu0 %v16
  %v729 = vpop.f32.mrb[0].mxu0
  %v730 = vadd.f32 %v380, %v729
  %v731 = vpop.f32.mrb[0].mxu0
  %732 = vmatprep.mubr.f32.mxu0 %v21
  %733 = vmatmul.mubr.f32.gmra.mrb[0].mxu0 %v20
  %v734 = vpop.f32.mrb[0].mxu0
  %v735 = vadd.f32 %v385, %v734
  %v736 = vpop.f32.mrb[0].mxu0
  %737 = vmatprep.mubr.f32.mxu0 %v25
  %738 = vmatmul.mubr.f32.gmra.mrb[0].mxu0 %v24
  %v739 = vpop.f32.mrb[0].mxu0
  %v740 = vadd.f32 %v390, %v739
  %v741 = vpop.f32.mrb[0].mxu0
  %742 = vmatprep.mubr.f32.mxu0 %v29
  %743 = vmatmul.mubr.f32.gmra.mrb[0].mxu0 %v28
  %v744 = vpop.f32.mrb[0].mxu0
  %v745 = vadd.f32 %v395, %v744
  %v746 = vpop.f32.mrb[0].mxu0
  %747 = vmatprep.mubr.f32.mxu0 %v33
  %748 = vmatmul.mubr.f32.gmra.mrb[0].mxu0 %v32
  %v749 = vpop.f32.mrb[0].mxu0
  %v750 = vadd.f32 %v400, %v749
  %v751 = vpop.f32.mrb[0].mxu0
  %752 = vmatprep.mubr.f32.mxu0 %v37
  %753 = vmatmul.mubr.f32.gmra.mrb[0].mxu0 %v36
  %v754 = vpop.f32.mrb[0].mxu0
  %v755 = vadd.f32 %v405, %v754
  %v756 = vpop.f32.mrb[0].mxu0
  %757 = vmatprep.mubr.f32.mxu0 %v41
  %758 = vmatmul.mubr.f32.gmra.mrb[0].mxu0 %v40
  %v759 = vpop.f32.mrb[0].mxu0
  %v760 = vadd.f32 %v410, %v759
  %v761 = vpop.f32.mrb[0].mxu0
  %762 = vmatprep.mubr.f32.mxu0 %v45
  %763 = vmatmul.mubr.f32.gmra.mrb[0].mxu0 %v44
  %v764 = vpop.f32.mrb[0].mxu0
  %v765 = vadd.f32 %v415, %v764
  %v766 = vpop.f32.mrb[0].mxu0
  %767 = vmatprep.mubr.f32.mxu0 %v49
  %768 = vmatmul.mubr.f32.gmra.mrb[0].mxu0 %v48
  %v769 = vpop.f32.mrb[0].mxu0
  %v770 = vadd.f32 %v420, %v769
  %v771 = vpop.f32.mrb[0].mxu0
  %772 = vmatprep.mubr.f32.mxu0 %v53
  %773 = vmatmul.mubr.f32.gmra.mrb[0].mxu0 %v52
  %v774 = vpop.f32.mrb[0].mxu0
  %v775 = vadd.f32 %v425, %v774
  %v776 = vpop.f32.mrb[0].mxu0
  %777 = vmatprep.mubr.f32.mxu0 %v57
  %778 = vmatmul.mubr.f32.gmra.mrb[0].mxu0 %v56
  %v779 = vpop.f32.mrb[0].mxu0
  %v780 = vadd.f32 %v430, %v779
  %v781 = vpop.f32.mrb[0].mxu0
  %782 = vmatprep.mubr.f32.mxu0 %v61
  %783 = vmatmul.mubr.f32.gmra.mrb[0].mxu0 %v60
  %v784 = vpop.f32.mrb[0].mxu0
  %v785 = vadd.f32 %v435, %v784
  %v786 = vpop.f32.mrb[0].mxu0
  %787 = vmatprep.mubr.f32.mxu0 %v65
  %788 = vmatmul.mubr.f32.gmra.mrb[0].mxu0 %v64
  %v789 = vpop.f32.mrb[0].mxu0
  %v790 = vadd.f32 %v440, %v789
  %v791 = vpop.f32.mrb[0].mxu0
  %792 = vmatprep.mubr.f32.mxu0 %v69
  %793 = vmatmul.mubr.f32.gmra.mrb[0].mxu0 %v68
  %v794 = vpop.f32.mrb[0].mxu0
  %v795 = vadd.f32 %v445, %v794
  %v796 = vpop.f32.mrb[0].mxu0
  %797 = vmatprep.mubr.f32.mxu0 %v73
  %798 = vmatmul.mubr.f32.gmra.mrb[0].mxu0 %v72
  %v799 = vpop.f32.mrb[0].mxu0
  %v800 = vadd.f32 %v450, %v799
  %v801 = vpop.f32.mrb[0].mxu0
  %802 = vmatprep.mubr.f32.mxu0 %v77
  %803 = vmatmul.mubr.f32.gmra.mrb[0].mxu0 %v76
  %v804 = vpop.f32.mrb[0].mxu0
  %v805 = vadd.f32 %v455, %v804
  %v806 = vpop.f32.mrb[0].mxu0
  %807 = vmatprep.mubr.f32.mxu0 %v81
  %808 = vmatmul.mubr.f32.gmra.mrb[0].mxu0 %v80
  %v809 = vpop.f32.mrb[0].mxu0
  %v810 = vadd.f32 %v460, %v809
  %v811 = vpop.f32.mrb[0].mxu0
  %812 = vmatprep.mubr.f32.mxu0 %v85
  %813 = vmatmul.mubr.f32.gmra.mrb[0].mxu0 %v84
  %v814 = vpop.f32.mrb[0].mxu0
  %v815 = vadd.f32 %v465, %v814
  %v816 = vpop.f32.mrb[0].mxu0
  %817 = vmatprep.mubr.f32.mxu0 %v89
  %818 = vmatmul.mubr.f32.gmra.mrb[0].mxu0 %v88
  %v819 = vpop.f32.mrb[0].mxu0
  %v820 = vadd.f32 %v470, %v819
  %v821 = vpop.f32.mrb[0].mxu0
  %822 = vmatprep.mubr.f32.mxu0 %v93
  %823 = vmatmul.mubr.f32.gmra.mrb[0].mxu0 %v92
  %v824 = vpop.f32.mrb[0].mxu0
  %v825 = vadd.f32 %v475, %v824
  %v826 = vpop.f32.mrb[0].mxu0
  %827 = vmatprep.mubr.f32.mxu0 %v97
  %828 = vmatmul.mubr.f32.gmra.mrb[0].mxu0 %v96
  %v829 = vpop.f32.mrb[0].mxu0
  %v830 = vadd.f32 %v480, %v829
  %v831 = vpop.f32.mrb[0].mxu0
  %832 = vmatprep.mubr.f32.mxu0 %v101
  %833 = vmatmul.mubr.f32.gmra.mrb[0].mxu0 %v100
  %v834 = vpop.f32.mrb[0].mxu0
  %v835 = vadd.f32 %v485, %v834
  %v836 = vpop.f32.mrb[0].mxu0
  %837 = vmatprep.mubr.f32.mxu0 %v105
  %838 = vmatmul.mubr.f32.gmra.mrb[0].mxu0 %v104
  %v839 = vpop.f32.mrb[0].mxu0
  %v840 = vadd.f32 %v490, %v839
  %v841 = vpop.f32.mrb[0].mxu0
  %842 = vmatprep.mubr.f32.mxu0 %v109
  %843 = vmatmul.mubr.f32.gmra.mrb[0].mxu0 %v108
  %v844 = vpop.f32.mrb[0].mxu0
  %v845 = vadd.f32 %v495, %v844
  %v846 = vpop.f32.mrb[0].mxu0
  %847 = vmatprep.mubr.f32.mxu0 %v113
  %848 = vmatmul.mubr.f32.gmra.mrb[0].mxu0 %v112
  %v849 = vpop.f32.mrb[0].mxu0
  %v850 = vadd.f32 %v500, %v849
  %v851 = vpop.f32.mrb[0].mxu0
  %852 = vmatprep.mubr.f32.mxu0 %v117
  %853 = vmatmul.mubr.f32.gmra.mrb[0].mxu0 %v116
  %v854 = vpop.f32.mrb[0].mxu0
  %v855 = vadd.f32 %v505, %v854
  %v856 = vpop.f32.mrb[0].mxu0
  %857 = vmatprep.mubr.f32.mxu0 %v121
  %858 = vmatmul.mubr.f32.gmra.mrb[0].mxu0 %v120
  %v859 = vpop.f32.mrb[0].mxu0
  %v860 = vadd.f32 %v510, %v859
  %v861 = vpop.f32.mrb[0].mxu0
  %862 = vmatprep.mubr.f32.mxu0 %v125
  %863 = vmatmul.mubr.f32.gmra.mrb[0].mxu0 %v124
  %v864 = vpop.f32.mrb[0].mxu0
  %v865 = vadd.f32 %v515, %v864
  %v866 = vpop.f32.mrb[0].mxu0
  %867 = vmatprep.mubr.f32.mxu0 %v129
  %868 = vmatmul.mubr.f32.gmra.mrb[0].mxu0 %v128
  %v869 = vpop.f32.mrb[0].mxu0
  %v870 = vadd.f32 %v520, %v869
  %v871 = vpop.f32.mrb[0].mxu0
  %872 = vmatprep.mubr.f32.mxu0 %v133
  %873 = vmatmul.mubr.f32.gmra.mrb[0].mxu0 %v132
  %v874 = vpop.f32.mrb[0].mxu0
  %v875 = vadd.f32 %v525, %v874
  %v876 = vpop.f32.mrb[0].mxu0
  %877 = vmatprep.mubr.f32.mxu0 %v137
  %878 = vmatmul.mubr.f32.gmra.mrb[0].mxu0 %v136
  %v879 = vpop.f32.mrb[0].mxu0
  %v880 = vadd.f32 %v530, %v879
  %v881 = vpop.f32.mrb[0].mxu0
  %882 = vmatprep.mubr.f32.mxu0 %v141
  %883 = vmatmul.mubr.f32.gmra.mrb[0].mxu0 %v140
  %v884 = vpop.f32.mrb[0].mxu0
  %v885 = vadd.f32 %v535, %v884
  %v886 = vpop.f32.mrb[0].mxu0
  %887 = vmatprep.mubr.f32.mxu0 %v145
  %888 = vmatmul.mubr.f32.gmra.mrb[0].mxu0 %v144
  %v889 = vpop.f32.mrb[0].mxu0
  %v890 = vadd.f32 %v540, %v889
  %v891 = vpop.f32.mrb[0].mxu0
  %892 = vmatprep.mubr.f32.mxu0 %v149
  %893 = vmatmul.mubr.f32.gmra.mrb[0].mxu0 %v148
  %v894 = vpop.f32.mrb[0].mxu0
  %v895 = vadd.f32 %v545, %v894
  %v896 = vpop.f32.mrb[0].mxu0
  %897 = vmatprep.mubr.f32.mxu0 %v153
  %898 = vmatmul.mubr.f32.gmra.mrb[0].mxu0 %v152
  %v899 = vpop.f32.mrb[0].mxu0
  %v900 = vadd.f32 %v550, %v899
  %v901 = vpop.f32.mrb[0].mxu0
  %902 = vmatprep.mubr.f32.mxu0 %v157
  %903 = vmatmul.mubr.f32.gmra.mrb[0].mxu0 %v156
  %v904 = vpop.f32.mrb[0].mxu0
  %v905 = vadd.f32 %v555, %v904
  %v906 = vpop.f32.mrb[0].mxu0
  %907 = vmatprep.mubr.f32.mxu0 %v161
  %908 = vmatmul.mubr.f32.gmra.mrb[0].mxu0 %v160
  %v909 = vpop.f32.mrb[0].mxu0
  %v910 = vadd.f32 %v560, %v909
  %v911 = vpop.f32.mrb[0].mxu0
  %912 = vmatprep.mubr.f32.mxu0 %v165
  %913 = vmatmul.mubr.f32.gmra.mrb[0].mxu0 %v164
  %v914 = vpop.f32.mrb[0].mxu0
  %v915 = vadd.f32 %v565, %v914
  %v916 = vpop.f32.mrb[0].mxu0
  %917 = vmatprep.mubr.f32.mxu0 %v169
  %918 = vmatmul.mubr.f32.gmra.mrb[0].mxu0 %v168
  %v919 = vpop.f32.mrb[0].mxu0
  %v920 = vadd.f32 %v570, %v919
  %v921 = vpop.f32.mrb[0].mxu0
  %922 = vmatprep.mubr.f32.mxu0 %v173
  %923 = vmatmul.mubr.f32.gmra.mrb[0].mxu0 %v172
  %v924 = vpop.f32.mrb[0].mxu0
  %v925 = vadd.f32 %v575, %v924
  %v926 = vpop.f32.mrb[0].mxu0
  %927 = vmatprep.mubr.f32.mxu0 %v177
  %928 = vmatmul.mubr.f32.gmra.mrb[0].mxu0 %v176
  %v929 = vpop.f32.mrb[0].mxu0
  %v930 = vadd.f32 %v580, %v929
  %v931 = vpop.f32.mrb[0].mxu0
  %932 = vmatprep.mubr.f32.mxu0 %v181
  %933 = vmatmul.mubr.f32.gmra.mrb[0].mxu0 %v180
  %v934 = vpop.f32.mrb[0].mxu0
  %v935 = vadd.f32 %v585, %v934
  %v936 = vpop.f32.mrb[0].mxu0
  %937 = vmatprep.mubr.f32.mxu0 %v185
  %938 = vmatmul.mubr.f32.gmra.mrb[0].mxu0 %v184
  %v939 = vpop.f32.mrb[0].mxu0
  %v940 = vadd.f32 %v590, %v939
  %v941 = vpop.f32.mrb[0].mxu0
  %942 = vmatprep.mubr.f32.mxu0 %v189
  %943 = vmatmul.mubr.f32.gmra.mrb[0].mxu0 %v188
  %v944 = vpop.f32.mrb[0].mxu0
  %v945 = vadd.f32 %v595, %v944
  %v946 = vpop.f32.mrb[0].mxu0
  %947 = vmatprep.mubr.f32.mxu0 %v193
  %948 = vmatmul.mubr.f32.gmra.mrb[0].mxu0 %v192
  %v949 = vpop.f32.mrb[0].mxu0
  %v950 = vadd.f32 %v600, %v949
  %v951 = vpop.f32.mrb[0].mxu0
  %952 = vmatprep.mubr.f32.mxu0 %v197
  %953 = vmatmul.mubr.f32.gmra.mrb[0].mxu0 %v196
  %v954 = vpop.f32.mrb[0].mxu0
  %v955 = vadd.f32 %v605, %v954
  %v956 = vpop.f32.mrb[0].mxu0
  %957 = vmatprep.mubr.f32.mxu0 %v201
  %958 = vmatmul.mubr.f32.gmra.mrb[0].mxu0 %v200
  %v959 = vpop.f32.mrb[0].mxu0
  %v960 = vadd.f32 %v610, %v959
  %v961 = vpop.f32.mrb[0].mxu0
  %962 = vmatprep.mubr.f32.mxu0 %v205
  %963 = vmatmul.mubr.f32.gmra.mrb[0].mxu0 %v204
  %v964 = vpop.f32.mrb[0].mxu0
  %v965 = vadd.f32 %v615, %v964
  %v966 = vpop.f32.mrb[0].mxu0
  %967 = vmatprep.mubr.f32.mxu0 %v209
  %968 = vmatmul.mubr.f32.gmra.mrb[0].mxu0 %v208
  %v969 = vpop.f32.mrb[0].mxu0
  %v970 = vadd.f32 %v620, %v969
  %v971 = vpop.f32.mrb[0].mxu0
  %972 = vmatprep.mubr.f32.mxu0 %v213
  %973 = vmatmul.mubr.f32.gmra.mrb[0].mxu0 %v212
  %v974 = vpop.f32.mrb[0].mxu0
  %v975 = vadd.f32 %v625, %v974
  %v976 = vpop.f32.mrb[0].mxu0
  %977 = vmatprep.mubr.f32.mxu0 %v217
  %978 = vmatmul.mubr.f32.gmra.mrb[0].mxu0 %v216
  %v979 = vpop.f32.mrb[0].mxu0
  %v980 = vadd.f32 %v630, %v979
  %v981 = vpop.f32.mrb[0].mxu0
  %982 = vmatprep.mubr.f32.mxu0 %v221
  %983 = vmatmul.mubr.f32.gmra.mrb[0].mxu0 %v220
  %v984 = vpop.f32.mrb[0].mxu0
  %v985 = vadd.f32 %v635, %v984
  %v986 = vpop.f32.mrb[0].mxu0
  %987 = vmatprep.mubr.f32.mxu0 %v225
  %988 = vmatmul.mubr.f32.gmra.mrb[0].mxu0 %v224
  %v989 = vpop.f32.mrb[0].mxu0
  %v990 = vadd.f32 %v640, %v989
  %v991 = vpop.f32.mrb[0].mxu0
  %992 = vmatprep.mubr.f32.mxu0 %v229
  %993 = vmatmul.mubr.f32.gmra.mrb[0].mxu0 %v228
  %v994 = vpop.f32.mrb[0].mxu0
  %v995 = vadd.f32 %v645, %v994
  %v996 = vpop.f32.mrb[0].mxu0
  %997 = vmatprep.mubr.f32.mxu0 %v233
  %998 = vmatmul.mubr.f32.gmra.mrb[0].mxu0 %v232
  %v999 = vpop.f32.mrb[0].mxu0
  %v1000 = vadd.f32 %v650, %v999
  %v1001 = vpop.f32.mrb[0].mxu0
  %1002 = vmatprep.mubr.f32.mxu0 %v237
  %1003 = vmatmul.mubr.f32.gmra.mrb[0].mxu0 %v236
  %v1004 = vpop.f32.mrb[0].mxu0
  %v1005 = vadd.f32 %v655, %v1004
  %v1006 = vpop.f32.mrb[0].mxu0
  %1007 = vmatprep.mubr.f32.mxu0 %v241
  %1008 = vmatmul.mubr.f32.gmra.mrb[0].mxu0 %v240
  %v1009 = vpop.f32.mrb[0].mxu0
  %v1010 = vadd.f32 %v660, %v1009
  %v1011 = vpop.f32.mrb[0].mxu0
  %1012 = vdwg.mxu0
  %v1013 = vmax.f32 %v730, 0.0
  %v1014 = vmax.f32 %v735, 0.0
  %v1015 = vmax.f32 %v740, 0.0
  %v1016 = vmax.f32 %v745, 0.0
  %v1017 = vmax.f32 %v750, 0.0
  %v1018 = vmax.f32 %v755, 0.0
  %v1019 = vmax.f32 %v760, 0.0
  %v1020 = vmax.f32 %v765, 0.0
  %v1021 = vmax.f32 %v770, 0.0
  %v1022 = vmax.f32 %v775, 0.0
  %v1023 = vmax.f32 %v780, 0.0
  %v1024 = vmax.f32 %v785, 0.0
  %v1025 = vmax.f32 %v790, 0.0
  %v1026 = vmax.f32 %v795, 0.0
  %v1027 = vmax.f32 %v800, 0.0
  %v1028 = vmax.f32 %v805, 0.0
  %v1029 = vmax.f32 %v810, 0.0
  %v1030 = vmax.f32 %v815, 0.0
  %v1031 = vmax.f32 %v820, 0.0
  %v1032 = vmax.f32 %v825, 0.0
  %v1033 = vmax.f32 %v830, 0.0
  %v1034 = vmax.f32 %v835, 0.0
  %v1035 = vmax.f32 %v840, 0.0
  %v1036 = vmax.f32 %v845, 0.0
  %v1037 = vmax.f32 %v850, 0.0
  %v1038 = vmax.f32 %v855, 0.0
  %v1039 = vmax.f32 %v860, 0.0
  %v1040 = vmax.f32 %v865, 0.0
  %v1041 = vmax.f32 %v870, 0.0
  %v1042 = vmax.f32 %v875, 0.0
  %v1043 = vmax.f32 %v880, 0.0
  %v1044 = vmax.f32 %v885, 0.0
  %v1045 = vmax.f32 %v890, 0.0
  %v1046 = vmax.f32 %v895, 0.0
  %v1047 = vmax.f32 %v900, 0.0
  %v1048 = vmax.f32 %v905, 0.0
  %v1049 = vmax.f32 %v910, 0.0
  %v1050 = vmax.f32 %v915, 0.0
  %v1051 = vmax.f32 %v920, 0.0
  %v1052 = vmax.f32 %v925, 0.0
  %v1053 = vmax.f32 %v930, 0.0
  %v1054 = vmax.f32 %v935, 0.0
  %v1055 = vmax.f32 %v940, 0.0
  %v1056 = vmax.f32 %v945, 0.0
  %v1057 = vmax.f32 %v950, 0.0
  %v1058 = vmax.f32 %v955, 0.0
  %v1059 = vmax.f32 %v960, 0.0
  %v1060 = vmax.f32 %v965, 0.0
  %v1061 = vmax.f32 %v970, 0.0
  %v1062 = vmax.f32 %v975, 0.0
  %v1063 = vmax.f32 %v980, 0.0
  %v1064 = vmax.f32 %v985, 0.0
  %v1065 = vmax.f32 %v990, 0.0
  %v1066 = vmax.f32 %v995, 0.0
  %v1067 = vmax.f32 %v1000, 0.0
  %v1068 = vmax.f32 %v1005, 0.0
  %v1069 = vmax.f32 %v1010, 0.0
  %1070 = vst [vmem:[%s3] sm:$0xff] %v1013
  %1071 = vst [vmem:[%s3 + $0x8] sm:$0xff] %v1014
  %1072 = vst [vmem:[%s3 + $0x10] sm:$0xff] %v1015
  %1073 = vst [vmem:[%s3 + $0x18] sm:$0xff] %v1016
  %1074 = vst [vmem:[%s3 + $0x20] sm:$0xff] %v1017
  %1075 = vst [vmem:[%s3 + $0x28] sm:$0xff] %v1018
  %1076 = vst [vmem:[%s3 + $0x30] sm:$0xff] %v1019
  %1077 = vst [vmem:[%s3 + $0x38] sm:$0xff] %v1020
  %1078 = vst [vmem:[%s3 + $0x40] sm:$0xff] %v1021
  %1079 = vst [vmem:[%s3 + $0x48] sm:$0xff] %v1022
  %1080 = vst [vmem:[%s3 + $0x50] sm:$0xff] %v1023
  %1081 = vst [vmem:[%s3 + $0x58] sm:$0xff] %v1024
  %1082 = vst [vmem:[%s3 + $0x60] sm:$0xff] %v1025
  %1083 = vst [vmem:[%s3 + $0x68] sm:$0xff] %v1026
  %1084 = vst [vmem:[%s3 + $0x70] sm:$0xff] %v1027
  %1085 = vst [vmem:[%s3 + $0x78] sm:$0xff] %v1028
  %1086 = vst [vmem:[%s3 + $0x80] sm:$0xff] %v1029
  %1087 = vst [vmem:[%s3 + $0x88] sm:$0xff] %v1030
  %1088 = vst [vmem:[%s3 + $0x90] sm:$0xff] %v1031
  %1089 = vst [vmem:[%s3 + $0x98] sm:$0xff] %v1032
  %1090 = vst [vmem:[%s3 + $0xa0] sm:$0xff] %v1033
  %1091 = vst [vmem:[%s3 + $0xa8] sm:$0xff] %v1034
  %1092 = vst [vmem:[%s3 + $0xb0] sm:$0xff] %v1035
  %1093 = vst [vmem:[%s3 + $0xb8] sm:$0xff] %v1036
  %1094 = vst [vmem:[%s3 + $0xc0] sm:$0xff] %v1037
  %1095 = vst [vmem:[%s3 + $0xc8] sm:$0xff] %v1038
  %1096 = vst [vmem:[%s3 + $0xd0] sm:$0xff] %v1039
  %1097 = vst [vmem:[%s3 + $0xd8] sm:$0xff] %v1040
  %1098 = vst [vmem:[%s3 + $0xe0] sm:$0xff] %v1041
  %1099 = vst [vmem:[%s3 + $0xe8] sm:$0xff] %v1042
  %1100 = vst [vmem:[%s3 + $0xf0] sm:$0xff] %v1043
  %1101 = vst [vmem:[%s3 + $0xf8] sm:$0xff] %v1044
  %1102 = vst [vmem:[%s3 + $0x100] sm:$0xff] %v1045
  %1103 = vst [vmem:[%s3 + $0x108] sm:$0xff] %v1046
  %1104 = vst [vmem:[%s3 + $0x110] sm:$0xff] %v1047
  %1105 = vst [vmem:[%s3 + $0x118] sm:$0xff] %v1048
  %1106 = vst [vmem:[%s3 + $0x120] sm:$0xff] %v1049
  %1107 = vst [vmem:[%s3 + $0x128] sm:$0xff] %v1050
  %1108 = vst [vmem:[%s3 + $0x130] sm:$0xff] %v1051
  %1109 = vst [vmem:[%s3 + $0x138] sm:$0xff] %v1052
  %1110 = vst [vmem:[%s3 + $0x140] sm:$0xff] %v1053
  %1111 = vst [vmem:[%s3 + $0x148] sm:$0xff] %v1054
  %1112 = vst [vmem:[%s3 + $0x150] sm:$0xff] %v1055
  %1113 = vst [vmem:[%s3 + $0x158] sm:$0xff] %v1056
  %1114 = vst [vmem:[%s3 + $0x160] sm:$0xff] %v1057
  %1115 = vst [vmem:[%s3 + $0x168] sm:$0xff] %v1058
  %1116 = vst [vmem:[%s3 + $0x170] sm:$0xff] %v1059
  %1117 = vst [vmem:[%s3 + $0x178] sm:$0xff] %v1060
  %1118 = vst [vmem:[%s3 + $0x180] sm:$0xff] %v1061
  %1119 = vst [vmem:[%s3 + $0x188] sm:$0xff] %v1062
  %1120 = vst [vmem:[%s3 + $0x190] sm:$0xff] %v1063
  %1121 = vst [vmem:[%s3 + $0x198] sm:$0xff] %v1064
  %1122 = vst [vmem:[%s3 + $0x1a0] sm:$0xff] %v1065
  %1123 = vst [vmem:[%s3 + $0x1a8] sm:$0xff] %v1066
  %1124 = vst [vmem:[%s3 + $0x1b0] sm:$0xff] %v1067
  %1125 = vst [vmem:[%s3 + $0x1b8] sm:$0xff] %v1068
  %1126 = vst [vmem:[%s3 + $0x1c0] sm:$0x3] %v1069
  // Predicated region
  $region14: #{autoencoder_forward.8} parent=0 // pred_check
    _
  $region15: #{autoencoder_forward.8} parent=0 // pred_check_branch
    %1128 = sbr.rel (0) target = $region17
  $region16: #{autoencoder_forward.8} parent=0 // pred_region
    _
  $region17: #{autoencoder_forward.8} parent=0 // pred_fallthru
    _
  // Predicated region
  $region18: #{autoencoder_forward.8} parent=0 // pred_check
    _
  $region19: #{autoencoder_forward.8} parent=0 // pred_check_branch
    %1130 = sbr.rel (0) target = $region21
  $region20: #{autoencoder_forward.8} parent=0 // pred_region
    _
  $region21: #{autoencoder_forward.8} parent=0 // pred_fallthru
    _

// kernel: autoencoder_forward.9
$region0: #{autoencoder_forward.9}
  #allocation0 [shape = 'u32[]', space=smem, size = 0x4, offset = 0x4, fixed_abs, tag = 'smem constant byte address 0x4 - core index']
  #allocation1 [shape = 'u32[144,128]{1,0:T(1,128)}', space=vmem, size = 0x12000, scoped, tag = 'internal scratch']
  %s0 = inlined_call_operand.vmem [shape: f32[1568,128], index: 0, kind: input, shape index: {}]
  %s1 = inlined_call_operand.vmem [shape: f32[128,128], index: 1, kind: input, shape index: {}]
  %s2 = inlined_call_operand.vmem [shape: f32[1,128], index: 2, kind: input, shape index: {}]
  %s3 = inlined_call_operand.vmem [shape: f32[1568,128], index: 3, kind: output, shape index: {}]
  %s4 = sld [smem:[#allocation0]]
  $region22: #{autoencoder_forward.9} parent=0
    _
  %s6 = ssub.s32 1, %s4
  %s7 = scalar_select 0, %s6, %s4
  // Predicated region
  $region2: #{autoencoder_forward.9} parent=0 // pred_check
    _
  $region3: #{autoencoder_forward.9} parent=0 // pred_check_branch
    %9 = sbr.rel (0) target = $region5
  $region4: #{autoencoder_forward.9} parent=0 // pred_region
    _
  $region5: #{autoencoder_forward.9} parent=0 // pred_fallthru
    _
  // Predicated region
  $region6: #{autoencoder_forward.9} parent=0 // pred_check
    _
  $region7: #{autoencoder_forward.9} parent=0 // pred_check_branch
    %11 = sbr.rel (0) target = $region9
  $region8: #{autoencoder_forward.9} parent=0 // pred_region
    _
  $region9: #{autoencoder_forward.9} parent=0 // pred_fallthru
    _
  // Predicated region
  $region10: #{autoencoder_forward.9} parent=0 // pred_check
    _
  $region11: #{autoencoder_forward.9} parent=0 // pred_check_branch
    %13 = sbr.rel (0) target = $region13
  $region12: #{autoencoder_forward.9} parent=0 // pred_region
    _
  $region13: #{autoencoder_forward.9} parent=0 // pred_fallthru
    _
  %v14 = vld [vmem:[%s0] sm:$0xff]
  %v15 = vld [vmem:[%s0 + $0x8] sm:$0xff]
  %v16 = vld [vmem:[%s0 + $0x10] sm:$0xff]
  %v17 = vld [vmem:[%s0 + $0x18] sm:$0xff]
  %v18 = vld [vmem:[%s0 + $0x20] sm:$0xff]
  %v19 = vld [vmem:[%s0 + $0x28] sm:$0xff]
  %v20 = vld [vmem:[%s0 + $0x30] sm:$0xff]
  %v21 = vld [vmem:[%s0 + $0x38] sm:$0xff]
  %v22 = vld [vmem:[%s0 + $0x40] sm:$0xff]
  %v23 = vld [vmem:[%s0 + $0x48] sm:$0xff]
  %v24 = vld [vmem:[%s0 + $0x50] sm:$0xff]
  %v25 = vld [vmem:[%s0 + $0x58] sm:$0xff]
  %v26 = vld [vmem:[%s0 + $0x60] sm:$0xff]
  %v27 = vld [vmem:[%s0 + $0x68] sm:$0xff]
  %v28 = vld [vmem:[%s0 + $0x70] sm:$0xff]
  %v29 = vld [vmem:[%s0 + $0x78] sm:$0xff]
  %v30 = vld [vmem:[%s0 + $0x80] sm:$0xff]
  %v31 = vld [vmem:[%s0 + $0x88] sm:$0xff]
  %v32 = vld [vmem:[%s0 + $0x90] sm:$0xff]
  %v33 = vld [vmem:[%s0 + $0x98] sm:$0xff]
  %v34 = vld [vmem:[%s0 + $0xa0] sm:$0xff]
  %v35 = vld [vmem:[%s0 + $0xa8] sm:$0xff]
  %v36 = vld [vmem:[%s0 + $0xb0] sm:$0xff]
  %v37 = vld [vmem:[%s0 + $0xb8] sm:$0xff]
  %v38 = vld [vmem:[%s0 + $0xc0] sm:$0xff]
  %v39 = vld [vmem:[%s0 + $0xc8] sm:$0xff]
  %v40 = vld [vmem:[%s0 + $0xd0] sm:$0xff]
  %v41 = vld [vmem:[%s0 + $0xd8] sm:$0xff]
  %v42 = vld [vmem:[%s0 + $0xe0] sm:$0xff]
  %v43 = vld [vmem:[%s0 + $0xe8] sm:$0xff]
  %v44 = vld [vmem:[%s0 + $0xf0] sm:$0xff]
  %v45 = vld [vmem:[%s0 + $0xf8] sm:$0xff]
  %v46 = vld [vmem:[%s0 + $0x100] sm:$0xff]
  %v47 = vld [vmem:[%s0 + $0x108] sm:$0xff]
  %v48 = vld [vmem:[%s0 + $0x110] sm:$0xff]
  %v49 = vld [vmem:[%s0 + $0x118] sm:$0xff]
  %v50 = vld [vmem:[%s0 + $0x120] sm:$0xff]
  %v51 = vld [vmem:[%s0 + $0x128] sm:$0xff]
  %v52 = vld [vmem:[%s0 + $0x130] sm:$0xff]
  %v53 = vld [vmem:[%s0 + $0x138] sm:$0xff]
  %v54 = vld [vmem:[%s0 + $0x140] sm:$0xff]
  %v55 = vld [vmem:[%s0 + $0x148] sm:$0xff]
  %v56 = vld [vmem:[%s0 + $0x150] sm:$0xff]
  %v57 = vld [vmem:[%s0 + $0x158] sm:$0xff]
  %v58 = vld [vmem:[%s0 + $0x160] sm:$0xff]
  %v59 = vld [vmem:[%s0 + $0x168] sm:$0xff]
  %v60 = vld [vmem:[%s0 + $0x170] sm:$0xff]
  %v61 = vld [vmem:[%s0 + $0x178] sm:$0xff]
  %v62 = vld [vmem:[%s0 + $0x180] sm:$0xff]
  %v63 = vld [vmem:[%s0 + $0x188] sm:$0xff]
  %v64 = vld [vmem:[%s0 + $0x190] sm:$0xff]
  %v65 = vld [vmem:[%s0 + $0x198] sm:$0xff]
  %v66 = vld [vmem:[%s0 + $0x1a0] sm:$0xff]
  %v67 = vld [vmem:[%s0 + $0x1a8] sm:$0xff]
  %v68 = vld [vmem:[%s0 + $0x1b0] sm:$0xff]
  %v69 = vld [vmem:[%s0 + $0x1b8] sm:$0xff]
  %v70 = vld [vmem:[%s0 + $0x1c0] sm:$0xff]
  %v71 = vld [vmem:[%s0 + $0x1c8] sm:$0xff]
  %v72 = vld [vmem:[%s0 + $0x1d0] sm:$0xff]
  %v73 = vld [vmem:[%s0 + $0x1d8] sm:$0xff]
  %v74 = vld [vmem:[%s0 + $0x1e0] sm:$0xff]
  %v75 = vld [vmem:[%s0 + $0x1e8] sm:$0xff]
  %v76 = vld [vmem:[%s0 + $0x1f0] sm:$0xff]
  %v77 = vld [vmem:[%s0 + $0x1f8] sm:$0xff]
  %v78 = vld [vmem:[%s0 + $0x200] sm:$0xff]
  %v79 = vld [vmem:[%s0 + $0x208] sm:$0xff]
  %v80 = vld [vmem:[%s0 + $0x210] sm:$0xff]
  %v81 = vld [vmem:[%s0 + $0x218] sm:$0xff]
  %v82 = vld [vmem:[%s0 + $0x220] sm:$0xff]
  %v83 = vld [vmem:[%s0 + $0x228] sm:$0xff]
  %v84 = vld [vmem:[%s0 + $0x230] sm:$0xff]
  %v85 = vld [vmem:[%s0 + $0x238] sm:$0xff]
  %v86 = vld [vmem:[%s0 + $0x240] sm:$0xff]
  %v87 = vld [vmem:[%s0 + $0x248] sm:$0xff]
  %v88 = vld [vmem:[%s0 + $0x250] sm:$0xff]
  %v89 = vld [vmem:[%s0 + $0x258] sm:$0xff]
  %v90 = vld [vmem:[%s0 + $0x260] sm:$0xff]
  %v91 = vld [vmem:[%s0 + $0x268] sm:$0xff]
  %v92 = vld [vmem:[%s0 + $0x270] sm:$0xff]
  %v93 = vld [vmem:[%s0 + $0x278] sm:$0xff]
  %v94 = vld [vmem:[%s0 + $0x280] sm:$0xff]
  %v95 = vld [vmem:[%s0 + $0x288] sm:$0xff]
  %v96 = vld [vmem:[%s0 + $0x290] sm:$0xff]
  %v97 = vld [vmem:[%s0 + $0x298] sm:$0xff]
  %v98 = vld [vmem:[%s0 + $0x2a0] sm:$0xff]
  %v99 = vld [vmem:[%s0 + $0x2a8] sm:$0xff]
  %v100 = vld [vmem:[%s0 + $0x2b0] sm:$0xff]
  %v101 = vld [vmem:[%s0 + $0x2b8] sm:$0xff]
  %v102 = vld [vmem:[%s0 + $0x2c0] sm:$0xff]
  %v103 = vld [vmem:[%s0 + $0x2c8] sm:$0xff]
  %v104 = vld [vmem:[%s0 + $0x2d0] sm:$0xff]
  %v105 = vld [vmem:[%s0 + $0x2d8] sm:$0xff]
  %v106 = vld [vmem:[%s0 + $0x2e0] sm:$0xff]
  %v107 = vld [vmem:[%s0 + $0x2e8] sm:$0xff]
  %v108 = vld [vmem:[%s0 + $0x2f0] sm:$0xff]
  %v109 = vld [vmem:[%s0 + $0x2f8] sm:$0xff]
  %v110 = vld [vmem:[%s0 + $0x300] sm:$0xff]
  %v111 = vld [vmem:[%s0 + $0x308] sm:$0xff]
  %v112 = vld [vmem:[%s0 + $0x310] sm:$0xff]
  %v113 = vld [vmem:[%s0 + $0x318] sm:$0xff]
  %v114 = vld [vmem:[%s0 + $0x320] sm:$0xff]
  %v115 = vld [vmem:[%s0 + $0x328] sm:$0xff]
  %v116 = vld [vmem:[%s0 + $0x330] sm:$0xff]
  %v117 = vld [vmem:[%s0 + $0x338] sm:$0xff]
  %v118 = vld [vmem:[%s0 + $0x340] sm:$0xff]
  %v119 = vld [vmem:[%s0 + $0x348] sm:$0xff]
  %v120 = vld [vmem:[%s0 + $0x350] sm:$0xff]
  %v121 = vld [vmem:[%s0 + $0x358] sm:$0xff]
  %v122 = vld [vmem:[%s0 + $0x360] sm:$0xff]
  %v123 = vld [vmem:[%s0 + $0x368] sm:$0xff]
  %v124 = vld [vmem:[%s0 + $0x370] sm:$0xff]
  %v125 = vld [vmem:[%s0 + $0x378] sm:$0xff]
  %v126 = vld [vmem:[%s0 + $0x380] sm:$0xff]
  %v127 = vld [vmem:[%s0 + $0x388] sm:$0xff]
  %v128 = vld [vmem:[%s0 + $0x390] sm:$0xff]
  %v129 = vld [vmem:[%s0 + $0x398] sm:$0xff]
  %v130 = vld [vmem:[%s0 + $0x3a0] sm:$0xff]
  %v131 = vld [vmem:[%s0 + $0x3a8] sm:$0xff]
  %v132 = vld [vmem:[%s0 + $0x3b0] sm:$0xff]
  %v133 = vld [vmem:[%s0 + $0x3b8] sm:$0xff]
  %v134 = vld [vmem:[%s0 + $0x3c0] sm:$0xff]
  %v135 = vld [vmem:[%s0 + $0x3c8] sm:$0xff]
  %v136 = vld [vmem:[%s0 + $0x3d0] sm:$0xff]
  %v137 = vld [vmem:[%s0 + $0x3d8] sm:$0xff]
  %v138 = vld [vmem:[%s0 + $0x3e0] sm:$0xff]
  %v139 = vld [vmem:[%s0 + $0x3e8] sm:$0xff]
  %v140 = vld [vmem:[%s0 + $0x3f0] sm:$0xff]
  %v141 = vld [vmem:[%s0 + $0x3f8] sm:$0xff]
  %v142 = vld [vmem:[%s0 + $0x400] sm:$0xff]
  %v143 = vld [vmem:[%s0 + $0x408] sm:$0xff]
  %v144 = vld [vmem:[%s0 + $0x410] sm:$0xff]
  %v145 = vld [vmem:[%s0 + $0x418] sm:$0xff]
  %v146 = vld [vmem:[%s0 + $0x420] sm:$0xff]
  %v147 = vld [vmem:[%s0 + $0x428] sm:$0xff]
  %v148 = vld [vmem:[%s0 + $0x430] sm:$0xff]
  %v149 = vld [vmem:[%s0 + $0x438] sm:$0xff]
  %v150 = vld [vmem:[%s0 + $0x440] sm:$0xff]
  %v151 = vld [vmem:[%s0 + $0x448] sm:$0xff]
  %v152 = vld [vmem:[%s0 + $0x450] sm:$0xff]
  %v153 = vld [vmem:[%s0 + $0x458] sm:$0xff]
  %v154 = vld [vmem:[%s0 + $0x460] sm:$0xff]
  %v155 = vld [vmem:[%s0 + $0x468] sm:$0xff]
  %v156 = vld [vmem:[%s0 + $0x470] sm:$0xff]
  %v157 = vld [vmem:[%s0 + $0x478] sm:$0xff]
  %v158 = vld [vmem:[%s0 + $0x480] sm:$0xff]
  %v159 = vld [vmem:[%s0 + $0x488] sm:$0xff]
  %v160 = vld [vmem:[%s0 + $0x490] sm:$0xff]
  %v161 = vld [vmem:[%s0 + $0x498] sm:$0xff]
  %v162 = vld [vmem:[%s0 + $0x4a0] sm:$0xff]
  %v163 = vld [vmem:[%s0 + $0x4a8] sm:$0xff]
  %v164 = vld [vmem:[%s0 + $0x4b0] sm:$0xff]
  %v165 = vld [vmem:[%s0 + $0x4b8] sm:$0xff]
  %v166 = vld [vmem:[%s0 + $0x4c0] sm:$0xff]
  %v167 = vld [vmem:[%s0 + $0x4c8] sm:$0xff]
  %v168 = vld [vmem:[%s0 + $0x4d0] sm:$0xff]
  %v169 = vld [vmem:[%s0 + $0x4d8] sm:$0xff]
  %v170 = vld [vmem:[%s0 + $0x4e0] sm:$0xff]
  %v171 = vld [vmem:[%s0 + $0x4e8] sm:$0xff]
  %v172 = vld [vmem:[%s0 + $0x4f0] sm:$0xff]
  %v173 = vld [vmem:[%s0 + $0x4f8] sm:$0xff]
  %v174 = vld [vmem:[%s0 + $0x500] sm:$0xff]
  %v175 = vld [vmem:[%s0 + $0x508] sm:$0xff]
  %v176 = vld [vmem:[%s0 + $0x510] sm:$0xff]
  %v177 = vld [vmem:[%s0 + $0x518] sm:$0xff]
  %v178 = vld [vmem:[%s0 + $0x520] sm:$0xff]
  %v179 = vld [vmem:[%s0 + $0x528] sm:$0xff]
  %v180 = vld [vmem:[%s0 + $0x530] sm:$0xff]
  %v181 = vld [vmem:[%s0 + $0x538] sm:$0xff]
  %v182 = vld [vmem:[%s0 + $0x540] sm:$0xff]
  %v183 = vld [vmem:[%s0 + $0x548] sm:$0xff]
  %v184 = vld [vmem:[%s0 + $0x550] sm:$0xff]
  %v185 = vld [vmem:[%s0 + $0x558] sm:$0xff]
  %v186 = vld [vmem:[%s0 + $0x560] sm:$0xff]
  %v187 = vld [vmem:[%s0 + $0x568] sm:$0xff]
  %v188 = vld [vmem:[%s0 + $0x570] sm:$0xff]
  %v189 = vld [vmem:[%s0 + $0x578] sm:$0xff]
  %v190 = vld [vmem:[%s0 + $0x580] sm:$0xff]
  %v191 = vld [vmem:[%s0 + $0x588] sm:$0xff]
  %v192 = vld [vmem:[%s0 + $0x590] sm:$0xff]
  %v193 = vld [vmem:[%s0 + $0x598] sm:$0xff]
  %v194 = vld [vmem:[%s0 + $0x5a0] sm:$0xff]
  %v195 = vld [vmem:[%s0 + $0x5a8] sm:$0xff]
  %v196 = vld [vmem:[%s0 + $0x5b0] sm:$0xff]
  %v197 = vld [vmem:[%s0 + $0x5b8] sm:$0xff]
  %v198 = vld [vmem:[%s0 + $0x5c0] sm:$0xff]
  %v199 = vld [vmem:[%s0 + $0x5c8] sm:$0xff]
  %v200 = vld [vmem:[%s0 + $0x5d0] sm:$0xff]
  %v201 = vld [vmem:[%s0 + $0x5d8] sm:$0xff]
  %v202 = vld [vmem:[%s0 + $0x5e0] sm:$0xff]
  %v203 = vld [vmem:[%s0 + $0x5e8] sm:$0xff]
  %v204 = vld [vmem:[%s0 + $0x5f0] sm:$0xff]
  %v205 = vld [vmem:[%s0 + $0x5f8] sm:$0xff]
  %v206 = vld [vmem:[%s0 + $0x600] sm:$0xff]
  %v207 = vld [vmem:[%s0 + $0x608] sm:$0xff]
  %v208 = vld [vmem:[%s0 + $0x610] sm:$0xff]
  %v209 = vld [vmem:[%s0 + $0x618] sm:$0xff]
  %v210 = vld [vmem:[%s1] sm:$0xff]
  %v211 = vld [vmem:[%s1 + $0x8] sm:$0xff]
  %v212 = vld [vmem:[%s1 + $0x10] sm:$0xff]
  %v213 = vld [vmem:[%s1 + $0x18] sm:$0xff]
  %v214 = vld [vmem:[%s1 + $0x20] sm:$0xff]
  %v215 = vld [vmem:[%s1 + $0x28] sm:$0xff]
  %v216 = vld [vmem:[%s1 + $0x30] sm:$0xff]
  %v217 = vld [vmem:[%s1 + $0x38] sm:$0xff]
  %v218 = vld [vmem:[%s1 + $0x40] sm:$0xff]
  %v219 = vld [vmem:[%s1 + $0x48] sm:$0xff]
  %v220 = vld [vmem:[%s1 + $0x50] sm:$0xff]
  %v221 = vld [vmem:[%s1 + $0x58] sm:$0xff]
  %v222 = vld [vmem:[%s1 + $0x60] sm:$0xff]
  %v223 = vld [vmem:[%s1 + $0x68] sm:$0xff]
  %v224 = vld [vmem:[%s1 + $0x70] sm:$0xff]
  %v225 = vld [vmem:[%s1 + $0x78] sm:$0xff]
  %v226 = vld [vmem:[%s2] sm:$0x1]
  %v228 = vlaneseq
  %v229 = vshrl.u32 %v228, 7
  %v230 = vsub.s32 0, %v229
  %v231 = vrot.slane %v226, %v230
  %233 = vmatprep.subr.mxu0 0.0
  %234 = vmatpush1.msra.mxu0 %v210
  %235 = vmatprep.subr.mxu0 0.0
  %236 = vmatpush1.msra.mxu0 %v211
  %237 = vmatprep.subr.mxu0 0.0
  %238 = vmatpush1.msra.mxu0 %v212
  %239 = vmatprep.subr.mxu0 0.0
  %240 = vmatpush1.msra.mxu0 %v213
  %241 = vmatprep.subr.mxu0 0.0
  %242 = vmatpush1.msra.mxu0 %v214
  %243 = vmatprep.subr.mxu0 0.0
  %244 = vmatpush1.msra.mxu0 %v215
  %245 = vmatprep.subr.mxu0 0.0
  %246 = vmatpush1.msra.mxu0 %v216
  %247 = vmatprep.subr.mxu0 0.0
  %248 = vmatpush1.msra.mxu0 %v217
  %249 = vmatprep.subr.mxu0 0.0
  %250 = vmatpush1.msra.mxu0 %v218
  %251 = vmatprep.subr.mxu0 0.0
  %252 = vmatpush1.msra.mxu0 %v219
  %253 = vmatprep.subr.mxu0 0.0
  %254 = vmatpush1.msra.mxu0 %v220
  %255 = vmatprep.subr.mxu0 0.0
  %256 = vmatpush1.msra.mxu0 %v221
  %257 = vmatprep.subr.mxu0 0.0
  %258 = vmatpush1.msra.mxu0 %v222
  %259 = vmatprep.subr.mxu0 0.0
  %260 = vmatpush1.msra.mxu0 %v223
  %261 = vmatprep.subr.mxu0 0.0
  %262 = vmatpush1.msra.mxu0 %v224
  %263 = vmatprep.subr.mxu0 0.0
  %264 = vmatpush1.msra.mxu0 %v225
  %265 = vmatprep.subr.mxu0 0.0
  %266 = vmatpush1.msra.mxu0 0.0
  %267 = vmatprep.subr.mxu0 0.0
  %268 = vmatpush1.msra.mxu0 0.0
  %269 = vmatprep.subr.mxu0 0.0
  %270 = vmatpush1.msra.mxu0 0.0
  %271 = vmatprep.subr.mxu0 0.0
  %272 = vmatpush1.msra.mxu0 0.0
  %273 = vmatprep.subr.mxu0 0.0
  %274 = vmatpush1.msra.mxu0 0.0
  %275 = vmatprep.subr.mxu0 0.0
  %276 = vmatpush1.msra.mxu0 0.0
  %277 = vmatprep.subr.mxu0 0.0
  %278 = vmatpush1.msra.mxu0 0.0
  %279 = vmatprep.subr.mxu0 0.0
  %280 = vmatpush1.msra.mxu0 0.0
  %281 = vmatprep.subr.mxu0 0.0
  %282 = vmatpush1.msra.mxu0 0.0
  %283 = vmatprep.subr.mxu0 0.0
  %284 = vmatpush1.msra.mxu0 0.0
  %285 = vmatprep.subr.mxu0 0.0
  %286 = vmatpush1.msra.mxu0 0.0
  %287 = vmatprep.subr.mxu0 0.0
  %288 = vmatpush1.msra.mxu0 0.0
  %289 = vmatprep.subr.mxu0 0.0
  %290 = vmatpush1.msra.mxu0 0.0
  %291 = vmatprep.subr.mxu0 0.0
  %292 = vmatpush1.msra.mxu0 0.0
  %293 = vmatprep.subr.mxu0 0.0
  %294 = vmatpush1.msra.mxu0 0.0
  %295 = vmatprep.subr.mxu0 0.0
  %296 = vmatpush1.msra.mxu0 0.0
  %297 = vmatprep.mubr.f32.mxu0 0.0
  %298 = vmatmul.mubr.f32.gmra.mrb[0].mxu0 %v14
  %v299 = vpop.f32.mrb[0].mxu0
  %v300 = vadd.f32 %v231, %v299
  %v301 = vpop.f32.mrb[0].mxu0
  %302 = vmatprep.mubr.f32.mxu0 0.0
  %303 = vmatmul.mubr.f32.gmra.mrb[0].mxu0 %v15
  %v304 = vpop.f32.mrb[0].mxu0
  %v305 = vadd.f32 %v231, %v304
  %v306 = vpop.f32.mrb[0].mxu0
  %307 = vmatprep.mubr.f32.mxu0 0.0
  %308 = vmatmul.mubr.f32.gmra.mrb[0].mxu0 %v16
  %v309 = vpop.f32.mrb[0].mxu0
  %v310 = vadd.f32 %v231, %v309
  %v311 = vpop.f32.mrb[0].mxu0
  %312 = vmatprep.mubr.f32.mxu0 0.0
  %313 = vmatmul.mubr.f32.gmra.mrb[0].mxu0 %v17
  %v314 = vpop.f32.mrb[0].mxu0
  %v315 = vadd.f32 %v231, %v314
  %v316 = vpop.f32.mrb[0].mxu0
  %317 = vmatprep.mubr.f32.mxu0 0.0
  %318 = vmatmul.mubr.f32.gmra.mrb[0].mxu0 %v18
  %v319 = vpop.f32.mrb[0].mxu0
  %v320 = vadd.f32 %v231, %v319
  %v321 = vpop.f32.mrb[0].mxu0
  %322 = vmatprep.mubr.f32.mxu0 0.0
  %323 = vmatmul.mubr.f32.gmra.mrb[0].mxu0 %v19
  %v324 = vpop.f32.mrb[0].mxu0
  %v325 = vadd.f32 %v231, %v324
  %v326 = vpop.f32.mrb[0].mxu0
  %327 = vmatprep.mubr.f32.mxu0 0.0
  %328 = vmatmul.mubr.f32.gmra.mrb[0].mxu0 %v20
  %v329 = vpop.f32.mrb[0].mxu0
  %v330 = vadd.f32 %v231, %v329
  %v331 = vpop.f32.mrb[0].mxu0
  %332 = vmatprep.mubr.f32.mxu0 0.0
  %333 = vmatmul.mubr.f32.gmra.mrb[0].mxu0 %v21
  %v334 = vpop.f32.mrb[0].mxu0
  %v335 = vadd.f32 %v231, %v334
  %v336 = vpop.f32.mrb[0].mxu0
  %337 = vmatprep.mubr.f32.mxu0 0.0
  %338 = vmatmul.mubr.f32.gmra.mrb[0].mxu0 %v22
  %v339 = vpop.f32.mrb[0].mxu0
  %v340 = vadd.f32 %v231, %v339
  %v341 = vpop.f32.mrb[0].mxu0
  %342 = vmatprep.mubr.f32.mxu0 0.0
  %343 = vmatmul.mubr.f32.gmra.mrb[0].mxu0 %v23
  %v344 = vpop.f32.mrb[0].mxu0
  %v345 = vadd.f32 %v231, %v344
  %v346 = vpop.f32.mrb[0].mxu0
  %347 = vmatprep.mubr.f32.mxu0 0.0
  %348 = vmatmul.mubr.f32.gmra.mrb[0].mxu0 %v24
  %v349 = vpop.f32.mrb[0].mxu0
  %v350 = vadd.f32 %v231, %v349
  %v351 = vpop.f32.mrb[0].mxu0
  %352 = vmatprep.mubr.f32.mxu0 0.0
  %353 = vmatmul.mubr.f32.gmra.mrb[0].mxu0 %v25
  %v354 = vpop.f32.mrb[0].mxu0
  %v355 = vadd.f32 %v231, %v354
  %v356 = vpop.f32.mrb[0].mxu0
  %357 = vmatprep.mubr.f32.mxu0 0.0
  %358 = vmatmul.mubr.f32.gmra.mrb[0].mxu0 %v26
  %v359 = vpop.f32.mrb[0].mxu0
  %v360 = vadd.f32 %v231, %v359
  %v361 = vpop.f32.mrb[0].mxu0
  %362 = vmatprep.mubr.f32.mxu0 0.0
  %363 = vmatmul.mubr.f32.gmra.mrb[0].mxu0 %v27
  %v364 = vpop.f32.mrb[0].mxu0
  %v365 = vadd.f32 %v231, %v364
  %v366 = vpop.f32.mrb[0].mxu0
  %367 = vmatprep.mubr.f32.mxu0 0.0
  %368 = vmatmul.mubr.f32.gmra.mrb[0].mxu0 %v28
  %v369 = vpop.f32.mrb[0].mxu0
  %v370 = vadd.f32 %v231, %v369
  %v371 = vpop.f32.mrb[0].mxu0
  %372 = vmatprep.mubr.f32.mxu0 0.0
  %373 = vmatmul.mubr.f32.gmra.mrb[0].mxu0 %v29
  %v374 = vpop.f32.mrb[0].mxu0
  %v375 = vadd.f32 %v231, %v374
  %v376 = vpop.f32.mrb[0].mxu0
  %377 = vmatprep.mubr.f32.mxu0 0.0
  %378 = vmatmul.mubr.f32.gmra.mrb[0].mxu0 %v30
  %v379 = vpop.f32.mrb[0].mxu0
  %v380 = vadd.f32 %v231, %v379
  %v381 = vpop.f32.mrb[0].mxu0
  %382 = vmatprep.mubr.f32.mxu0 0.0
  %383 = vmatmul.mubr.f32.gmra.mrb[0].mxu0 %v31
  %v384 = vpop.f32.mrb[0].mxu0
  %v385 = vadd.f32 %v231, %v384
  %v386 = vpop.f32.mrb[0].mxu0
  %387 = vmatprep.mubr.f32.mxu0 0.0
  %388 = vmatmul.mubr.f32.gmra.mrb[0].mxu0 %v32
  %v389 = vpop.f32.mrb[0].mxu0
  %v390 = vadd.f32 %v231, %v389
  %v391 = vpop.f32.mrb[0].mxu0
  %392 = vmatprep.mubr.f32.mxu0 0.0
  %393 = vmatmul.mubr.f32.gmra.mrb[0].mxu0 %v33
  %v394 = vpop.f32.mrb[0].mxu0
  %v395 = vadd.f32 %v231, %v394
  %v396 = vpop.f32.mrb[0].mxu0
  %397 = vmatprep.mubr.f32.mxu0 0.0
  %398 = vmatmul.mubr.f32.gmra.mrb[0].mxu0 %v34
  %v399 = vpop.f32.mrb[0].mxu0
  %v400 = vadd.f32 %v231, %v399
  %v401 = vpop.f32.mrb[0].mxu0
  %402 = vmatprep.mubr.f32.mxu0 0.0
  %403 = vmatmul.mubr.f32.gmra.mrb[0].mxu0 %v35
  %v404 = vpop.f32.mrb[0].mxu0
  %v405 = vadd.f32 %v231, %v404
  %v406 = vpop.f32.mrb[0].mxu0
  %407 = vmatprep.mubr.f32.mxu0 0.0
  %408 = vmatmul.mubr.f32.gmra.mrb[0].mxu0 %v36
  %v409 = vpop.f32.mrb[0].mxu0
  %v410 = vadd.f32 %v231, %v409
  %v411 = vpop.f32.mrb[0].mxu0
  %412 = vmatprep.mubr.f32.mxu0 0.0
  %413 = vmatmul.mubr.f32.gmra.mrb[0].mxu0 %v37
  %v414 = vpop.f32.mrb[0].mxu0
  %v415 = vadd.f32 %v231, %v414
  %v416 = vpop.f32.mrb[0].mxu0
  %417 = vmatprep.mubr.f32.mxu0 0.0
  %418 = vmatmul.mubr.f32.gmra.mrb[0].mxu0 %v38
  %v419 = vpop.f32.mrb[0].mxu0
  %v420 = vadd.f32 %v231, %v419
  %v421 = vpop.f32.mrb[0].mxu0
  %422 = vmatprep.mubr.f32.mxu0 0.0
  %423 = vmatmul.mubr.f32.gmra.mrb[0].mxu0 %v39
  %v424 = vpop.f32.mrb[0].mxu0
  %v425 = vadd.f32 %v231, %v424
  %v426 = vpop.f32.mrb[0].mxu0
  %427 = vmatprep.mubr.f32.mxu0 0.0
  %428 = vmatmul.mubr.f32.gmra.mrb[0].mxu0 %v40
  %v429 = vpop.f32.mrb[0].mxu0
  %v430 = vadd.f32 %v231, %v429
  %v431 = vpop.f32.mrb[0].mxu0
  %432 = vmatprep.mubr.f32.mxu0 0.0
  %433 = vmatmul.mubr.f32.gmra.mrb[0].mxu0 %v41
  %v434 = vpop.f32.mrb[0].mxu0
  %v435 = vadd.f32 %v231, %v434
  %v436 = vpop.f32.mrb[0].mxu0
  %437 = vmatprep.mubr.f32.mxu0 0.0
  %438 = vmatmul.mubr.f32.gmra.mrb[0].mxu0 %v42
  %v439 = vpop.f32.mrb[0].mxu0
  %v440 = vadd.f32 %v231, %v439
  %v441 = vpop.f32.mrb[0].mxu0
  %442 = vmatprep.mubr.f32.mxu0 0.0
  %443 = vmatmul.mubr.f32.gmra.mrb[0].mxu0 %v43
  %v444 = vpop.f32.mrb[0].mxu0
  %v445 = vadd.f32 %v231, %v444
  %v446 = vpop.f32.mrb[0].mxu0
  %447 = vmatprep.mubr.f32.mxu0 0.0
  %448 = vmatmul.mubr.f32.gmra.mrb[0].mxu0 %v44
  %v449 = vpop.f32.mrb[0].mxu0
  %v450 = vadd.f32 %v231, %v449
  %v451 = vpop.f32.mrb[0].mxu0
  %452 = vmatprep.mubr.f32.mxu0 0.0
  %453 = vmatmul.mubr.f32.gmra.mrb[0].mxu0 %v45
  %v454 = vpop.f32.mrb[0].mxu0
  %v455 = vadd.f32 %v231, %v454
  %v456 = vpop.f32.mrb[0].mxu0
  %457 = vmatprep.mubr.f32.mxu0 0.0
  %458 = vmatmul.mubr.f32.gmra.mrb[0].mxu0 %v46
  %v459 = vpop.f32.mrb[0].mxu0
  %v460 = vadd.f32 %v231, %v459
  %v461 = vpop.f32.mrb[0].mxu0
  %462 = vmatprep.mubr.f32.mxu0 0.0
  %463 = vmatmul.mubr.f32.gmra.mrb[0].mxu0 %v47
  %v464 = vpop.f32.mrb[0].mxu0
  %v465 = vadd.f32 %v231, %v464
  %v466 = vpop.f32.mrb[0].mxu0
  %467 = vmatprep.mubr.f32.mxu0 0.0
  %468 = vmatmul.mubr.f32.gmra.mrb[0].mxu0 %v48
  %v469 = vpop.f32.mrb[0].mxu0
  %v470 = vadd.f32 %v231, %v469
  %v471 = vpop.f32.mrb[0].mxu0
  %472 = vmatprep.mubr.f32.mxu0 0.0
  %473 = vmatmul.mubr.f32.gmra.mrb[0].mxu0 %v49
  %v474 = vpop.f32.mrb[0].mxu0
  %v475 = vadd.f32 %v231, %v474
  %v476 = vpop.f32.mrb[0].mxu0
  %477 = vmatprep.mubr.f32.mxu0 0.0
  %478 = vmatmul.mubr.f32.gmra.mrb[0].mxu0 %v50
  %v479 = vpop.f32.mrb[0].mxu0
  %v480 = vadd.f32 %v231, %v479
  %v481 = vpop.f32.mrb[0].mxu0
  %482 = vmatprep.mubr.f32.mxu0 0.0
  %483 = vmatmul.mubr.f32.gmra.mrb[0].mxu0 %v51
  %v484 = vpop.f32.mrb[0].mxu0
  %v485 = vadd.f32 %v231, %v484
  %v486 = vpop.f32.mrb[0].mxu0
  %487 = vmatprep.mubr.f32.mxu0 0.0
  %488 = vmatmul.mubr.f32.gmra.mrb[0].mxu0 %v52
  %v489 = vpop.f32.mrb[0].mxu0
  %v490 = vadd.f32 %v231, %v489
  %v491 = vpop.f32.mrb[0].mxu0
  %492 = vmatprep.mubr.f32.mxu0 0.0
  %493 = vmatmul.mubr.f32.gmra.mrb[0].mxu0 %v53
  %v494 = vpop.f32.mrb[0].mxu0
  %v495 = vadd.f32 %v231, %v494
  %v496 = vpop.f32.mrb[0].mxu0
  %497 = vmatprep.mubr.f32.mxu0 0.0
  %498 = vmatmul.mubr.f32.gmra.mrb[0].mxu0 %v54
  %v499 = vpop.f32.mrb[0].mxu0
  %v500 = vadd.f32 %v231, %v499
  %v501 = vpop.f32.mrb[0].mxu0
  %502 = vmatprep.mubr.f32.mxu0 0.0
  %503 = vmatmul.mubr.f32.gmra.mrb[0].mxu0 %v55
  %v504 = vpop.f32.mrb[0].mxu0
  %v505 = vadd.f32 %v231, %v504
  %v506 = vpop.f32.mrb[0].mxu0
  %507 = vmatprep.mubr.f32.mxu0 0.0
  %508 = vmatmul.mubr.f32.gmra.mrb[0].mxu0 %v56
  %v509 = vpop.f32.mrb[0].mxu0
  %v510 = vadd.f32 %v231, %v509
  %v511 = vpop.f32.mrb[0].mxu0
  %512 = vmatprep.mubr.f32.mxu0 0.0
  %513 = vmatmul.mubr.f32.gmra.mrb[0].mxu0 %v57
  %v514 = vpop.f32.mrb[0].mxu0
  %v515 = vadd.f32 %v231, %v514
  %v516 = vpop.f32.mrb[0].mxu0
  %517 = vmatprep.mubr.f32.mxu0 0.0
  %518 = vmatmul.mubr.f32.gmra.mrb[0].mxu0 %v58
  %v519 = vpop.f32.mrb[0].mxu0
  %v520 = vadd.f32 %v231, %v519
  %v521 = vpop.f32.mrb[0].mxu0
  %522 = vmatprep.mubr.f32.mxu0 0.0
  %523 = vmatmul.mubr.f32.gmra.mrb[0].mxu0 %v59
  %v524 = vpop.f32.mrb[0].mxu0
  %v525 = vadd.f32 %v231, %v524
  %v526 = vpop.f32.mrb[0].mxu0
  %527 = vmatprep.mubr.f32.mxu0 0.0
  %528 = vmatmul.mubr.f32.gmra.mrb[0].mxu0 %v60
  %v529 = vpop.f32.mrb[0].mxu0
  %v530 = vadd.f32 %v231, %v529
  %v531 = vpop.f32.mrb[0].mxu0
  %532 = vmatprep.mubr.f32.mxu0 0.0
  %533 = vmatmul.mubr.f32.gmra.mrb[0].mxu0 %v61
  %v534 = vpop.f32.mrb[0].mxu0
  %v535 = vadd.f32 %v231, %v534
  %v536 = vpop.f32.mrb[0].mxu0
  %537 = vmatprep.mubr.f32.mxu0 0.0
  %538 = vmatmul.mubr.f32.gmra.mrb[0].mxu0 %v62
  %v539 = vpop.f32.mrb[0].mxu0
  %v540 = vadd.f32 %v231, %v539
  %v541 = vpop.f32.mrb[0].mxu0
  %542 = vmatprep.mubr.f32.mxu0 0.0
  %543 = vmatmul.mubr.f32.gmra.mrb[0].mxu0 %v63
  %v544 = vpop.f32.mrb[0].mxu0
  %v545 = vadd.f32 %v231, %v544
  %v546 = vpop.f32.mrb[0].mxu0
  %547 = vmatprep.mubr.f32.mxu0 0.0
  %548 = vmatmul.mubr.f32.gmra.mrb[0].mxu0 %v64
  %v549 = vpop.f32.mrb[0].mxu0
  %v550 = vadd.f32 %v231, %v549
  %v551 = vpop.f32.mrb[0].mxu0
  %552 = vmatprep.mubr.f32.mxu0 0.0
  %553 = vmatmul.mubr.f32.gmra.mrb[0].mxu0 %v65
  %v554 = vpop.f32.mrb[0].mxu0
  %v555 = vadd.f32 %v231, %v554
  %v556 = vpop.f32.mrb[0].mxu0
  %557 = vmatprep.mubr.f32.mxu0 0.0
  %558 = vmatmul.mubr.f32.gmra.mrb[0].mxu0 %v66
  %v559 = vpop.f32.mrb[0].mxu0
  %v560 = vadd.f32 %v231, %v559
  %v561 = vpop.f32.mrb[0].mxu0
  %562 = vmatprep.mubr.f32.mxu0 0.0
  %563 = vmatmul.mubr.f32.gmra.mrb[0].mxu0 %v67
  %v564 = vpop.f32.mrb[0].mxu0
  %v565 = vadd.f32 %v231, %v564
  %v566 = vpop.f32.mrb[0].mxu0
  %567 = vmatprep.mubr.f32.mxu0 0.0
  %568 = vmatmul.mubr.f32.gmra.mrb[0].mxu0 %v68
  %v569 = vpop.f32.mrb[0].mxu0
  %v570 = vadd.f32 %v231, %v569
  %v571 = vpop.f32.mrb[0].mxu0
  %572 = vmatprep.mubr.f32.mxu0 0.0
  %573 = vmatmul.mubr.f32.gmra.mrb[0].mxu0 %v69
  %v574 = vpop.f32.mrb[0].mxu0
  %v575 = vadd.f32 %v231, %v574
  %v576 = vpop.f32.mrb[0].mxu0
  %577 = vmatprep.mubr.f32.mxu0 0.0
  %578 = vmatmul.mubr.f32.gmra.mrb[0].mxu0 %v70
  %v579 = vpop.f32.mrb[0].mxu0
  %v580 = vadd.f32 %v231, %v579
  %v581 = vpop.f32.mrb[0].mxu0
  %582 = vmatprep.mubr.f32.mxu0 0.0
  %583 = vmatmul.mubr.f32.gmra.mrb[0].mxu0 %v71
  %v584 = vpop.f32.mrb[0].mxu0
  %v585 = vadd.f32 %v231, %v584
  %v586 = vpop.f32.mrb[0].mxu0
  %587 = vmatprep.mubr.f32.mxu0 0.0
  %588 = vmatmul.mubr.f32.gmra.mrb[0].mxu0 %v72
  %v589 = vpop.f32.mrb[0].mxu0
  %v590 = vadd.f32 %v231, %v589
  %v591 = vpop.f32.mrb[0].mxu0
  %592 = vmatprep.mubr.f32.mxu0 0.0
  %593 = vmatmul.mubr.f32.gmra.mrb[0].mxu0 %v73
  %v594 = vpop.f32.mrb[0].mxu0
  %v595 = vadd.f32 %v231, %v594
  %v596 = vpop.f32.mrb[0].mxu0
  %597 = vmatprep.mubr.f32.mxu0 0.0
  %598 = vmatmul.mubr.f32.gmra.mrb[0].mxu0 %v74
  %v599 = vpop.f32.mrb[0].mxu0
  %v600 = vadd.f32 %v231, %v599
  %v601 = vpop.f32.mrb[0].mxu0
  %602 = vmatprep.mubr.f32.mxu0 0.0
  %603 = vmatmul.mubr.f32.gmra.mrb[0].mxu0 %v75
  %v604 = vpop.f32.mrb[0].mxu0
  %v605 = vadd.f32 %v231, %v604
  %v606 = vpop.f32.mrb[0].mxu0
  %607 = vmatprep.mubr.f32.mxu0 0.0
  %608 = vmatmul.mubr.f32.gmra.mrb[0].mxu0 %v76
  %v609 = vpop.f32.mrb[0].mxu0
  %v610 = vadd.f32 %v231, %v609
  %v611 = vpop.f32.mrb[0].mxu0
  %612 = vmatprep.mubr.f32.mxu0 0.0
  %613 = vmatmul.mubr.f32.gmra.mrb[0].mxu0 %v77
  %v614 = vpop.f32.mrb[0].mxu0
  %v615 = vadd.f32 %v231, %v614
  %v616 = vpop.f32.mrb[0].mxu0
  %617 = vmatprep.mubr.f32.mxu0 0.0
  %618 = vmatmul.mubr.f32.gmra.mrb[0].mxu0 %v78
  %v619 = vpop.f32.mrb[0].mxu0
  %v620 = vadd.f32 %v231, %v619
  %v621 = vpop.f32.mrb[0].mxu0
  %622 = vmatprep.mubr.f32.mxu0 0.0
  %623 = vmatmul.mubr.f32.gmra.mrb[0].mxu0 %v79
  %v624 = vpop.f32.mrb[0].mxu0
  %v625 = vadd.f32 %v231, %v624
  %v626 = vpop.f32.mrb[0].mxu0
  %627 = vmatprep.mubr.f32.mxu0 0.0
  %628 = vmatmul.mubr.f32.gmra.mrb[0].mxu0 %v80
  %v629 = vpop.f32.mrb[0].mxu0
  %v630 = vadd.f32 %v231, %v629
  %v631 = vpop.f32.mrb[0].mxu0
  %632 = vmatprep.mubr.f32.mxu0 0.0
  %633 = vmatmul.mubr.f32.gmra.mrb[0].mxu0 %v81
  %v634 = vpop.f32.mrb[0].mxu0
  %v635 = vadd.f32 %v231, %v634
  %v636 = vpop.f32.mrb[0].mxu0
  %637 = vmatprep.mubr.f32.mxu0 0.0
  %638 = vmatmul.mubr.f32.gmra.mrb[0].mxu0 %v82
  %v639 = vpop.f32.mrb[0].mxu0
  %v640 = vadd.f32 %v231, %v639
  %v641 = vpop.f32.mrb[0].mxu0
  %642 = vmatprep.mubr.f32.mxu0 0.0
  %643 = vmatmul.mubr.f32.gmra.mrb[0].mxu0 %v83
  %v644 = vpop.f32.mrb[0].mxu0
  %v645 = vadd.f32 %v231, %v644
  %v646 = vpop.f32.mrb[0].mxu0
  %647 = vmatprep.mubr.f32.mxu0 0.0
  %648 = vmatmul.mubr.f32.gmra.mrb[0].mxu0 %v84
  %v649 = vpop.f32.mrb[0].mxu0
  %v650 = vadd.f32 %v231, %v649
  %v651 = vpop.f32.mrb[0].mxu0
  %652 = vmatprep.mubr.f32.mxu0 0.0
  %653 = vmatmul.mubr.f32.gmra.mrb[0].mxu0 %v85
  %v654 = vpop.f32.mrb[0].mxu0
  %v655 = vadd.f32 %v231, %v654
  %v656 = vpop.f32.mrb[0].mxu0
  %657 = vmatprep.mubr.f32.mxu0 0.0
  %658 = vmatmul.mubr.f32.gmra.mrb[0].mxu0 %v86
  %v659 = vpop.f32.mrb[0].mxu0
  %v660 = vadd.f32 %v231, %v659
  %v661 = vpop.f32.mrb[0].mxu0
  %662 = vmatprep.mubr.f32.mxu0 0.0
  %663 = vmatmul.mubr.f32.gmra.mrb[0].mxu0 %v87
  %v664 = vpop.f32.mrb[0].mxu0
  %v665 = vadd.f32 %v231, %v664
  %v666 = vpop.f32.mrb[0].mxu0
  %667 = vmatprep.mubr.f32.mxu0 0.0
  %668 = vmatmul.mubr.f32.gmra.mrb[0].mxu0 %v88
  %v669 = vpop.f32.mrb[0].mxu0
  %v670 = vadd.f32 %v231, %v669
  %v671 = vpop.f32.mrb[0].mxu0
  %672 = vmatprep.mubr.f32.mxu0 0.0
  %673 = vmatmul.mubr.f32.gmra.mrb[0].mxu0 %v89
  %v674 = vpop.f32.mrb[0].mxu0
  %v675 = vadd.f32 %v231, %v674
  %v676 = vpop.f32.mrb[0].mxu0
  %677 = vmatprep.mubr.f32.mxu0 0.0
  %678 = vmatmul.mubr.f32.gmra.mrb[0].mxu0 %v90
  %v679 = vpop.f32.mrb[0].mxu0
  %v680 = vadd.f32 %v231, %v679
  %v681 = vpop.f32.mrb[0].mxu0
  %682 = vmatprep.mubr.f32.mxu0 0.0
  %683 = vmatmul.mubr.f32.gmra.mrb[0].mxu0 %v91
  %v684 = vpop.f32.mrb[0].mxu0
  %v685 = vadd.f32 %v231, %v684
  %v686 = vpop.f32.mrb[0].mxu0
  %687 = vmatprep.mubr.f32.mxu0 0.0
  %688 = vmatmul.mubr.f32.gmra.mrb[0].mxu0 %v92
  %v689 = vpop.f32.mrb[0].mxu0
  %v690 = vadd.f32 %v231, %v689
  %v691 = vpop.f32.mrb[0].mxu0
  %692 = vmatprep.mubr.f32.mxu0 0.0
  %693 = vmatmul.mubr.f32.gmra.mrb[0].mxu0 %v93
  %v694 = vpop.f32.mrb[0].mxu0
  %v695 = vadd.f32 %v231, %v694
  %v696 = vpop.f32.mrb[0].mxu0
  %697 = vmatprep.mubr.f32.mxu0 0.0
  %698 = vmatmul.mubr.f32.gmra.mrb[0].mxu0 %v94
  %v699 = vpop.f32.mrb[0].mxu0
  %v700 = vadd.f32 %v231, %v699
  %v701 = vpop.f32.mrb[0].mxu0
  %702 = vmatprep.mubr.f32.mxu0 0.0
  %703 = vmatmul.mubr.f32.gmra.mrb[0].mxu0 %v95
  %v704 = vpop.f32.mrb[0].mxu0
  %v705 = vadd.f32 %v231, %v704
  %v706 = vpop.f32.mrb[0].mxu0
  %707 = vmatprep.mubr.f32.mxu0 0.0
  %708 = vmatmul.mubr.f32.gmra.mrb[0].mxu0 %v96
  %v709 = vpop.f32.mrb[0].mxu0
  %v710 = vadd.f32 %v231, %v709
  %v711 = vpop.f32.mrb[0].mxu0
  %712 = vmatprep.mubr.f32.mxu0 0.0
  %713 = vmatmul.mubr.f32.gmra.mrb[0].mxu0 %v97
  %v714 = vpop.f32.mrb[0].mxu0
  %v715 = vadd.f32 %v231, %v714
  %v716 = vpop.f32.mrb[0].mxu0
  %717 = vmatprep.mubr.f32.mxu0 0.0
  %718 = vmatmul.mubr.f32.gmra.mrb[0].mxu0 %v98
  %v719 = vpop.f32.mrb[0].mxu0
  %v720 = vadd.f32 %v231, %v719
  %v721 = vpop.f32.mrb[0].mxu0
  %722 = vmatprep.mubr.f32.mxu0 0.0
  %723 = vmatmul.mubr.f32.gmra.mrb[0].mxu0 %v99
  %v724 = vpop.f32.mrb[0].mxu0
  %v725 = vadd.f32 %v231, %v724
  %v726 = vpop.f32.mrb[0].mxu0
  %727 = vmatprep.mubr.f32.mxu0 0.0
  %728 = vmatmul.mubr.f32.gmra.mrb[0].mxu0 %v100
  %v729 = vpop.f32.mrb[0].mxu0
  %v730 = vadd.f32 %v231, %v729
  %v731 = vpop.f32.mrb[0].mxu0
  %732 = vmatprep.mubr.f32.mxu0 0.0
  %733 = vmatmul.mubr.f32.gmra.mrb[0].mxu0 %v101
  %v734 = vpop.f32.mrb[0].mxu0
  %v735 = vadd.f32 %v231, %v734
  %v736 = vpop.f32.mrb[0].mxu0
  %737 = vmatprep.mubr.f32.mxu0 0.0
  %738 = vmatmul.mubr.f32.gmra.mrb[0].mxu0 %v102
  %v739 = vpop.f32.mrb[0].mxu0
  %v740 = vadd.f32 %v231, %v739
  %v741 = vpop.f32.mrb[0].mxu0
  %742 = vmatprep.mubr.f32.mxu0 0.0
  %743 = vmatmul.mubr.f32.gmra.mrb[0].mxu0 %v103
  %v744 = vpop.f32.mrb[0].mxu0
  %v745 = vadd.f32 %v231, %v744
  %v746 = vpop.f32.mrb[0].mxu0
  %747 = vmatprep.mubr.f32.mxu0 0.0
  %748 = vmatmul.mubr.f32.gmra.mrb[0].mxu0 %v104
  %v749 = vpop.f32.mrb[0].mxu0
  %v750 = vadd.f32 %v231, %v749
  %v751 = vpop.f32.mrb[0].mxu0
  %752 = vmatprep.mubr.f32.mxu0 0.0
  %753 = vmatmul.mubr.f32.gmra.mrb[0].mxu0 %v105
  %v754 = vpop.f32.mrb[0].mxu0
  %v755 = vadd.f32 %v231, %v754
  %v756 = vpop.f32.mrb[0].mxu0
  %757 = vmatprep.mubr.f32.mxu0 0.0
  %758 = vmatmul.mubr.f32.gmra.mrb[0].mxu0 %v106
  %v759 = vpop.f32.mrb[0].mxu0
  %v760 = vadd.f32 %v231, %v759
  %v761 = vpop.f32.mrb[0].mxu0
  %762 = vmatprep.mubr.f32.mxu0 0.0
  %763 = vmatmul.mubr.f32.gmra.mrb[0].mxu0 %v107
  %v764 = vpop.f32.mrb[0].mxu0
  %v765 = vadd.f32 %v231, %v764
  %v766 = vpop.f32.mrb[0].mxu0
  %767 = vmatprep.mubr.f32.mxu0 0.0
  %768 = vmatmul.mubr.f32.gmra.mrb[0].mxu0 %v108
  %v769 = vpop.f32.mrb[0].mxu0
  %v770 = vadd.f32 %v231, %v769
  %v771 = vpop.f32.mrb[0].mxu0
  %772 = vmatprep.mubr.f32.mxu0 0.0
  %773 = vmatmul.mubr.f32.gmra.mrb[0].mxu0 %v109
  %v774 = vpop.f32.mrb[0].mxu0
  %v775 = vadd.f32 %v231, %v774
  %v776 = vpop.f32.mrb[0].mxu0
  %777 = vmatprep.mubr.f32.mxu0 0.0
  %778 = vmatmul.mubr.f32.gmra.mrb[0].mxu0 %v110
  %v779 = vpop.f32.mrb[0].mxu0
  %v780 = vadd.f32 %v231, %v779
  %v781 = vpop.f32.mrb[0].mxu0
  %782 = vmatprep.mubr.f32.mxu0 0.0
  %783 = vmatmul.mubr.f32.gmra.mrb[0].mxu0 %v111
  %v784 = vpop.f32.mrb[0].mxu0
  %v785 = vadd.f32 %v231, %v784
  %v786 = vpop.f32.mrb[0].mxu0
  %787 = vmatprep.mubr.f32.mxu0 0.0
  %788 = vmatmul.mubr.f32.gmra.mrb[0].mxu0 %v112
  %v789 = vpop.f32.mrb[0].mxu0
  %v790 = vadd.f32 %v231, %v789
  %v791 = vpop.f32.mrb[0].mxu0
  %792 = vmatprep.mubr.f32.mxu0 0.0
  %793 = vmatmul.mubr.f32.gmra.mrb[0].mxu0 %v113
  %v794 = vpop.f32.mrb[0].mxu0
  %v795 = vadd.f32 %v231, %v794
  %v796 = vpop.f32.mrb[0].mxu0
  %797 = vmatprep.mubr.f32.mxu0 0.0
  %798 = vmatmul.mubr.f32.gmra.mrb[0].mxu0 %v114
  %v799 = vpop.f32.mrb[0].mxu0
  %v800 = vadd.f32 %v231, %v799
  %v801 = vpop.f32.mrb[0].mxu0
  %802 = vmatprep.mubr.f32.mxu0 0.0
  %803 = vmatmul.mubr.f32.gmra.mrb[0].mxu0 %v115
  %v804 = vpop.f32.mrb[0].mxu0
  %v805 = vadd.f32 %v231, %v804
  %v806 = vpop.f32.mrb[0].mxu0
  %807 = vmatprep.mubr.f32.mxu0 0.0
  %808 = vmatmul.mubr.f32.gmra.mrb[0].mxu0 %v116
  %v809 = vpop.f32.mrb[0].mxu0
  %v810 = vadd.f32 %v231, %v809
  %v811 = vpop.f32.mrb[0].mxu0
  %812 = vmatprep.mubr.f32.mxu0 0.0
  %813 = vmatmul.mubr.f32.gmra.mrb[0].mxu0 %v117
  %v814 = vpop.f32.mrb[0].mxu0
  %v815 = vadd.f32 %v231, %v814
  %v816 = vpop.f32.mrb[0].mxu0
  %817 = vmatprep.mubr.f32.mxu0 0.0
  %818 = vmatmul.mubr.f32.gmra.mrb[0].mxu0 %v118
  %v819 = vpop.f32.mrb[0].mxu0
  %v820 = vadd.f32 %v231, %v819
  %v821 = vpop.f32.mrb[0].mxu0
  %822 = vmatprep.mubr.f32.mxu0 0.0
  %823 = vmatmul.mubr.f32.gmra.mrb[0].mxu0 %v119
  %v824 = vpop.f32.mrb[0].mxu0
  %v825 = vadd.f32 %v231, %v824
  %v826 = vpop.f32.mrb[0].mxu0
  %827 = vmatprep.mubr.f32.mxu0 0.0
  %828 = vmatmul.mubr.f32.gmra.mrb[0].mxu0 %v120
  %v829 = vpop.f32.mrb[0].mxu0
  %v830 = vadd.f32 %v231, %v829
  %v831 = vpop.f32.mrb[0].mxu0
  %832 = vmatprep.mubr.f32.mxu0 0.0
  %833 = vmatmul.mubr.f32.gmra.mrb[0].mxu0 %v121
  %v834 = vpop.f32.mrb[0].mxu0
  %v835 = vadd.f32 %v231, %v834
  %v836 = vpop.f32.mrb[0].mxu0
  %837 = vmatprep.mubr.f32.mxu0 0.0
  %838 = vmatmul.mubr.f32.gmra.mrb[0].mxu0 %v122
  %v839 = vpop.f32.mrb[0].mxu0
  %v840 = vadd.f32 %v231, %v839
  %v841 = vpop.f32.mrb[0].mxu0
  %842 = vmatprep.mubr.f32.mxu0 0.0
  %843 = vmatmul.mubr.f32.gmra.mrb[0].mxu0 %v123
  %v844 = vpop.f32.mrb[0].mxu0
  %v845 = vadd.f32 %v231, %v844
  %v846 = vpop.f32.mrb[0].mxu0
  %847 = vmatprep.mubr.f32.mxu0 0.0
  %848 = vmatmul.mubr.f32.gmra.mrb[0].mxu0 %v124
  %v849 = vpop.f32.mrb[0].mxu0
  %v850 = vadd.f32 %v231, %v849
  %v851 = vpop.f32.mrb[0].mxu0
  %852 = vmatprep.mubr.f32.mxu0 0.0
  %853 = vmatmul.mubr.f32.gmra.mrb[0].mxu0 %v125
  %v854 = vpop.f32.mrb[0].mxu0
  %v855 = vadd.f32 %v231, %v854
  %v856 = vpop.f32.mrb[0].mxu0
  %857 = vmatprep.mubr.f32.mxu0 0.0
  %858 = vmatmul.mubr.f32.gmra.mrb[0].mxu0 %v126
  %v859 = vpop.f32.mrb[0].mxu0
  %v860 = vadd.f32 %v231, %v859
  %v861 = vpop.f32.mrb[0].mxu0
  %862 = vmatprep.mubr.f32.mxu0 0.0
  %863 = vmatmul.mubr.f32.gmra.mrb[0].mxu0 %v127
  %v864 = vpop.f32.mrb[0].mxu0
  %v865 = vadd.f32 %v231, %v864
  %v866 = vpop.f32.mrb[0].mxu0
  %867 = vmatprep.mubr.f32.mxu0 0.0
  %868 = vmatmul.mubr.f32.gmra.mrb[0].mxu0 %v128
  %v869 = vpop.f32.mrb[0].mxu0
  %v870 = vadd.f32 %v231, %v869
  %v871 = vpop.f32.mrb[0].mxu0
  %872 = vmatprep.mubr.f32.mxu0 0.0
  %873 = vmatmul.mubr.f32.gmra.mrb[0].mxu0 %v129
  %v874 = vpop.f32.mrb[0].mxu0
  %v875 = vadd.f32 %v231, %v874
  %v876 = vpop.f32.mrb[0].mxu0
  %877 = vmatprep.mubr.f32.mxu0 0.0
  %878 = vmatmul.mubr.f32.gmra.mrb[0].mxu0 %v130
  %v879 = vpop.f32.mrb[0].mxu0
  %v880 = vadd.f32 %v231, %v879
  %v881 = vpop.f32.mrb[0].mxu0
  %882 = vmatprep.mubr.f32.mxu0 0.0
  %883 = vmatmul.mubr.f32.gmra.mrb[0].mxu0 %v131
  %v884 = vpop.f32.mrb[0].mxu0
  %v885 = vadd.f32 %v231, %v884
  %v886 = vpop.f32.mrb[0].mxu0
  %887 = vmatprep.mubr.f32.mxu0 0.0
  %888 = vmatmul.mubr.f32.gmra.mrb[0].mxu0 %v132
  %v889 = vpop.f32.mrb[0].mxu0
  %v890 = vadd.f32 %v231, %v889
  %v891 = vpop.f32.mrb[0].mxu0
  %892 = vmatprep.mubr.f32.mxu0 0.0
  %893 = vmatmul.mubr.f32.gmra.mrb[0].mxu0 %v133
  %v894 = vpop.f32.mrb[0].mxu0
  %v895 = vadd.f32 %v231, %v894
  %v896 = vpop.f32.mrb[0].mxu0
  %897 = vmatprep.mubr.f32.mxu0 0.0
  %898 = vmatmul.mubr.f32.gmra.mrb[0].mxu0 %v134
  %v899 = vpop.f32.mrb[0].mxu0
  %v900 = vadd.f32 %v231, %v899
  %v901 = vpop.f32.mrb[0].mxu0
  %902 = vmatprep.mubr.f32.mxu0 0.0
  %903 = vmatmul.mubr.f32.gmra.mrb[0].mxu0 %v135
  %v904 = vpop.f32.mrb[0].mxu0
  %v905 = vadd.f32 %v231, %v904
  %v906 = vpop.f32.mrb[0].mxu0
  %907 = vmatprep.mubr.f32.mxu0 0.0
  %908 = vmatmul.mubr.f32.gmra.mrb[0].mxu0 %v136
  %v909 = vpop.f32.mrb[0].mxu0
  %v910 = vadd.f32 %v231, %v909
  %v911 = vpop.f32.mrb[0].mxu0
  %912 = vmatprep.mubr.f32.mxu0 0.0
  %913 = vmatmul.mubr.f32.gmra.mrb[0].mxu0 %v137
  %v914 = vpop.f32.mrb[0].mxu0
  %v915 = vadd.f32 %v231, %v914
  %v916 = vpop.f32.mrb[0].mxu0
  %917 = vmatprep.mubr.f32.mxu0 0.0
  %918 = vmatmul.mubr.f32.gmra.mrb[0].mxu0 %v138
  %v919 = vpop.f32.mrb[0].mxu0
  %v920 = vadd.f32 %v231, %v919
  %v921 = vpop.f32.mrb[0].mxu0
  %922 = vmatprep.mubr.f32.mxu0 0.0
  %923 = vmatmul.mubr.f32.gmra.mrb[0].mxu0 %v139
  %v924 = vpop.f32.mrb[0].mxu0
  %v925 = vadd.f32 %v231, %v924
  %v926 = vpop.f32.mrb[0].mxu0
  %927 = vmatprep.mubr.f32.mxu0 0.0
  %928 = vmatmul.mubr.f32.gmra.mrb[0].mxu0 %v140
  %v929 = vpop.f32.mrb[0].mxu0
  %v930 = vadd.f32 %v231, %v929
  %v931 = vpop.f32.mrb[0].mxu0
  %932 = vmatprep.mubr.f32.mxu0 0.0
  %933 = vmatmul.mubr.f32.gmra.mrb[0].mxu0 %v141
  %v934 = vpop.f32.mrb[0].mxu0
  %v935 = vadd.f32 %v231, %v934
  %v936 = vpop.f32.mrb[0].mxu0
  %937 = vmatprep.mubr.f32.mxu0 0.0
  %938 = vmatmul.mubr.f32.gmra.mrb[0].mxu0 %v142
  %v939 = vpop.f32.mrb[0].mxu0
  %v940 = vadd.f32 %v231, %v939
  %v941 = vpop.f32.mrb[0].mxu0
  %942 = vmatprep.mubr.f32.mxu0 0.0
  %943 = vmatmul.mubr.f32.gmra.mrb[0].mxu0 %v143
  %v944 = vpop.f32.mrb[0].mxu0
  %v945 = vadd.f32 %v231, %v944
  %v946 = vpop.f32.mrb[0].mxu0
  %947 = vmatprep.mubr.f32.mxu0 0.0
  %948 = vmatmul.mubr.f32.gmra.mrb[0].mxu0 %v144
  %v949 = vpop.f32.mrb[0].mxu0
  %v950 = vadd.f32 %v231, %v949
  %v951 = vpop.f32.mrb[0].mxu0
  %952 = vmatprep.mubr.f32.mxu0 0.0
  %953 = vmatmul.mubr.f32.gmra.mrb[0].mxu0 %v145
  %v954 = vpop.f32.mrb[0].mxu0
  %v955 = vadd.f32 %v231, %v954
  %v956 = vpop.f32.mrb[0].mxu0
  %957 = vmatprep.mubr.f32.mxu0 0.0
  %958 = vmatmul.mubr.f32.gmra.mrb[0].mxu0 %v146
  %v959 = vpop.f32.mrb[0].mxu0
  %v960 = vadd.f32 %v231, %v959
  %v961 = vpop.f32.mrb[0].mxu0
  %962 = vmatprep.mubr.f32.mxu0 0.0
  %963 = vmatmul.mubr.f32.gmra.mrb[0].mxu0 %v147
  %v964 = vpop.f32.mrb[0].mxu0
  %v965 = vadd.f32 %v231, %v964
  %v966 = vpop.f32.mrb[0].mxu0
  %967 = vmatprep.mubr.f32.mxu0 0.0
  %968 = vmatmul.mubr.f32.gmra.mrb[0].mxu0 %v148
  %v969 = vpop.f32.mrb[0].mxu0
  %v970 = vadd.f32 %v231, %v969
  %v971 = vpop.f32.mrb[0].mxu0
  %972 = vmatprep.mubr.f32.mxu0 0.0
  %973 = vmatmul.mubr.f32.gmra.mrb[0].mxu0 %v149
  %v974 = vpop.f32.mrb[0].mxu0
  %v975 = vadd.f32 %v231, %v974
  %v976 = vpop.f32.mrb[0].mxu0
  %977 = vmatprep.mubr.f32.mxu0 0.0
  %978 = vmatmul.mubr.f32.gmra.mrb[0].mxu0 %v150
  %v979 = vpop.f32.mrb[0].mxu0
  %v980 = vadd.f32 %v231, %v979
  %v981 = vpop.f32.mrb[0].mxu0
  %982 = vmatprep.mubr.f32.mxu0 0.0
  %983 = vmatmul.mubr.f32.gmra.mrb[0].mxu0 %v151
  %v984 = vpop.f32.mrb[0].mxu0
  %v985 = vadd.f32 %v231, %v984
  %v986 = vpop.f32.mrb[0].mxu0
  %987 = vmatprep.mubr.f32.mxu0 0.0
  %988 = vmatmul.mubr.f32.gmra.mrb[0].mxu0 %v152
  %v989 = vpop.f32.mrb[0].mxu0
  %v990 = vadd.f32 %v231, %v989
  %v991 = vpop.f32.mrb[0].mxu0
  %992 = vmatprep.mubr.f32.mxu0 0.0
  %993 = vmatmul.mubr.f32.gmra.mrb[0].mxu0 %v153
  %v994 = vpop.f32.mrb[0].mxu0
  %v995 = vadd.f32 %v231, %v994
  %v996 = vpop.f32.mrb[0].mxu0
  %997 = vmatprep.mubr.f32.mxu0 0.0
  %998 = vmatmul.mubr.f32.gmra.mrb[0].mxu0 %v154
  %v999 = vpop.f32.mrb[0].mxu0
  %v1000 = vadd.f32 %v231, %v999
  %v1001 = vpop.f32.mrb[0].mxu0
  %1002 = vmatprep.mubr.f32.mxu0 0.0
  %1003 = vmatmul.mubr.f32.gmra.mrb[0].mxu0 %v155
  %v1004 = vpop.f32.mrb[0].mxu0
  %v1005 = vadd.f32 %v231, %v1004
  %v1006 = vpop.f32.mrb[0].mxu0
  %1007 = vmatprep.mubr.f32.mxu0 0.0
  %1008 = vmatmul.mubr.f32.gmra.mrb[0].mxu0 %v156
  %v1009 = vpop.f32.mrb[0].mxu0
  %v1010 = vadd.f32 %v231, %v1009
  %v1011 = vpop.f32.mrb[0].mxu0
  %1012 = vmatprep.mubr.f32.mxu0 0.0
  %1013 = vmatmul.mubr.f32.gmra.mrb[0].mxu0 %v157
  %v1014 = vpop.f32.mrb[0].mxu0
  %v1015 = vadd.f32 %v231, %v1014
  %v1016 = vpop.f32.mrb[0].mxu0
  %1017 = vmatprep.mubr.f32.mxu0 0.0
  %1018 = vmatmul.mubr.f32.gmra.mrb[0].mxu0 %v158
  %v1019 = vpop.f32.mrb[0].mxu0
  %v1020 = vadd.f32 %v231, %v1019
  %v1021 = vpop.f32.mrb[0].mxu0
  %1022 = vmatprep.mubr.f32.mxu0 0.0
  %1023 = vmatmul.mubr.f32.gmra.mrb[0].mxu0 %v159
  %v1024 = vpop.f32.mrb[0].mxu0
  %v1025 = vadd.f32 %v231, %v1024
  %v1026 = vpop.f32.mrb[0].mxu0
  %1027 = vmatprep.mubr.f32.mxu0 0.0
  %1028 = vmatmul.mubr.f32.gmra.mrb[0].mxu0 %v160
  %v1029 = vpop.f32.mrb[0].mxu0
  %v1030 = vadd.f32 %v231, %v1029
  %v1031 = vpop.f32.mrb[0].mxu0
  %1032 = vmatprep.mubr.f32.mxu0 0.0
  %1033 = vmatmul.mubr.f32.gmra.mrb[0].mxu0 %v161
  %v1034 = vpop.f32.mrb[0].mxu0
  %v1035 = vadd.f32 %v231, %v1034
  %v1036 = vpop.f32.mrb[0].mxu0
  %1037 = vmatprep.mubr.f32.mxu0 0.0
  %1038 = vmatmul.mubr.f32.gmra.mrb[0].mxu0 %v162
  %v1039 = vpop.f32.mrb[0].mxu0
  %v1040 = vadd.f32 %v231, %v1039
  %v1041 = vpop.f32.mrb[0].mxu0
  %1042 = vmatprep.mubr.f32.mxu0 0.0
  %1043 = vmatmul.mubr.f32.gmra.mrb[0].mxu0 %v163
  %v1044 = vpop.f32.mrb[0].mxu0
  %v1045 = vadd.f32 %v231, %v1044
  %v1046 = vpop.f32.mrb[0].mxu0
  %1047 = vmatprep.mubr.f32.mxu0 0.0
  %1048 = vmatmul.mubr.f32.gmra.mrb[0].mxu0 %v164
  %v1049 = vpop.f32.mrb[0].mxu0
  %v1050 = vadd.f32 %v231, %v1049
  %v1051 = vpop.f32.mrb[0].mxu0
  %1052 = vmatprep.mubr.f32.mxu0 0.0
  %1053 = vmatmul.mubr.f32.gmra.mrb[0].mxu0 %v165
  %v1054 = vpop.f32.mrb[0].mxu0
  %v1055 = vadd.f32 %v231, %v1054
  %v1056 = vpop.f32.mrb[0].mxu0
  %1057 = vmatprep.mubr.f32.mxu0 0.0
  %1058 = vmatmul.mubr.f32.gmra.mrb[0].mxu0 %v166
  %v1059 = vpop.f32.mrb[0].mxu0
  %v1060 = vadd.f32 %v231, %v1059
  %v1061 = vpop.f32.mrb[0].mxu0
  %1062 = vmatprep.mubr.f32.mxu0 0.0
  %1063 = vmatmul.mubr.f32.gmra.mrb[0].mxu0 %v167
  %v1064 = vpop.f32.mrb[0].mxu0
  %v1065 = vadd.f32 %v231, %v1064
  %v1066 = vpop.f32.mrb[0].mxu0
  %1067 = vmatprep.mubr.f32.mxu0 0.0
  %1068 = vmatmul.mubr.f32.gmra.mrb[0].mxu0 %v168
  %v1069 = vpop.f32.mrb[0].mxu0
  %v1070 = vadd.f32 %v231, %v1069
  %v1071 = vpop.f32.mrb[0].mxu0
  %1072 = vmatprep.mubr.f32.mxu0 0.0
  %1073 = vmatmul.mubr.f32.gmra.mrb[0].mxu0 %v169
  %v1074 = vpop.f32.mrb[0].mxu0
  %v1075 = vadd.f32 %v231, %v1074
  %v1076 = vpop.f32.mrb[0].mxu0
  %1077 = vmatprep.mubr.f32.mxu0 0.0
  %1078 = vmatmul.mubr.f32.gmra.mrb[0].mxu0 %v170
  %v1079 = vpop.f32.mrb[0].mxu0
  %v1080 = vadd.f32 %v231, %v1079
  %v1081 = vpop.f32.mrb[0].mxu0
  %1082 = vmatprep.mubr.f32.mxu0 0.0
  %1083 = vmatmul.mubr.f32.gmra.mrb[0].mxu0 %v171
  %v1084 = vpop.f32.mrb[0].mxu0
  %v1085 = vadd.f32 %v231, %v1084
  %v1086 = vpop.f32.mrb[0].mxu0
  %1087 = vmatprep.mubr.f32.mxu0 0.0
  %1088 = vmatmul.mubr.f32.gmra.mrb[0].mxu0 %v172
  %v1089 = vpop.f32.mrb[0].mxu0
  %v1090 = vadd.f32 %v231, %v1089
  %v1091 = vpop.f32.mrb[0].mxu0
  %1092 = vmatprep.mubr.f32.mxu0 0.0
  %1093 = vmatmul.mubr.f32.gmra.mrb[0].mxu0 %v173
  %v1094 = vpop.f32.mrb[0].mxu0
  %v1095 = vadd.f32 %v231, %v1094
  %v1096 = vpop.f32.mrb[0].mxu0
  %1097 = vmatprep.mubr.f32.mxu0 0.0
  %1098 = vmatmul.mubr.f32.gmra.mrb[0].mxu0 %v174
  %v1099 = vpop.f32.mrb[0].mxu0
  %v1100 = vadd.f32 %v231, %v1099
  %v1101 = vpop.f32.mrb[0].mxu0
  %1102 = vmatprep.mubr.f32.mxu0 0.0
  %1103 = vmatmul.mubr.f32.gmra.mrb[0].mxu0 %v175
  %v1104 = vpop.f32.mrb[0].mxu0
  %v1105 = vadd.f32 %v231, %v1104
  %v1106 = vpop.f32.mrb[0].mxu0
  %1107 = vmatprep.mubr.f32.mxu0 0.0
  %1108 = vmatmul.mubr.f32.gmra.mrb[0].mxu0 %v176
  %v1109 = vpop.f32.mrb[0].mxu0
  %v1110 = vadd.f32 %v231, %v1109
  %v1111 = vpop.f32.mrb[0].mxu0
  %1112 = vmatprep.mubr.f32.mxu0 0.0
  %1113 = vmatmul.mubr.f32.gmra.mrb[0].mxu0 %v177
  %v1114 = vpop.f32.mrb[0].mxu0
  %v1115 = vadd.f32 %v231, %v1114
  %v1116 = vpop.f32.mrb[0].mxu0
  %1117 = vmatprep.mubr.f32.mxu0 0.0
  %1118 = vmatmul.mubr.f32.gmra.mrb[0].mxu0 %v178
  %v1119 = vpop.f32.mrb[0].mxu0
  %v1120 = vadd.f32 %v231, %v1119
  %v1121 = vpop.f32.mrb[0].mxu0
  %1122 = vmatprep.mubr.f32.mxu0 0.0
  %1123 = vmatmul.mubr.f32.gmra.mrb[0].mxu0 %v179
  %v1124 = vpop.f32.mrb[0].mxu0
  %v1125 = vadd.f32 %v231, %v1124
  %v1126 = vpop.f32.mrb[0].mxu0
  %1127 = vmatprep.mubr.f32.mxu0 0.0
  %1128 = vmatmul.mubr.f32.gmra.mrb[0].mxu0 %v180
  %v1129 = vpop.f32.mrb[0].mxu0
  %v1130 = vadd.f32 %v231, %v1129
  %v1131 = vpop.f32.mrb[0].mxu0
  %1132 = vmatprep.mubr.f32.mxu0 0.0
  %1133 = vmatmul.mubr.f32.gmra.mrb[0].mxu0 %v181
  %v1134 = vpop.f32.mrb[0].mxu0
  %v1135 = vadd.f32 %v231, %v1134
  %v1136 = vpop.f32.mrb[0].mxu0
  %1137 = vmatprep.mubr.f32.mxu0 0.0
  %1138 = vmatmul.mubr.f32.gmra.mrb[0].mxu0 %v182
  %v1139 = vpop.f32.mrb[0].mxu0
  %v1140 = vadd.f32 %v231, %v1139
  %v1141 = vpop.f32.mrb[0].mxu0
  %1142 = vmatprep.mubr.f32.mxu0 0.0
  %1143 = vmatmul.mubr.f32.gmra.mrb[0].mxu0 %v183
  %v1144 = vpop.f32.mrb[0].mxu0
  %v1145 = vadd.f32 %v231, %v1144
  %v1146 = vpop.f32.mrb[0].mxu0
  %1147 = vmatprep.mubr.f32.mxu0 0.0
  %1148 = vmatmul.mubr.f32.gmra.mrb[0].mxu0 %v184
  %v1149 = vpop.f32.mrb[0].mxu0
  %v1150 = vadd.f32 %v231, %v1149
  %v1151 = vpop.f32.mrb[0].mxu0
  %1152 = vmatprep.mubr.f32.mxu0 0.0
  %1153 = vmatmul.mubr.f32.gmra.mrb[0].mxu0 %v185
  %v1154 = vpop.f32.mrb[0].mxu0
  %v1155 = vadd.f32 %v231, %v1154
  %v1156 = vpop.f32.mrb[0].mxu0
  %1157 = vmatprep.mubr.f32.mxu0 0.0
  %1158 = vmatmul.mubr.f32.gmra.mrb[0].mxu0 %v186
  %v1159 = vpop.f32.mrb[0].mxu0
  %v1160 = vadd.f32 %v231, %v1159
  %v1161 = vpop.f32.mrb[0].mxu0
  %1162 = vmatprep.mubr.f32.mxu0 0.0
  %1163 = vmatmul.mubr.f32.gmra.mrb[0].mxu0 %v187
  %v1164 = vpop.f32.mrb[0].mxu0
  %v1165 = vadd.f32 %v231, %v1164
  %v1166 = vpop.f32.mrb[0].mxu0
  %1167 = vmatprep.mubr.f32.mxu0 0.0
  %1168 = vmatmul.mubr.f32.gmra.mrb[0].mxu0 %v188
  %v1169 = vpop.f32.mrb[0].mxu0
  %v1170 = vadd.f32 %v231, %v1169
  %v1171 = vpop.f32.mrb[0].mxu0
  %1172 = vmatprep.mubr.f32.mxu0 0.0
  %1173 = vmatmul.mubr.f32.gmra.mrb[0].mxu0 %v189
  %v1174 = vpop.f32.mrb[0].mxu0
  %v1175 = vadd.f32 %v231, %v1174
  %v1176 = vpop.f32.mrb[0].mxu0
  %1177 = vmatprep.mubr.f32.mxu0 0.0
  %1178 = vmatmul.mubr.f32.gmra.mrb[0].mxu0 %v190
  %v1179 = vpop.f32.mrb[0].mxu0
  %v1180 = vadd.f32 %v231, %v1179
  %v1181 = vpop.f32.mrb[0].mxu0
  %1182 = vmatprep.mubr.f32.mxu0 0.0
  %1183 = vmatmul.mubr.f32.gmra.mrb[0].mxu0 %v191
  %v1184 = vpop.f32.mrb[0].mxu0
  %v1185 = vadd.f32 %v231, %v1184
  %v1186 = vpop.f32.mrb[0].mxu0
  %1187 = vmatprep.mubr.f32.mxu0 0.0
  %1188 = vmatmul.mubr.f32.gmra.mrb[0].mxu0 %v192
  %v1189 = vpop.f32.mrb[0].mxu0
  %v1190 = vadd.f32 %v231, %v1189
  %v1191 = vpop.f32.mrb[0].mxu0
  %1192 = vmatprep.mubr.f32.mxu0 0.0
  %1193 = vmatmul.mubr.f32.gmra.mrb[0].mxu0 %v193
  %v1194 = vpop.f32.mrb[0].mxu0
  %v1195 = vadd.f32 %v231, %v1194
  %v1196 = vpop.f32.mrb[0].mxu0
  %1197 = vmatprep.mubr.f32.mxu0 0.0
  %1198 = vmatmul.mubr.f32.gmra.mrb[0].mxu0 %v194
  %v1199 = vpop.f32.mrb[0].mxu0
  %v1200 = vadd.f32 %v231, %v1199
  %v1201 = vpop.f32.mrb[0].mxu0
  %1202 = vmatprep.mubr.f32.mxu0 0.0
  %1203 = vmatmul.mubr.f32.gmra.mrb[0].mxu0 %v195
  %v1204 = vpop.f32.mrb[0].mxu0
  %v1205 = vadd.f32 %v231, %v1204
  %v1206 = vpop.f32.mrb[0].mxu0
  %1207 = vmatprep.mubr.f32.mxu0 0.0
  %1208 = vmatmul.mubr.f32.gmra.mrb[0].mxu0 %v196
  %v1209 = vpop.f32.mrb[0].mxu0
  %v1210 = vadd.f32 %v231, %v1209
  %v1211 = vpop.f32.mrb[0].mxu0
  %1212 = vmatprep.mubr.f32.mxu0 0.0
  %1213 = vmatmul.mubr.f32.gmra.mrb[0].mxu0 %v197
  %v1214 = vpop.f32.mrb[0].mxu0
  %v1215 = vadd.f32 %v231, %v1214
  %v1216 = vpop.f32.mrb[0].mxu0
  %1217 = vmatprep.mubr.f32.mxu0 0.0
  %1218 = vmatmul.mubr.f32.gmra.mrb[0].mxu0 %v198
  %v1219 = vpop.f32.mrb[0].mxu0
  %v1220 = vadd.f32 %v231, %v1219
  %v1221 = vpop.f32.mrb[0].mxu0
  %1222 = vmatprep.mubr.f32.mxu0 0.0
  %1223 = vmatmul.mubr.f32.gmra.mrb[0].mxu0 %v199
  %v1224 = vpop.f32.mrb[0].mxu0
  %v1225 = vadd.f32 %v231, %v1224
  %v1226 = vpop.f32.mrb[0].mxu0
  %1227 = vmatprep.mubr.f32.mxu0 0.0
  %1228 = vmatmul.mubr.f32.gmra.mrb[0].mxu0 %v200
  %v1229 = vpop.f32.mrb[0].mxu0
  %v1230 = vadd.f32 %v231, %v1229
  %v1231 = vpop.f32.mrb[0].mxu0
  %1232 = vmatprep.mubr.f32.mxu0 0.0
  %1233 = vmatmul.mubr.f32.gmra.mrb[0].mxu0 %v201
  %v1234 = vpop.f32.mrb[0].mxu0
  %v1235 = vadd.f32 %v231, %v1234
  %v1236 = vpop.f32.mrb[0].mxu0
  %1237 = vmatprep.mubr.f32.mxu0 0.0
  %1238 = vmatmul.mubr.f32.gmra.mrb[0].mxu0 %v202
  %v1239 = vpop.f32.mrb[0].mxu0
  %v1240 = vadd.f32 %v231, %v1239
  %v1241 = vpop.f32.mrb[0].mxu0
  %1242 = vmatprep.mubr.f32.mxu0 0.0
  %1243 = vmatmul.mubr.f32.gmra.mrb[0].mxu0 %v203
  %v1244 = vpop.f32.mrb[0].mxu0
  %v1245 = vadd.f32 %v231, %v1244
  %v1246 = vpop.f32.mrb[0].mxu0
  %1247 = vmatprep.mubr.f32.mxu0 0.0
  %1248 = vmatmul.mubr.f32.gmra.mrb[0].mxu0 %v204
  %v1249 = vpop.f32.mrb[0].mxu0
  %v1250 = vadd.f32 %v231, %v1249
  %v1251 = vpop.f32.mrb[0].mxu0
  %1252 = vmatprep.mubr.f32.mxu0 0.0
  %1253 = vmatmul.mubr.f32.gmra.mrb[0].mxu0 %v205
  %v1254 = vpop.f32.mrb[0].mxu0
  %v1255 = vadd.f32 %v231, %v1254
  %v1256 = vpop.f32.mrb[0].mxu0
  %1257 = vmatprep.mubr.f32.mxu0 0.0
  %1258 = vmatmul.mubr.f32.gmra.mrb[0].mxu0 %v206
  %v1259 = vpop.f32.mrb[0].mxu0
  %v1260 = vadd.f32 %v231, %v1259
  %v1261 = vpop.f32.mrb[0].mxu0
  %1262 = vmatprep.mubr.f32.mxu0 0.0
  %1263 = vmatmul.mubr.f32.gmra.mrb[0].mxu0 %v207
  %v1264 = vpop.f32.mrb[0].mxu0
  %v1265 = vadd.f32 %v231, %v1264
  %v1266 = vpop.f32.mrb[0].mxu0
  %1267 = vmatprep.mubr.f32.mxu0 0.0
  %1268 = vmatmul.mubr.f32.gmra.mrb[0].mxu0 %v208
  %v1269 = vpop.f32.mrb[0].mxu0
  %v1270 = vadd.f32 %v231, %v1269
  %v1271 = vpop.f32.mrb[0].mxu0
  %1272 = vmatprep.mubr.f32.mxu0 0.0
  %1273 = vmatmul.mubr.f32.gmra.mrb[0].mxu0 %v209
  %v1274 = vpop.f32.mrb[0].mxu0
  %v1275 = vadd.f32 %v231, %v1274
  %v1276 = vpop.f32.mrb[0].mxu0
  %1277 = vdwg.mxu0
  %v1278 = vmax.f32 %v300, 0.0
  %v1279 = vmax.f32 %v305, 0.0
  %v1280 = vmax.f32 %v310, 0.0
  %v1281 = vmax.f32 %v315, 0.0
  %v1282 = vmax.f32 %v320, 0.0
  %v1283 = vmax.f32 %v325, 0.0
  %v1284 = vmax.f32 %v330, 0.0
  %v1285 = vmax.f32 %v335, 0.0
  %v1286 = vmax.f32 %v340, 0.0
  %v1287 = vmax.f32 %v345, 0.0
  %v1288 = vmax.f32 %v350, 0.0
  %v1289 = vmax.f32 %v355, 0.0
  %v1290 = vmax.f32 %v360, 0.0
  %v1291 = vmax.f32 %v365, 0.0
  %v1292 = vmax.f32 %v370, 0.0
  %v1293 = vmax.f32 %v375, 0.0
  %v1294 = vmax.f32 %v380, 0.0
  %v1295 = vmax.f32 %v385, 0.0
  %v1296 = vmax.f32 %v390, 0.0
  %v1297 = vmax.f32 %v395, 0.0
  %v1298 = vmax.f32 %v400, 0.0
  %v1299 = vmax.f32 %v405, 0.0
  %v1300 = vmax.f32 %v410, 0.0
  %v1301 = vmax.f32 %v415, 0.0
  %v1302 = vmax.f32 %v420, 0.0
  %v1303 = vmax.f32 %v425, 0.0
  %v1304 = vmax.f32 %v430, 0.0
  %v1305 = vmax.f32 %v435, 0.0
  %v1306 = vmax.f32 %v440, 0.0
  %v1307 = vmax.f32 %v445, 0.0
  %v1308 = vmax.f32 %v450, 0.0
  %v1309 = vmax.f32 %v455, 0.0
  %v1310 = vmax.f32 %v460, 0.0
  %v1311 = vmax.f32 %v465, 0.0
  %v1312 = vmax.f32 %v470, 0.0
  %v1313 = vmax.f32 %v475, 0.0
  %v1314 = vmax.f32 %v480, 0.0
  %v1315 = vmax.f32 %v485, 0.0
  %v1316 = vmax.f32 %v490, 0.0
  %v1317 = vmax.f32 %v495, 0.0
  %v1318 = vmax.f32 %v500, 0.0
  %v1319 = vmax.f32 %v505, 0.0
  %v1320 = vmax.f32 %v510, 0.0
  %v1321 = vmax.f32 %v515, 0.0
  %v1322 = vmax.f32 %v520, 0.0
  %v1323 = vmax.f32 %v525, 0.0
  %v1324 = vmax.f32 %v530, 0.0
  %v1325 = vmax.f32 %v535, 0.0
  %v1326 = vmax.f32 %v540, 0.0
  %v1327 = vmax.f32 %v545, 0.0
  %v1328 = vmax.f32 %v550, 0.0
  %v1329 = vmax.f32 %v555, 0.0
  %v1330 = vmax.f32 %v560, 0.0
  %v1331 = vmax.f32 %v565, 0.0
  %v1332 = vmax.f32 %v570, 0.0
  %v1333 = vmax.f32 %v575, 0.0
  %v1334 = vmax.f32 %v580, 0.0
  %v1335 = vmax.f32 %v585, 0.0
  %v1336 = vmax.f32 %v590, 0.0
  %v1337 = vmax.f32 %v595, 0.0
  %v1338 = vmax.f32 %v600, 0.0
  %v1339 = vmax.f32 %v605, 0.0
  %v1340 = vmax.f32 %v610, 0.0
  %v1341 = vmax.f32 %v615, 0.0
  %v1342 = vmax.f32 %v620, 0.0
  %v1343 = vmax.f32 %v625, 0.0
  %v1344 = vmax.f32 %v630, 0.0
  %v1345 = vmax.f32 %v635, 0.0
  %v1346 = vmax.f32 %v640, 0.0
  %v1347 = vmax.f32 %v645, 0.0
  %v1348 = vmax.f32 %v650, 0.0
  %v1349 = vmax.f32 %v655, 0.0
  %v1350 = vmax.f32 %v660, 0.0
  %v1351 = vmax.f32 %v665, 0.0
  %v1352 = vmax.f32 %v670, 0.0
  %v1353 = vmax.f32 %v675, 0.0
  %v1354 = vmax.f32 %v680, 0.0
  %v1355 = vmax.f32 %v685, 0.0
  %v1356 = vmax.f32 %v690, 0.0
  %v1357 = vmax.f32 %v695, 0.0
  %v1358 = vmax.f32 %v700, 0.0
  %v1359 = vmax.f32 %v705, 0.0
  %v1360 = vmax.f32 %v710, 0.0
  %v1361 = vmax.f32 %v715, 0.0
  %v1362 = vmax.f32 %v720, 0.0
  %v1363 = vmax.f32 %v725, 0.0
  %v1364 = vmax.f32 %v730, 0.0
  %v1365 = vmax.f32 %v735, 0.0
  %v1366 = vmax.f32 %v740, 0.0
  %v1367 = vmax.f32 %v745, 0.0
  %v1368 = vmax.f32 %v750, 0.0
  %v1369 = vmax.f32 %v755, 0.0
  %v1370 = vmax.f32 %v760, 0.0
  %v1371 = vmax.f32 %v765, 0.0
  %v1372 = vmax.f32 %v770, 0.0
  %v1373 = vmax.f32 %v775, 0.0
  %v1374 = vmax.f32 %v780, 0.0
  %v1375 = vmax.f32 %v785, 0.0
  %v1376 = vmax.f32 %v790, 0.0
  %v1377 = vmax.f32 %v795, 0.0
  %v1378 = vmax.f32 %v800, 0.0
  %v1379 = vmax.f32 %v805, 0.0
  %v1380 = vmax.f32 %v810, 0.0
  %v1381 = vmax.f32 %v815, 0.0
  %v1382 = vmax.f32 %v820, 0.0
  %v1383 = vmax.f32 %v825, 0.0
  %v1384 = vmax.f32 %v830, 0.0
  %v1385 = vmax.f32 %v835, 0.0
  %v1386 = vmax.f32 %v840, 0.0
  %v1387 = vmax.f32 %v845, 0.0
  %v1388 = vmax.f32 %v850, 0.0
  %v1389 = vmax.f32 %v855, 0.0
  %v1390 = vmax.f32 %v860, 0.0
  %v1391 = vmax.f32 %v865, 0.0
  %v1392 = vmax.f32 %v870, 0.0
  %v1393 = vmax.f32 %v875, 0.0
  %v1394 = vmax.f32 %v880, 0.0
  %v1395 = vmax.f32 %v885, 0.0
  %v1396 = vmax.f32 %v890, 0.0
  %v1397 = vmax.f32 %v895, 0.0
  %v1398 = vmax.f32 %v900, 0.0
  %v1399 = vmax.f32 %v905, 0.0
  %v1400 = vmax.f32 %v910, 0.0
  %v1401 = vmax.f32 %v915, 0.0
  %v1402 = vmax.f32 %v920, 0.0
  %v1403 = vmax.f32 %v925, 0.0
  %v1404 = vmax.f32 %v930, 0.0
  %v1405 = vmax.f32 %v935, 0.0
  %v1406 = vmax.f32 %v940, 0.0
  %v1407 = vmax.f32 %v945, 0.0
  %v1408 = vmax.f32 %v950, 0.0
  %v1409 = vmax.f32 %v955, 0.0
  %v1410 = vmax.f32 %v960, 0.0
  %v1411 = vmax.f32 %v965, 0.0
  %v1412 = vmax.f32 %v970, 0.0
  %v1413 = vmax.f32 %v975, 0.0
  %v1414 = vmax.f32 %v980, 0.0
  %v1415 = vmax.f32 %v985, 0.0
  %v1416 = vmax.f32 %v990, 0.0
  %v1417 = vmax.f32 %v995, 0.0
  %v1418 = vmax.f32 %v1000, 0.0
  %v1419 = vmax.f32 %v1005, 0.0
  %v1420 = vmax.f32 %v1010, 0.0
  %v1421 = vmax.f32 %v1015, 0.0
  %v1422 = vmax.f32 %v1020, 0.0
  %v1423 = vmax.f32 %v1025, 0.0
  %v1424 = vmax.f32 %v1030, 0.0
  %v1425 = vmax.f32 %v1035, 0.0
  %v1426 = vmax.f32 %v1040, 0.0
  %v1427 = vmax.f32 %v1045, 0.0
  %v1428 = vmax.f32 %v1050, 0.0
  %v1429 = vmax.f32 %v1055, 0.0
  %v1430 = vmax.f32 %v1060, 0.0
  %v1431 = vmax.f32 %v1065, 0.0
  %v1432 = vmax.f32 %v1070, 0.0
  %v1433 = vmax.f32 %v1075, 0.0
  %v1434 = vmax.f32 %v1080, 0.0
  %v1435 = vmax.f32 %v1085, 0.0
  %v1436 = vmax.f32 %v1090, 0.0
  %v1437 = vmax.f32 %v1095, 0.0
  %v1438 = vmax.f32 %v1100, 0.0
  %v1439 = vmax.f32 %v1105, 0.0
  %v1440 = vmax.f32 %v1110, 0.0
  %v1441 = vmax.f32 %v1115, 0.0
  %v1442 = vmax.f32 %v1120, 0.0
  %v1443 = vmax.f32 %v1125, 0.0
  %v1444 = vmax.f32 %v1130, 0.0
  %v1445 = vmax.f32 %v1135, 0.0
  %v1446 = vmax.f32 %v1140, 0.0
  %v1447 = vmax.f32 %v1145, 0.0
  %v1448 = vmax.f32 %v1150, 0.0
  %v1449 = vmax.f32 %v1155, 0.0
  %v1450 = vmax.f32 %v1160, 0.0
  %v1451 = vmax.f32 %v1165, 0.0
  %v1452 = vmax.f32 %v1170, 0.0
  %v1453 = vmax.f32 %v1175, 0.0
  %v1454 = vmax.f32 %v1180, 0.0
  %v1455 = vmax.f32 %v1185, 0.0
  %v1456 = vmax.f32 %v1190, 0.0
  %v1457 = vmax.f32 %v1195, 0.0
  %v1458 = vmax.f32 %v1200, 0.0
  %v1459 = vmax.f32 %v1205, 0.0
  %v1460 = vmax.f32 %v1210, 0.0
  %v1461 = vmax.f32 %v1215, 0.0
  %v1462 = vmax.f32 %v1220, 0.0
  %v1463 = vmax.f32 %v1225, 0.0
  %v1464 = vmax.f32 %v1230, 0.0
  %v1465 = vmax.f32 %v1235, 0.0
  %v1466 = vmax.f32 %v1240, 0.0
  %v1467 = vmax.f32 %v1245, 0.0
  %v1468 = vmax.f32 %v1250, 0.0
  %v1469 = vmax.f32 %v1255, 0.0
  %v1470 = vmax.f32 %v1260, 0.0
  %v1471 = vmax.f32 %v1265, 0.0
  %v1472 = vmax.f32 %v1270, 0.0
  %v1473 = vmax.f32 %v1275, 0.0
  %1474 = vst [vmem:[%s3] sm:$0xff] %v1278
  %1475 = vst [vmem:[%s3 + $0x8] sm:$0xff] %v1279
  %1476 = vst [vmem:[%s3 + $0x10] sm:$0xff] %v1280
  %1477 = vst [vmem:[%s3 + $0x18] sm:$0xff] %v1281
  %1478 = vst [vmem:[%s3 + $0x20] sm:$0xff] %v1282
  %1479 = vst [vmem:[%s3 + $0x28] sm:$0xff] %v1283
  %1480 = vst [vmem:[%s3 + $0x30] sm:$0xff] %v1284
  %1481 = vst [vmem:[%s3 + $0x38] sm:$0xff] %v1285
  %1482 = vst [vmem:[%s3 + $0x40] sm:$0xff] %v1286
  %1483 = vst [vmem:[%s3 + $0x48] sm:$0xff] %v1287
  %1484 = vst [vmem:[%s3 + $0x50] sm:$0xff] %v1288
  %1485 = vst [vmem:[%s3 + $0x58] sm:$0xff] %v1289
  %1486 = vst [vmem:[%s3 + $0x60] sm:$0xff] %v1290
  %1487 = vst [vmem:[%s3 + $0x68] sm:$0xff] %v1291
  %1488 = vst [vmem:[%s3 + $0x70] sm:$0xff] %v1292
  %1489 = vst [vmem:[%s3 + $0x78] sm:$0xff] %v1293
  %1490 = vst [vmem:[%s3 + $0x80] sm:$0xff] %v1294
  %1491 = vst [vmem:[%s3 + $0x88] sm:$0xff] %v1295
  %1492 = vst [vmem:[%s3 + $0x90] sm:$0xff] %v1296
  %1493 = vst [vmem:[%s3 + $0x98] sm:$0xff] %v1297
  %1494 = vst [vmem:[%s3 + $0xa0] sm:$0xff] %v1298
  %1495 = vst [vmem:[%s3 + $0xa8] sm:$0xff] %v1299
  %1496 = vst [vmem:[%s3 + $0xb0] sm:$0xff] %v1300
  %1497 = vst [vmem:[%s3 + $0xb8] sm:$0xff] %v1301
  %1498 = vst [vmem:[%s3 + $0xc0] sm:$0xff] %v1302
  %1499 = vst [vmem:[%s3 + $0xc8] sm:$0xff] %v1303
  %1500 = vst [vmem:[%s3 + $0xd0] sm:$0xff] %v1304
  %1501 = vst [vmem:[%s3 + $0xd8] sm:$0xff] %v1305
  %1502 = vst [vmem:[%s3 + $0xe0] sm:$0xff] %v1306
  %1503 = vst [vmem:[%s3 + $0xe8] sm:$0xff] %v1307
  %1504 = vst [vmem:[%s3 + $0xf0] sm:$0xff] %v1308
  %1505 = vst [vmem:[%s3 + $0xf8] sm:$0xff] %v1309
  %1506 = vst [vmem:[%s3 + $0x100] sm:$0xff] %v1310
  %1507 = vst [vmem:[%s3 + $0x108] sm:$0xff] %v1311
  %1508 = vst [vmem:[%s3 + $0x110] sm:$0xff] %v1312
  %1509 = vst [vmem:[%s3 + $0x118] sm:$0xff] %v1313
  %1510 = vst [vmem:[%s3 + $0x120] sm:$0xff] %v1314
  %1511 = vst [vmem:[%s3 + $0x128] sm:$0xff] %v1315
  %1512 = vst [vmem:[%s3 + $0x130] sm:$0xff] %v1316
  %1513 = vst [vmem:[%s3 + $0x138] sm:$0xff] %v1317
  %1514 = vst [vmem:[%s3 + $0x140] sm:$0xff] %v1318
  %1515 = vst [vmem:[%s3 + $0x148] sm:$0xff] %v1319
  %1516 = vst [vmem:[%s3 + $0x150] sm:$0xff] %v1320
  %1517 = vst [vmem:[%s3 + $0x158] sm:$0xff] %v1321
  %1518 = vst [vmem:[%s3 + $0x160] sm:$0xff] %v1322
  %1519 = vst [vmem:[%s3 + $0x168] sm:$0xff] %v1323
  %1520 = vst [vmem:[%s3 + $0x170] sm:$0xff] %v1324
  %1521 = vst [vmem:[%s3 + $0x178] sm:$0xff] %v1325
  %1522 = vst [vmem:[%s3 + $0x180] sm:$0xff] %v1326
  %1523 = vst [vmem:[%s3 + $0x188] sm:$0xff] %v1327
  %1524 = vst [vmem:[%s3 + $0x190] sm:$0xff] %v1328
  %1525 = vst [vmem:[%s3 + $0x198] sm:$0xff] %v1329
  %1526 = vst [vmem:[%s3 + $0x1a0] sm:$0xff] %v1330
  %1527 = vst [vmem:[%s3 + $0x1a8] sm:$0xff] %v1331
  %1528 = vst [vmem:[%s3 + $0x1b0] sm:$0xff] %v1332
  %1529 = vst [vmem:[%s3 + $0x1b8] sm:$0xff] %v1333
  %1530 = vst [vmem:[%s3 + $0x1c0] sm:$0xff] %v1334
  %1531 = vst [vmem:[%s3 + $0x1c8] sm:$0xff] %v1335
  %1532 = vst [vmem:[%s3 + $0x1d0] sm:$0xff] %v1336
  %1533 = vst [vmem:[%s3 + $0x1d8] sm:$0xff] %v1337
  %1534 = vst [vmem:[%s3 + $0x1e0] sm:$0xff] %v1338
  %1535 = vst [vmem:[%s3 + $0x1e8] sm:$0xff] %v1339
  %1536 = vst [vmem:[%s3 + $0x1f0] sm:$0xff] %v1340
  %1537 = vst [vmem:[%s3 + $0x1f8] sm:$0xff] %v1341
  %1538 = vst [vmem:[%s3 + $0x200] sm:$0xff] %v1342
  %1539 = vst [vmem:[%s3 + $0x208] sm:$0xff] %v1343
  %1540 = vst [vmem:[%s3 + $0x210] sm:$0xff] %v1344
  %1541 = vst [vmem:[%s3 + $0x218] sm:$0xff] %v1345
  %1542 = vst [vmem:[%s3 + $0x220] sm:$0xff] %v1346
  %1543 = vst [vmem:[%s3 + $0x228] sm:$0xff] %v1347
  %1544 = vst [vmem:[%s3 + $0x230] sm:$0xff] %v1348
  %1545 = vst [vmem:[%s3 + $0x238] sm:$0xff] %v1349
  %1546 = vst [vmem:[%s3 + $0x240] sm:$0xff] %v1350
  %1547 = vst [vmem:[%s3 + $0x248] sm:$0xff] %v1351
  %1548 = vst [vmem:[%s3 + $0x250] sm:$0xff] %v1352
  %1549 = vst [vmem:[%s3 + $0x258] sm:$0xff] %v1353
  %1550 = vst [vmem:[%s3 + $0x260] sm:$0xff] %v1354
  %1551 = vst [vmem:[%s3 + $0x268] sm:$0xff] %v1355
  %1552 = vst [vmem:[%s3 + $0x270] sm:$0xff] %v1356
  %1553 = vst [vmem:[%s3 + $0x278] sm:$0xff] %v1357
  %1554 = vst [vmem:[%s3 + $0x280] sm:$0xff] %v1358
  %1555 = vst [vmem:[%s3 + $0x288] sm:$0xff] %v1359
  %1556 = vst [vmem:[%s3 + $0x290] sm:$0xff] %v1360
  %1557 = vst [vmem:[%s3 + $0x298] sm:$0xff] %v1361
  %1558 = vst [vmem:[%s3 + $0x2a0] sm:$0xff] %v1362
  %1559 = vst [vmem:[%s3 + $0x2a8] sm:$0xff] %v1363
  %1560 = vst [vmem:[%s3 + $0x2b0] sm:$0xff] %v1364
  %1561 = vst [vmem:[%s3 + $0x2b8] sm:$0xff] %v1365
  %1562 = vst [vmem:[%s3 + $0x2c0] sm:$0xff] %v1366
  %1563 = vst [vmem:[%s3 + $0x2c8] sm:$0xff] %v1367
  %1564 = vst [vmem:[%s3 + $0x2d0] sm:$0xff] %v1368
  %1565 = vst [vmem:[%s3 + $0x2d8] sm:$0xff] %v1369
  %1566 = vst [vmem:[%s3 + $0x2e0] sm:$0xff] %v1370
  %1567 = vst [vmem:[%s3 + $0x2e8] sm:$0xff] %v1371
  %1568 = vst [vmem:[%s3 + $0x2f0] sm:$0xff] %v1372
  %1569 = vst [vmem:[%s3 + $0x2f8] sm:$0xff] %v1373
  %1570 = vst [vmem:[%s3 + $0x300] sm:$0xff] %v1374
  %1571 = vst [vmem:[%s3 + $0x308] sm:$0xff] %v1375
  %1572 = vst [vmem:[%s3 + $0x310] sm:$0xff] %v1376
  %1573 = vst [vmem:[%s3 + $0x318] sm:$0xff] %v1377
  %1574 = vst [vmem:[%s3 + $0x320] sm:$0xff] %v1378
  %1575 = vst [vmem:[%s3 + $0x328] sm:$0xff] %v1379
  %1576 = vst [vmem:[%s3 + $0x330] sm:$0xff] %v1380
  %1577 = vst [vmem:[%s3 + $0x338] sm:$0xff] %v1381
  %1578 = vst [vmem:[%s3 + $0x340] sm:$0xff] %v1382
  %1579 = vst [vmem:[%s3 + $0x348] sm:$0xff] %v1383
  %1580 = vst [vmem:[%s3 + $0x350] sm:$0xff] %v1384
  %1581 = vst [vmem:[%s3 + $0x358] sm:$0xff] %v1385
  %1582 = vst [vmem:[%s3 + $0x360] sm:$0xff] %v1386
  %1583 = vst [vmem:[%s3 + $0x368] sm:$0xff] %v1387
  %1584 = vst [vmem:[%s3 + $0x370] sm:$0xff] %v1388
  %1585 = vst [vmem:[%s3 + $0x378] sm:$0xff] %v1389
  %1586 = vst [vmem:[%s3 + $0x380] sm:$0xff] %v1390
  %1587 = vst [vmem:[%s3 + $0x388] sm:$0xff] %v1391
  %1588 = vst [vmem:[%s3 + $0x390] sm:$0xff] %v1392
  %1589 = vst [vmem:[%s3 + $0x398] sm:$0xff] %v1393
  %1590 = vst [vmem:[%s3 + $0x3a0] sm:$0xff] %v1394
  %1591 = vst [vmem:[%s3 + $0x3a8] sm:$0xff] %v1395
  %1592 = vst [vmem:[%s3 + $0x3b0] sm:$0xff] %v1396
  %1593 = vst [vmem:[%s3 + $0x3b8] sm:$0xff] %v1397
  %1594 = vst [vmem:[%s3 + $0x3c0] sm:$0xff] %v1398
  %1595 = vst [vmem:[%s3 + $0x3c8] sm:$0xff] %v1399
  %1596 = vst [vmem:[%s3 + $0x3d0] sm:$0xff] %v1400
  %1597 = vst [vmem:[%s3 + $0x3d8] sm:$0xff] %v1401
  %1598 = vst [vmem:[%s3 + $0x3e0] sm:$0xff] %v1402
  %1599 = vst [vmem:[%s3 + $0x3e8] sm:$0xff] %v1403
  %1600 = vst [vmem:[%s3 + $0x3f0] sm:$0xff] %v1404
  %1601 = vst [vmem:[%s3 + $0x3f8] sm:$0xff] %v1405
  %1602 = vst [vmem:[%s3 + $0x400] sm:$0xff] %v1406
  %1603 = vst [vmem:[%s3 + $0x408] sm:$0xff] %v1407
  %1604 = vst [vmem:[%s3 + $0x410] sm:$0xff] %v1408
  %1605 = vst [vmem:[%s3 + $0x418] sm:$0xff] %v1409
  %1606 = vst [vmem:[%s3 + $0x420] sm:$0xff] %v1410
  %1607 = vst [vmem:[%s3 + $0x428] sm:$0xff] %v1411
  %1608 = vst [vmem:[%s3 + $0x430] sm:$0xff] %v1412
  %1609 = vst [vmem:[%s3 + $0x438] sm:$0xff] %v1413
  %1610 = vst [vmem:[%s3 + $0x440] sm:$0xff] %v1414
  %1611 = vst [vmem:[%s3 + $0x448] sm:$0xff] %v1415
  %1612 = vst [vmem:[%s3 + $0x450] sm:$0xff] %v1416
  %1613 = vst [vmem:[%s3 + $0x458] sm:$0xff] %v1417
  %1614 = vst [vmem:[%s3 + $0x460] sm:$0xff] %v1418
  %1615 = vst [vmem:[%s3 + $0x468] sm:$0xff] %v1419
  %1616 = vst [vmem:[%s3 + $0x470] sm:$0xff] %v1420
  %1617 = vst [vmem:[%s3 + $0x478] sm:$0xff] %v1421
  %1618 = vst [vmem:[%s3 + $0x480] sm:$0xff] %v1422
  %1619 = vst [vmem:[%s3 + $0x488] sm:$0xff] %v1423
  %1620 = vst [vmem:[%s3 + $0x490] sm:$0xff] %v1424
  %1621 = vst [vmem:[%s3 + $0x498] sm:$0xff] %v1425
  %1622 = vst [vmem:[%s3 + $0x4a0] sm:$0xff] %v1426
  %1623 = vst [vmem:[%s3 + $0x4a8] sm:$0xff] %v1427
  %1624 = vst [vmem:[%s3 + $0x4b0] sm:$0xff] %v1428
  %1625 = vst [vmem:[%s3 + $0x4b8] sm:$0xff] %v1429
  %1626 = vst [vmem:[%s3 + $0x4c0] sm:$0xff] %v1430
  %1627 = vst [vmem:[%s3 + $0x4c8] sm:$0xff] %v1431
  %1628 = vst [vmem:[%s3 + $0x4d0] sm:$0xff] %v1432
  %1629 = vst [vmem:[%s3 + $0x4d8] sm:$0xff] %v1433
  %1630 = vst [vmem:[%s3 + $0x4e0] sm:$0xff] %v1434
  %1631 = vst [vmem:[%s3 + $0x4e8] sm:$0xff] %v1435
  %1632 = vst [vmem:[%s3 + $0x4f0] sm:$0xff] %v1436
  %1633 = vst [vmem:[%s3 + $0x4f8] sm:$0xff] %v1437
  %1634 = vst [vmem:[%s3 + $0x500] sm:$0xff] %v1438
  %1635 = vst [vmem:[%s3 + $0x508] sm:$0xff] %v1439
  %1636 = vst [vmem:[%s3 + $0x510] sm:$0xff] %v1440
  %1637 = vst [vmem:[%s3 + $0x518] sm:$0xff] %v1441
  %1638 = vst [vmem:[%s3 + $0x520] sm:$0xff] %v1442
  %1639 = vst [vmem:[%s3 + $0x528] sm:$0xff] %v1443
  %1640 = vst [vmem:[%s3 + $0x530] sm:$0xff] %v1444
  %1641 = vst [vmem:[%s3 + $0x538] sm:$0xff] %v1445
  %1642 = vst [vmem:[%s3 + $0x540] sm:$0xff] %v1446
  %1643 = vst [vmem:[%s3 + $0x548] sm:$0xff] %v1447
  %1644 = vst [vmem:[%s3 + $0x550] sm:$0xff] %v1448
  %1645 = vst [vmem:[%s3 + $0x558] sm:$0xff] %v1449
  %1646 = vst [vmem:[%s3 + $0x560] sm:$0xff] %v1450
  %1647 = vst [vmem:[%s3 + $0x568] sm:$0xff] %v1451
  %1648 = vst [vmem:[%s3 + $0x570] sm:$0xff] %v1452
  %1649 = vst [vmem:[%s3 + $0x578] sm:$0xff] %v1453
  %1650 = vst [vmem:[%s3 + $0x580] sm:$0xff] %v1454
  %1651 = vst [vmem:[%s3 + $0x588] sm:$0xff] %v1455
  %1652 = vst [vmem:[%s3 + $0x590] sm:$0xff] %v1456
  %1653 = vst [vmem:[%s3 + $0x598] sm:$0xff] %v1457
  %1654 = vst [vmem:[%s3 + $0x5a0] sm:$0xff] %v1458
  %1655 = vst [vmem:[%s3 + $0x5a8] sm:$0xff] %v1459
  %1656 = vst [vmem:[%s3 + $0x5b0] sm:$0xff] %v1460
  %1657 = vst [vmem:[%s3 + $0x5b8] sm:$0xff] %v1461
  %1658 = vst [vmem:[%s3 + $0x5c0] sm:$0xff] %v1462
  %1659 = vst [vmem:[%s3 + $0x5c8] sm:$0xff] %v1463
  %1660 = vst [vmem:[%s3 + $0x5d0] sm:$0xff] %v1464
  %1661 = vst [vmem:[%s3 + $0x5d8] sm:$0xff] %v1465
  %1662 = vst [vmem:[%s3 + $0x5e0] sm:$0xff] %v1466
  %1663 = vst [vmem:[%s3 + $0x5e8] sm:$0xff] %v1467
  %1664 = vst [vmem:[%s3 + $0x5f0] sm:$0xff] %v1468
  %1665 = vst [vmem:[%s3 + $0x5f8] sm:$0xff] %v1469
  %1666 = vst [vmem:[%s3 + $0x600] sm:$0xff] %v1470
  %1667 = vst [vmem:[%s3 + $0x608] sm:$0xff] %v1471
  %1668 = vst [vmem:[%s3 + $0x610] sm:$0xff] %v1472
  %1669 = vst [vmem:[%s3 + $0x618] sm:$0xff] %v1473
  // Predicated region
  $region14: #{autoencoder_forward.9} parent=0 // pred_check
    _
  $region15: #{autoencoder_forward.9} parent=0 // pred_check_branch
    %1671 = sbr.rel (0) target = $region17
  $region16: #{autoencoder_forward.9} parent=0 // pred_region
    _
  $region17: #{autoencoder_forward.9} parent=0 // pred_fallthru
    _
  // Predicated region
  $region18: #{autoencoder_forward.9} parent=0 // pred_check
    _
  $region19: #{autoencoder_forward.9} parent=0 // pred_check_branch
    %1673 = sbr.rel (0) target = $region21
  $region20: #{autoencoder_forward.9} parent=0 // pred_region
    _
  $region21: #{autoencoder_forward.9} parent=0 // pred_fallthru
    _

</llo_original>
